<compile_context>
chip_gen: v5e
topology: v5e:2x2
jax: 0.10.0
libtpu: 0.0.40
codegen_flags: <defaults>
</compile_context>

<pallas_src>
import functools
import numpy as np

import jax
import jax.numpy as jnp
from jax import lax
from jax.experimental import pallas as pl
from jax.experimental.pallas import tpu as pltpu

NEG_INF = -10000.0


# ----------------------- fused BiLSTM layer (direction folded into batch) -----------

def _run_bilstm_layer(x_f, x_b, wih_ref, whh_ref, b_ref, h0_l, c0_l, *, T, B, H):
    """One bidirectional LSTM layer with the direction axis folded into batch.

    x_f: [T*B, in]  forward-time-ordered inputs   (row r = t*B + b  -> time t)
    x_b: [T*B, in]  reverse-time-ordered inputs   (row r = t*B + b  -> time T-1-t)
    Returns a Python list of T values, each [B, 2H] = [h_fwd(t), h_bwd(t)].
    """
    w_ih_f = wih_ref[0]                       # [in, 4H]
    w_ih_b = wih_ref[1]
    w_hh_f = whh_ref[0]                       # [H, 4H]
    w_hh_b = whh_ref[1]
    b_f = b_ref[0]                            # [1, 4H]
    b_b = b_ref[1]

    # Hoisted input projection: all T timesteps of both directions in two matmuls,
    # completely off the serial h/c dependency chain.
    gx_f = jnp.dot(x_f, w_ih_f, preferred_element_type=jnp.float32) + b_f   # [T*B, 4H]
    gx_b = jnp.dot(x_b, w_ih_b, preferred_element_type=jnp.float32) + b_b   # [T*B, 4H]
    # Per-step pre-activations for the folded [2B, 4H] batch (loop-invariant w.r.t.
    # the carry, so the scheduler can hoist/interleave them freely).
    gx_steps = [
        jnp.concatenate(
            [gx_f[t * B:(t + 1) * B, :], gx_b[t * B:(t + 1) * B, :]], axis=0)
        for t in range(T)
    ]

    # Initial hidden/cell: [h0_fwd ; h0_bwd] broadcast over batch -> [2B, H].
    h = jnp.concatenate([jnp.broadcast_to(h0_l[0:1, :], (B, H)),
                         jnp.broadcast_to(h0_l[1:2, :], (B, H))], axis=0)
    c = jnp.concatenate([jnp.broadcast_to(c0_l[0:1, :], (B, H)),
                         jnp.broadcast_to(c0_l[1:2, :], (B, H))], axis=0)

    # Full-shape direction mask (rows < B are the forward half).
    dir_is_fwd = lax.broadcasted_iota(jnp.int32, (2 * B, 4 * H), 0) < B

    hs_f = [None] * T
    hs_b = [None] * T
    for t in range(T):            # short static trip count -> fully unrolled
        g_hf = jnp.dot(h, w_hh_f, preferred_element_type=jnp.float32)   # [2B, 4H]
        g_hb = jnp.dot(h, w_hh_b, preferred_element_type=jnp.float32)
        gates = gx_steps[t] + jnp.where(dir_is_fwd, g_hf, g_hb)         # [2B, 4H]
        # Gate order was permuted to [i, f, o, g] at init: one contiguous sigmoid
        # over 3H lanes + one tanh over the trailing H lanes.
        sig = jax.nn.sigmoid(gates[:, 0:3 * H])
        i_g = sig[:, 0:H]
        f_g = sig[:, H:2 * H]
        o_g = sig[:, 2 * H:3 * H]
        g_g = jnp.tanh(gates[:, 3 * H:4 * H])
        c = f_g * c + i_g * g_g
        h = o_g * jnp.tanh(c)
        hs_f[t] = h[0:B, :]                   # forward half  -> original time t
        hs_b[T - 1 - t] = h[B:2 * B, :]       # backward half -> original time T-1-t
    # Per-timestep [h_fwd(t), h_bwd(t)] feature concat (matches torch's bi-LSTM out).
    return [jnp.concatenate([hs_f[t], hs_b[t]], axis=1) for t in range(T)]


# ---------------- fully fused kernel: embed + BiLSTM + hidden2tag + Viterbi ----------

def _bilstm_crf_kernel(*refs, T, B, H, NT, L, n_vocab, start_idx):
    ids_ref, emb_ref = refs[0], refs[1]
    layer_refs = refs[2:2 + 3 * L]
    (h0_ref, c0_ref, wtag_ref, btag_ref,
     trans_ref, stop_ref) = refs[2 + 3 * L:8 + 3 * L]
    score_ref, path_ref, start_ref = refs[8 + 3 * L:11 + 3 * L]

    # ---- Embedding gather, fused as a one-hot MXU matmul ----------------------------
    # ids: [2*T*B, 1]; rows 0..T*B-1 are forward time order, rows T*B.. are reversed.
    ids = ids_ref[...]
    onehot = (lax.broadcasted_iota(jnp.int32, (2 * T * B, n_vocab), 1)
              == ids).astype(jnp.float32)
    x_all = jnp.dot(onehot, emb_ref[...], preferred_element_type=jnp.float32)
    x_f = x_all[0:T * B, :]
    x_b = x_all[T * B:2 * T * B, :]

    # ---- Bidirectional LSTM stack (direction folded into batch) ---------------------
    hcat = None
    for l in range(L):
        wih_ref, whh_ref, b_ref = layer_refs[3 * l:3 * l + 3]
        hcat = _run_bilstm_layer(x_f, x_b, wih_ref, whh_ref, b_ref,
                                 h0_ref[l], c0_ref[l], T=T, B=B, H=H)
        if l + 1 < L:
            x_f = jnp.concatenate(hcat, axis=0)          # [T*B, 2H] forward order
            x_b = jnp.concatenate(hcat[::-1], axis=0)    # reversed time order

    # ---- hidden2tag emissions, hoisted off the Viterbi chain ------------------------
    h_all = jnp.concatenate(hcat, axis=0)                                # [T*B, 2H]
    feats = (jnp.dot(h_all, wtag_ref[...], preferred_element_type=jnp.float32)
             + btag_ref[...])                                            # [T*B, NT]

    # ---- Viterbi max-plus recurrence (pure VPU/XLU; no matmuls on the chain) --------
    trans_b = trans_ref[...][None, :, :]                                 # [1, NT, NT]
    idx3 = lax.broadcasted_iota(jnp.int32, (B, NT, NT), 2).astype(jnp.float32)
    lane_i = lax.broadcasted_iota(jnp.int32, (B, NT), 1)
    lane_f = lane_i.astype(jnp.float32)

    fv = jnp.where(lane_i == start_idx, 0.0, NEG_INF)                    # [B, NT]
    bps = []
    for t in range(T):
        scores = fv[:, None, :] + trans_b                                # [B, NT, NT]
        best = jnp.max(scores, axis=2)                                   # [B, NT]
        # first-occurrence argmax via the min-index trick (kept in f32).
        bps.append(jnp.min(jnp.where(scores == best[..., None], idx3, float(NT)),
                           axis=2))
        fv = best + feats[t * B:(t + 1) * B, :]

    # ---- Epilogue: terminal scores + in-kernel backtrace ----------------------------
    terminal = fv + stop_ref[...]                                        # [B, NT]
    tmax = jnp.max(terminal, axis=1, keepdims=True)                      # [B, 1]
    cur = jnp.min(jnp.where(terminal == tmax, lane_f, float(NT)),
                  axis=1, keepdims=True)                                 # best last tag
    score_ref[...] = tmax

    tags = [None] * T
    tags[T - 1] = cur
    for t in range(T - 1, -1, -1):
        sel = (lane_f == cur)                                            # one-hot row
        cur = jnp.max(jnp.where(sel, bps[t], -1.0), axis=1, keepdims=True)
        if t > 0:
            tags[t - 1] = cur
    path_ref[...] = jnp.concatenate(tags, axis=1).astype(jnp.int32)      # [B, T]
    start_ref[...] = cur.astype(jnp.int32)                               # must be START


# ------------------------------------ wrapper ----------------------------------------

def _forward_impl(params, sentences, *, start_idx):
    B, T = sentences.shape
    emb = params["emb"]
    n_vocab = emb.shape[0]
    L = len(params["wih"])
    H = params["whh"][0].shape[1]
    NT = params["trans"].shape[0]

    # Token ids for both directions: rows 0..T*B-1 forward (r = t*B + b), rows
    # T*B..2*T*B-1 time-reversed (input of the folded backward direction).
    ids_tb = jnp.transpose(sentences).astype(jnp.int32)                  # [T, B]
    ids = jnp.concatenate([ids_tb, ids_tb[::-1]], axis=0).reshape(2 * T * B, 1)

    kernel = functools.partial(_bilstm_crf_kernel, T=T, B=B, H=H, NT=NT, L=L,
                               n_vocab=n_vocab, start_idx=start_idx)
    inputs = [ids, emb]
    for l in range(L):
        inputs += [params["wih"][l], params["whh"][l], params["b"][l]]
    inputs += [params["h0"], params["c0"], params["wtag"], params["btag"],
               params["trans"], params["stop"]]

    vmem = pltpu.MemorySpace.VMEM
    score, path, start = pl.pallas_call(
        kernel,
        out_shape=(jax.ShapeDtypeStruct((B, 1), jnp.float32),
                   jax.ShapeDtypeStruct((B, T), jnp.int32),
                   jax.ShapeDtypeStruct((B, 1), jnp.int32)),
        in_specs=[pl.BlockSpec(memory_space=vmem) for _ in inputs],
        out_specs=(pl.BlockSpec(memory_space=vmem),
                   pl.BlockSpec(memory_space=vmem),
                   pl.BlockSpec(memory_space=vmem)),
    )(*inputs)
    return score[:, 0], path, start[:, 0]


class BiLSTMCRF:
    def __init__(self, key, *, n_vocab, embed_size, hidden_size, num_layers,
                 n_tag, start_idx, stop_idx):
        H, L, E, NT = hidden_size, num_layers, embed_size, n_tag
        self.start_idx, self.stop_idx = start_idx, stop_idx
        keys = iter(jax.random.split(key, 6 + 8 * L))

        # nn.Embedding with padding_idx = n_vocab - 1 (padding row zeroed at init).
        emb = jax.random.normal(next(keys), (n_vocab, E), jnp.float32)
        emb = emb.at[n_vocab - 1].set(0.0)

        # PyTorch LSTM weights (gate order i, f, g, o), permuted once at init to
        # [i, f, o, g], transposed, and with b_ih + b_hh folded into a single bias.
        perm = np.concatenate([np.arange(0, H), np.arange(H, 2 * H),
                               np.arange(3 * H, 4 * H), np.arange(2 * H, 3 * H)])
        bound = 1.0 / np.sqrt(H)
        wih, whh, b = [], [], []
        for layer in range(L):
            in_size = E if layer == 0 else 2 * H
            wih_d, whh_d, b_d = [], [], []
            for _ in range(2):   # forward, backward
                w_ih = jax.random.uniform(next(keys), (4 * H, in_size),
                                          jnp.float32, -bound, bound)
                w_hh = jax.random.uniform(next(keys), (4 * H, H),
                                          jnp.float32, -bound, bound)
                b_ih = jax.random.uniform(next(keys), (4 * H,), jnp.float32,
                                          -bound, bound)
                b_hh = jax.random.uniform(next(keys), (4 * H,), jnp.float32,
                                          -bound, bound)
                wih_d.append(w_ih[perm].T)                       # [in, 4H]
                whh_d.append(w_hh[perm].T)                       # [H, 4H]
                b_d.append((b_ih + b_hh)[perm].reshape(1, 4 * H))
            wih.append(jnp.stack(wih_d))                         # [2, in, 4H]
            whh.append(jnp.stack(whh_d))                         # [2, H, 4H]
            b.append(jnp.stack(b_d))                             # [2, 1, 4H]

        # hidden2tag, cached pre-transposed ([2H, NT]).
        lb = 1.0 / np.sqrt(2 * H)
        w_tag = jax.random.uniform(next(keys), (NT, 2 * H), jnp.float32, -lb, lb)
        b_tag = jax.random.uniform(next(keys), (NT,), jnp.float32, -lb, lb)

        # CRF transitions: trans[i, j] = score of transitioning j -> i.
        trans = jax.random.normal(next(keys), (NT, NT), jnp.float32)
        trans = trans.at[start_idx, :].set(NEG_INF)
        trans = trans.at[:, stop_idx].set(NEG_INF)

        # PyTorch draws fresh randn(h0, c0) every forward; drawn once here
        # (deterministic), one vector per (layer, direction), broadcast over batch.
        # TODO(synk): sample h0/c0 per forward call if exact reference RNG behavior
        #             is ever required.
        h0 = jax.random.normal(next(keys), (L, 2, H), jnp.float32)
        c0 = jax.random.normal(next(keys), (L, 2, H), jnp.float32)

        self.params = dict(emb=emb, wih=wih, whh=whh, b=b, h0=h0, c0=c0,
                           wtag=jnp.transpose(w_tag),            # [2H, NT]
                           btag=b_tag.reshape(1, NT),
                           trans=trans,
                           stop=trans[stop_idx].reshape(1, NT))
        self._forward = jax.jit(functools.partial(_forward_impl,
                                                  start_idx=start_idx))

    def forward(self, sentences):
        # Returns (path_score [B], best_path [B, T], start_check [B]).
        return self._forward(self.params, sentences)


# --------------------------- pure NumPy reference (validation) -----------------------

def _reference_forward(params, sentences, start_idx):
    """Unfolded, direction-by-direction NumPy reference of the same forward pass."""
    p = jax.tree_util.tree_map(np.asarray, params)
    ids = np.asarray(sentences)
    B, T = ids.shape
    L = len(p["wih"])
    H = p["whh"][0].shape[1]
    NT = p["trans"].shape[0]

    def sigmoid(v):
        return 1.0 / (1.0 + np.exp(-v))

    inp = p["emb"][ids]                                          # [B, T, E]
    for l in range(L):
        out = np.zeros((B, T, 2 * H), np.float32)
        for d in range(2):
            h = np.broadcast_to(p["h0"][l, d], (B, H)).astype(np.float32)
            c = np.broadcast_to(p["c0"][l, d], (B, H)).astype(np.float32)
            order = range(T) if d == 0 else range(T - 1, -1, -1)
            for t in order:
                gates = (inp[:, t, :] @ p["wih"][l][d] + h @ p["whh"][l][d]
                         + p["b"][l][d])
                i = sigmoid(gates[:, 0:H])
                f = sigmoid(gates[:, H:2 * H])
                o = sigmoid(gates[:, 2 * H:3 * H])
                g = np.tanh(gates[:, 3 * H:4 * H])
                c = f * c + i * g
                h = o * np.tanh(c)
                out[:, t, d * H:(d + 1) * H] = h
        inp = out
    feats = inp @ p["wtag"] + p["btag"]                          # [B, T, NT]

    fv = np.full((B, NT), NEG_INF, np.float32)
    fv[:, start_idx] = 0.0
    bps = []
    for t in range(T):
        scores = fv[:, None, :] + p["trans"][None, :, :]
        bps.append(scores.argmax(axis=2))
        fv = scores.max(axis=2) + feats[:, t, :]
    terminal = fv + p["stop"]
    best_tag = terminal.argmax(axis=1)
    path_score = terminal[np.arange(B), best_tag]
    path = [best_tag]
    cur = best_tag
    for t in range(T - 1, -1, -1):
        cur = bps[t][np.arange(B), cur]
        path.append(cur)
    start_check = path.pop()
    path.reverse()
    return path_score, np.stack(path, axis=1), start_check


# ------------------------------------- main ------------------------------------------

if __name__ == "__main__":
    B, T = 2, 8
    n_vocab, embed_size, hidden_size, num_layers = 50, 16, 32, 1
    n_tag = 6                        # 4 real tags + START + STOP
    START_IDX, STOP_IDX = 4, 5

    key = jax.random.PRNGKey(0)
    k_param, k_data = jax.random.split(key)

    model = BiLSTMCRF(
        k_param,
        n_vocab=n_vocab, embed_size=embed_size, hidden_size=hidden_size,
        num_layers=num_layers, n_tag=n_tag,
        start_idx=START_IDX, stop_idx=STOP_IDX,
    )

    sentences = jax.random.randint(k_data, (B, T), 0, n_vocab - 1, jnp.int32)

    score, tag_seq, start_check = model.forward(sentences)
    score = jax.block_until_ready(score)
    tag_seq = jax.block_until_ready(tag_seq)
    start_check = jax.block_until_ready(start_check)

    assert score.shape == (B,)
    assert tag_seq.shape == (B, T)
    # Same invariant the PyTorch module asserts: the backtrace must land on START.
    assert bool(np.all(np.asarray(start_check) == START_IDX))
    # Decoded tags must be valid tag indices.
    assert int(np.max(np.asarray(tag_seq))) < n_tag

    # Cross-check the fused kernel against a pure NumPy reference of the same math.
    ref_score, ref_path, ref_start = _reference_forward(model.params, sentences,
                                                        START_IDX)
    np.testing.assert_allclose(np.asarray(score), ref_score, rtol=1e-2, atol=1e-2)
    assert np.array_equal(np.asarray(tag_seq), ref_path)
    assert bool(np.all(ref_start == START_IDX))

    print("KERNEL_OK")
</pallas_src>

<mosaic_0001>
module attributes {stable_mosaic.version = 11 : i64} {
  func.func @_bilstm_crf_kernel(%arg0: memref<32x1xi32, #tpu.memory_space<vmem>>, %arg1: memref<50x16xf32, #tpu.memory_space<vmem>>, %arg2: memref<2x16x128xf32, #tpu.memory_space<vmem>>, %arg3: memref<2x32x128xf32, #tpu.memory_space<vmem>>, %arg4: memref<2x1x128xf32, #tpu.memory_space<vmem>>, %arg5: memref<1x2x32xf32, #tpu.memory_space<vmem>>, %arg6: memref<1x2x32xf32, #tpu.memory_space<vmem>>, %arg7: memref<64x6xf32, #tpu.memory_space<vmem>>, %arg8: memref<1x6xf32, #tpu.memory_space<vmem>>, %arg9: memref<6x6xf32, #tpu.memory_space<vmem>>, %arg10: memref<1x6xf32, #tpu.memory_space<vmem>>, %arg11: memref<2x1xf32, #tpu.memory_space<vmem>>, %arg12: memref<2x8xi32, #tpu.memory_space<vmem>>, %arg13: memref<2x1xi32, #tpu.memory_space<vmem>>) attributes {dimension_semantics = [], scalar_prefetch = 0 : i64, scratch_operands = 0 : i64, tpu.core_type = #tpu.core_type<tc>} {
    %c0 = arith.constant 0 : index
    %c0_0 = arith.constant 0 : index
    %0 = vector.load %arg0[%c0, %c0_0] : memref<32x1xi32, #tpu.memory_space<vmem>>, vector<32x1xi32>
    %1 = tpu.iota {dimensions = array<i32: 1>} : vector<32x50xi32>
    %2 = vector.broadcast %0 : vector<32x1xi32> to vector<32x50xi32>
    %3 = arith.cmpi eq, %1, %2 : vector<32x50xi32>
    %4 = arith.extui %3 : vector<32x50xi1> to vector<32x50xi32>
    %5 = arith.sitofp %4 : vector<32x50xi32> to vector<32x50xf32>
    %c0_1 = arith.constant 0 : index
    %c0_2 = arith.constant 0 : index
    %6 = vector.load %arg1[%c0_1, %c0_2] : memref<50x16xf32, #tpu.memory_space<vmem>>, vector<50x16xf32>
    %cst = arith.constant dense<0.000000e+00> : vector<32x16xf32>
    %7 = tpu.matmul %5, %6, %cst {dimension_numbers = #tpu.dot_dimension_numbers<[1], [0], [0], [1], [0, 0, 1, 1], [], []>} : vector<32x50xf32>, vector<50x16xf32>, vector<32x16xf32> -> vector<32x16xf32>
    %8 = vector.extract_strided_slice %7 {offsets = [0, 0], sizes = [16, 16], strides = [1, 1]} : vector<32x16xf32> to vector<16x16xf32>
    %9 = vector.extract_strided_slice %7 {offsets = [16, 0], sizes = [16, 16], strides = [1, 1]} : vector<32x16xf32> to vector<16x16xf32>
    %c0_3 = arith.constant 0 : index
    %c0_4 = arith.constant 0 : index
    %c0_5 = arith.constant 0 : index
    %10 = vector.load %arg5[%c0_3, %c0_4, %c0_5] : memref<1x2x32xf32, #tpu.memory_space<vmem>>, vector<1x2x32xf32>
    %11 = vector.shape_cast %10 : vector<1x2x32xf32> to vector<2x32xf32>
    %c0_6 = arith.constant 0 : index
    %c0_7 = arith.constant 0 : index
    %c0_8 = arith.constant 0 : index
    %12 = vector.load %arg6[%c0_6, %c0_7, %c0_8] : memref<1x2x32xf32, #tpu.memory_space<vmem>>, vector<1x2x32xf32>
    %13 = vector.shape_cast %12 : vector<1x2x32xf32> to vector<2x32xf32>
    %c0_9 = arith.constant 0 : index
    %c0_10 = arith.constant 0 : index
    %c0_11 = arith.constant 0 : index
    %14 = vector.load %arg2[%c0_9, %c0_10, %c0_11] : memref<2x16x128xf32, #tpu.memory_space<vmem>>, vector<1x16x128xf32>
    %15 = vector.shape_cast %14 : vector<1x16x128xf32> to vector<16x128xf32>
    %c1 = arith.constant 1 : index
    %c0_12 = arith.constant 0 : index
    %c0_13 = arith.constant 0 : index
    %16 = vector.load %arg2[%c1, %c0_12, %c0_13] : memref<2x16x128xf32, #tpu.memory_space<vmem>>, vector<1x16x128xf32>
    %17 = vector.shape_cast %16 : vector<1x16x128xf32> to vector<16x128xf32>
    %c0_14 = arith.constant 0 : index
    %c0_15 = arith.constant 0 : index
    %c0_16 = arith.constant 0 : index
    %18 = vector.load %arg3[%c0_14, %c0_15, %c0_16] : memref<2x32x128xf32, #tpu.memory_space<vmem>>, vector<1x32x128xf32>
    %19 = vector.shape_cast %18 : vector<1x32x128xf32> to vector<32x128xf32>
    %c1_17 = arith.constant 1 : index
    %c0_18 = arith.constant 0 : index
    %c0_19 = arith.constant 0 : index
    %20 = vector.load %arg3[%c1_17, %c0_18, %c0_19] : memref<2x32x128xf32, #tpu.memory_space<vmem>>, vector<1x32x128xf32>
    %21 = vector.shape_cast %20 : vector<1x32x128xf32> to vector<32x128xf32>
    %c0_20 = arith.constant 0 : index
    %c0_21 = arith.constant 0 : index
    %c0_22 = arith.constant 0 : index
    %22 = vector.load %arg4[%c0_20, %c0_21, %c0_22] : memref<2x1x128xf32, #tpu.memory_space<vmem>>, vector<1x1x128xf32>
    %23 = vector.shape_cast %22 : vector<1x1x128xf32> to vector<1x128xf32>
    %c1_23 = arith.constant 1 : index
    %c0_24 = arith.constant 0 : index
    %c0_25 = arith.constant 0 : index
    %24 = vector.load %arg4[%c1_23, %c0_24, %c0_25] : memref<2x1x128xf32, #tpu.memory_space<vmem>>, vector<1x1x128xf32>
    %25 = vector.shape_cast %24 : vector<1x1x128xf32> to vector<1x128xf32>
    %cst_26 = arith.constant dense<0.000000e+00> : vector<16x128xf32>
    %26 = tpu.matmul %8, %15, %cst_26 {dimension_numbers = #tpu.dot_dimension_numbers<[1], [0], [0], [1], [0, 0, 1, 1], [], []>} : vector<16x16xf32>, vector<16x128xf32>, vector<16x128xf32> -> vector<16x128xf32>
    %27 = vector.broadcast %23 : vector<1x128xf32> to vector<16x128xf32>
    %28 = arith.addf %26, %27 : vector<16x128xf32>
    %cst_27 = arith.constant dense<0.000000e+00> : vector<16x128xf32>
    %29 = tpu.matmul %9, %17, %cst_27 {dimension_numbers = #tpu.dot_dimension_numbers<[1], [0], [0], [1], [0, 0, 1, 1], [], []>} : vector<16x16xf32>, vector<16x128xf32>, vector<16x128xf32> -> vector<16x128xf32>
    %30 = vector.broadcast %25 : vector<1x128xf32> to vector<16x128xf32>
    %31 = arith.addf %29, %30 : vector<16x128xf32>
    %32 = vector.extract_strided_slice %28 {offsets = [0, 0], sizes = [2, 128], strides = [1, 1]} : vector<16x128xf32> to vector<2x128xf32>
    %33 = vector.extract_strided_slice %31 {offsets = [0, 0], sizes = [2, 128], strides = [1, 1]} : vector<16x128xf32> to vector<2x128xf32>
    %34 = tpu.concatenate %32, %33 in 0 : vector<2x128xf32>, vector<2x128xf32> -> vector<4x128xf32>
    %35 = vector.extract_strided_slice %28 {offsets = [2, 0], sizes = [2, 128], strides = [1, 1]} : vector<16x128xf32> to vector<2x128xf32>
    %36 = vector.extract_strided_slice %31 {offsets = [2, 0], sizes = [2, 128], strides = [1, 1]} : vector<16x128xf32> to vector<2x128xf32>
    %37 = tpu.concatenate %35, %36 in 0 : vector<2x128xf32>, vector<2x128xf32> -> vector<4x128xf32>
    %38 = vector.extract_strided_slice %28 {offsets = [4, 0], sizes = [2, 128], strides = [1, 1]} : vector<16x128xf32> to vector<2x128xf32>
    %39 = vector.extract_strided_slice %31 {offsets = [4, 0], sizes = [2, 128], strides = [1, 1]} : vector<16x128xf32> to vector<2x128xf32>
    %40 = tpu.concatenate %38, %39 in 0 : vector<2x128xf32>, vector<2x128xf32> -> vector<4x128xf32>
    %41 = vector.extract_strided_slice %28 {offsets = [6, 0], sizes = [2, 128], strides = [1, 1]} : vector<16x128xf32> to vector<2x128xf32>
    %42 = vector.extract_strided_slice %31 {offsets = [6, 0], sizes = [2, 128], strides = [1, 1]} : vector<16x128xf32> to vector<2x128xf32>
    %43 = tpu.concatenate %41, %42 in 0 : vector<2x128xf32>, vector<2x128xf32> -> vector<4x128xf32>
    %44 = vector.extract_strided_slice %28 {offsets = [8, 0], sizes = [2, 128], strides = [1, 1]} : vector<16x128xf32> to vector<2x128xf32>
    %45 = vector.extract_strided_slice %31 {offsets = [8, 0], sizes = [2, 128], strides = [1, 1]} : vector<16x128xf32> to vector<2x128xf32>
    %46 = tpu.concatenate %44, %45 in 0 : vector<2x128xf32>, vector<2x128xf32> -> vector<4x128xf32>
    %47 = vector.extract_strided_slice %28 {offsets = [10, 0], sizes = [2, 128], strides = [1, 1]} : vector<16x128xf32> to vector<2x128xf32>
    %48 = vector.extract_strided_slice %31 {offsets = [10, 0], sizes = [2, 128], strides = [1, 1]} : vector<16x128xf32> to vector<2x128xf32>
    %49 = tpu.concatenate %47, %48 in 0 : vector<2x128xf32>, vector<2x128xf32> -> vector<4x128xf32>
    %50 = vector.extract_strided_slice %28 {offsets = [12, 0], sizes = [2, 128], strides = [1, 1]} : vector<16x128xf32> to vector<2x128xf32>
    %51 = vector.extract_strided_slice %31 {offsets = [12, 0], sizes = [2, 128], strides = [1, 1]} : vector<16x128xf32> to vector<2x128xf32>
    %52 = tpu.concatenate %50, %51 in 0 : vector<2x128xf32>, vector<2x128xf32> -> vector<4x128xf32>
    %53 = vector.extract_strided_slice %28 {offsets = [14, 0], sizes = [2, 128], strides = [1, 1]} : vector<16x128xf32> to vector<2x128xf32>
    %54 = vector.extract_strided_slice %31 {offsets = [14, 0], sizes = [2, 128], strides = [1, 1]} : vector<16x128xf32> to vector<2x128xf32>
    %55 = tpu.concatenate %53, %54 in 0 : vector<2x128xf32>, vector<2x128xf32> -> vector<4x128xf32>
    %56 = vector.extract_strided_slice %11 {offsets = [0, 0], sizes = [1, 32], strides = [1, 1]} : vector<2x32xf32> to vector<1x32xf32>
    %57 = vector.shape_cast %56 : vector<1x32xf32> to vector<1x32xf32>
    %58 = vector.broadcast %57 : vector<1x32xf32> to vector<2x32xf32>
    %59 = vector.extract_strided_slice %11 {offsets = [1, 0], sizes = [1, 32], strides = [1, 1]} : vector<2x32xf32> to vector<1x32xf32>
    %60 = vector.shape_cast %59 : vector<1x32xf32> to vector<1x32xf32>
    %61 = vector.broadcast %60 : vector<1x32xf32> to vector<2x32xf32>
    %62 = tpu.concatenate %58, %61 in 0 : vector<2x32xf32>, vector<2x32xf32> -> vector<4x32xf32>
    %63 = vector.extract_strided_slice %13 {offsets = [0, 0], sizes = [1, 32], strides = [1, 1]} : vector<2x32xf32> to vector<1x32xf32>
    %64 = vector.shape_cast %63 : vector<1x32xf32> to vector<1x32xf32>
    %65 = vector.broadcast %64 : vector<1x32xf32> to vector<2x32xf32>
    %66 = vector.extract_strided_slice %13 {offsets = [1, 0], sizes = [1, 32], strides = [1, 1]} : vector<2x32xf32> to vector<1x32xf32>
    %67 = vector.shape_cast %66 : vector<1x32xf32> to vector<1x32xf32>
    %68 = vector.broadcast %67 : vector<1x32xf32> to vector<2x32xf32>
    %69 = tpu.concatenate %65, %68 in 0 : vector<2x32xf32>, vector<2x32xf32> -> vector<4x32xf32>
    %70 = tpu.iota {dimensions = array<i32: 0>} : vector<4x128xi32>
    %c2_i32 = arith.constant 2 : i32
    %71 = vector.broadcast %c2_i32 : i32 to vector<4x128xi32>
    %72 = arith.cmpi slt, %70, %71 : vector<4x128xi32>
    %cst_28 = arith.constant dense<0.000000e+00> : vector<4x128xf32>
    %73 = tpu.matmul %62, %19, %cst_28 {dimension_numbers = #tpu.dot_dimension_numbers<[1], [0], [0], [1], [0, 0, 1, 1], [], []>} : vector<4x32xf32>, vector<32x128xf32>, vector<4x128xf32> -> vector<4x128xf32>
    %cst_29 = arith.constant dense<0.000000e+00> : vector<4x128xf32>
    %74 = tpu.matmul %62, %21, %cst_29 {dimension_numbers = #tpu.dot_dimension_numbers<[1], [0], [0], [1], [0, 0, 1, 1], [], []>} : vector<4x32xf32>, vector<32x128xf32>, vector<4x128xf32> -> vector<4x128xf32>
    %75 = arith.select %72, %73, %74 : vector<4x128xi1>, vector<4x128xf32>
    %76 = arith.addf %34, %75 : vector<4x128xf32>
    %77 = vector.extract_strided_slice %76 {offsets = [0, 0], sizes = [4, 96], strides = [1, 1]} : vector<4x128xf32> to vector<4x96xf32>
    %78 = arith.negf %77 : vector<4x96xf32>
    %79 = math.exp %78 : vector<4x96xf32>
    %cst_30 = arith.constant 1.000000e+00 : f32
    %80 = vector.broadcast %cst_30 : f32 to vector<4x96xf32>
    %81 = arith.addf %80, %79 : vector<4x96xf32>
    %82 = arith.divf %80, %81 : vector<4x96xf32>
    %83 = vector.extract_strided_slice %82 {offsets = [0, 0], sizes = [4, 32], strides = [1, 1]} : vector<4x96xf32> to vector<4x32xf32>
    %84 = vector.extract_strided_slice %82 {offsets = [0, 32], sizes = [4, 32], strides = [1, 1]} : vector<4x96xf32> to vector<4x32xf32>
    %85 = vector.extract_strided_slice %82 {offsets = [0, 64], sizes = [4, 32], strides = [1, 1]} : vector<4x96xf32> to vector<4x32xf32>
    %86 = vector.extract_strided_slice %76 {offsets = [0, 96], sizes = [4, 32], strides = [1, 1]} : vector<4x128xf32> to vector<4x32xf32>
    %87 = math.tanh %86 : vector<4x32xf32>
    %88 = arith.mulf %84, %69 : vector<4x32xf32>
    %89 = arith.mulf %83, %87 : vector<4x32xf32>
    %90 = arith.addf %88, %89 : vector<4x32xf32>
    %91 = math.tanh %90 : vector<4x32xf32>
    %92 = arith.mulf %85, %91 : vector<4x32xf32>
    %93 = vector.extract_strided_slice %92 {offsets = [0, 0], sizes = [2, 32], strides = [1, 1]} : vector<4x32xf32> to vector<2x32xf32>
    %94 = vector.extract_strided_slice %92 {offsets = [2, 0], sizes = [2, 32], strides = [1, 1]} : vector<4x32xf32> to vector<2x32xf32>
    %cst_31 = arith.constant dense<0.000000e+00> : vector<4x128xf32>
    %95 = tpu.matmul %92, %19, %cst_31 {dimension_numbers = #tpu.dot_dimension_numbers<[1], [0], [0], [1], [0, 0, 1, 1], [], []>} : vector<4x32xf32>, vector<32x128xf32>, vector<4x128xf32> -> vector<4x128xf32>
    %cst_32 = arith.constant dense<0.000000e+00> : vector<4x128xf32>
    %96 = tpu.matmul %92, %21, %cst_32 {dimension_numbers = #tpu.dot_dimension_numbers<[1], [0], [0], [1], [0, 0, 1, 1], [], []>} : vector<4x32xf32>, vector<32x128xf32>, vector<4x128xf32> -> vector<4x128xf32>
    %97 = arith.select %72, %95, %96 : vector<4x128xi1>, vector<4x128xf32>
    %98 = arith.addf %37, %97 : vector<4x128xf32>
    %99 = vector.extract_strided_slice %98 {offsets = [0, 0], sizes = [4, 96], strides = [1, 1]} : vector<4x128xf32> to vector<4x96xf32>
    %100 = arith.negf %99 : vector<4x96xf32>
    %101 = math.exp %100 : vector<4x96xf32>
    %cst_33 = arith.constant 1.000000e+00 : f32
    %102 = vector.broadcast %cst_33 : f32 to vector<4x96xf32>
    %103 = arith.addf %102, %101 : vector<4x96xf32>
    %104 = arith.divf %102, %103 : vector<4x96xf32>
    %105 = vector.extract_strided_slice %104 {offsets = [0, 0], sizes = [4, 32], strides = [1, 1]} : vector<4x96xf32> to vector<4x32xf32>
    %106 = vector.extract_strided_slice %104 {offsets = [0, 32], sizes = [4, 32], strides = [1, 1]} : vector<4x96xf32> to vector<4x32xf32>
    %107 = vector.extract_strided_slice %104 {offsets = [0, 64], sizes = [4, 32], strides = [1, 1]} : vector<4x96xf32> to vector<4x32xf32>
    %108 = vector.extract_strided_slice %98 {offsets = [0, 96], sizes = [4, 32], strides = [1, 1]} : vector<4x128xf32> to vector<4x32xf32>
    %109 = math.tanh %108 : vector<4x32xf32>
    %110 = arith.mulf %106, %90 : vector<4x32xf32>
    %111 = arith.mulf %105, %109 : vector<4x32xf32>
    %112 = arith.addf %110, %111 : vector<4x32xf32>
    %113 = math.tanh %112 : vector<4x32xf32>
    %114 = arith.mulf %107, %113 : vector<4x32xf32>
    %115 = vector.extract_strided_slice %114 {offsets = [0, 0], sizes = [2, 32], strides = [1, 1]} : vector<4x32xf32> to vector<2x32xf32>
    %116 = vector.extract_strided_slice %114 {offsets = [2, 0], sizes = [2, 32], strides = [1, 1]} : vector<4x32xf32> to vector<2x32xf32>
    %cst_34 = arith.constant dense<0.000000e+00> : vector<4x128xf32>
    %117 = tpu.matmul %114, %19, %cst_34 {dimension_numbers = #tpu.dot_dimension_numbers<[1], [0], [0], [1], [0, 0, 1, 1], [], []>} : vector<4x32xf32>, vector<32x128xf32>, vector<4x128xf32> -> vector<4x128xf32>
    %cst_35 = arith.constant dense<0.000000e+00> : vector<4x128xf32>
    %118 = tpu.matmul %114, %21, %cst_35 {dimension_numbers = #tpu.dot_dimension_numbers<[1], [0], [0], [1], [0, 0, 1, 1], [], []>} : vector<4x32xf32>, vector<32x128xf32>, vector<4x128xf32> -> vector<4x128xf32>
    %119 = arith.select %72, %117, %118 : vector<4x128xi1>, vector<4x128xf32>
    %120 = arith.addf %40, %119 : vector<4x128xf32>
    %121 = vector.extract_strided_slice %120 {offsets = [0, 0], sizes = [4, 96], strides = [1, 1]} : vector<4x128xf32> to vector<4x96xf32>
    %122 = arith.negf %121 : vector<4x96xf32>
    %123 = math.exp %122 : vector<4x96xf32>
    %cst_36 = arith.constant 1.000000e+00 : f32
    %124 = vector.broadcast %cst_36 : f32 to vector<4x96xf32>
    %125 = arith.addf %124, %123 : vector<4x96xf32>
    %126 = arith.divf %124, %125 : vector<4x96xf32>
    %127 = vector.extract_strided_slice %126 {offsets = [0, 0], sizes = [4, 32], strides = [1, 1]} : vector<4x96xf32> to vector<4x32xf32>
    %128 = vector.extract_strided_slice %126 {offsets = [0, 32], sizes = [4, 32], strides = [1, 1]} : vector<4x96xf32> to vector<4x32xf32>
    %129 = vector.extract_strided_slice %126 {offsets = [0, 64], sizes = [4, 32], strides = [1, 1]} : vector<4x96xf32> to vector<4x32xf32>
    %130 = vector.extract_strided_slice %120 {offsets = [0, 96], sizes = [4, 32], strides = [1, 1]} : vector<4x128xf32> to vector<4x32xf32>
    %131 = math.tanh %130 : vector<4x32xf32>
    %132 = arith.mulf %128, %112 : vector<4x32xf32>
    %133 = arith.mulf %127, %131 : vector<4x32xf32>
    %134 = arith.addf %132, %133 : vector<4x32xf32>
    %135 = math.tanh %134 : vector<4x32xf32>
    %136 = arith.mulf %129, %135 : vector<4x32xf32>
    %137 = vector.extract_strided_slice %136 {offsets = [0, 0], sizes = [2, 32], strides = [1, 1]} : vector<4x32xf32> to vector<2x32xf32>
    %138 = vector.extract_strided_slice %136 {offsets = [2, 0], sizes = [2, 32], strides = [1, 1]} : vector<4x32xf32> to vector<2x32xf32>
    %cst_37 = arith.constant dense<0.000000e+00> : vector<4x128xf32>
    %139 = tpu.matmul %136, %19, %cst_37 {dimension_numbers = #tpu.dot_dimension_numbers<[1], [0], [0], [1], [0, 0, 1, 1], [], []>} : vector<4x32xf32>, vector<32x128xf32>, vector<4x128xf32> -> vector<4x128xf32>
    %cst_38 = arith.constant dense<0.000000e+00> : vector<4x128xf32>
    %140 = tpu.matmul %136, %21, %cst_38 {dimension_numbers = #tpu.dot_dimension_numbers<[1], [0], [0], [1], [0, 0, 1, 1], [], []>} : vector<4x32xf32>, vector<32x128xf32>, vector<4x128xf32> -> vector<4x128xf32>
    %141 = arith.select %72, %139, %140 : vector<4x128xi1>, vector<4x128xf32>
    %142 = arith.addf %43, %141 : vector<4x128xf32>
    %143 = vector.extract_strided_slice %142 {offsets = [0, 0], sizes = [4, 96], strides = [1, 1]} : vector<4x128xf32> to vector<4x96xf32>
    %144 = arith.negf %143 : vector<4x96xf32>
    %145 = math.exp %144 : vector<4x96xf32>
    %cst_39 = arith.constant 1.000000e+00 : f32
    %146 = vector.broadcast %cst_39 : f32 to vector<4x96xf32>
    %147 = arith.addf %146, %145 : vector<4x96xf32>
    %148 = arith.divf %146, %147 : vector<4x96xf32>
    %149 = vector.extract_strided_slice %148 {offsets = [0, 0], sizes = [4, 32], strides = [1, 1]} : vector<4x96xf32> to vector<4x32xf32>
    %150 = vector.extract_strided_slice %148 {offsets = [0, 32], sizes = [4, 32], strides = [1, 1]} : vector<4x96xf32> to vector<4x32xf32>
    %151 = vector.extract_strided_slice %148 {offsets = [0, 64], sizes = [4, 32], strides = [1, 1]} : vector<4x96xf32> to vector<4x32xf32>
    %152 = vector.extract_strided_slice %142 {offsets = [0, 96], sizes = [4, 32], strides = [1, 1]} : vector<4x128xf32> to vector<4x32xf32>
    %153 = math.tanh %152 : vector<4x32xf32>
    %154 = arith.mulf %150, %134 : vector<4x32xf32>
    %155 = arith.mulf %149, %153 : vector<4x32xf32>
    %156 = arith.addf %154, %155 : vector<4x32xf32>
    %157 = math.tanh %156 : vector<4x32xf32>
    %158 = arith.mulf %151, %157 : vector<4x32xf32>
    %159 = vector.extract_strided_slice %158 {offsets = [0, 0], sizes = [2, 32], strides = [1, 1]} : vector<4x32xf32> to vector<2x32xf32>
    %160 = vector.extract_strided_slice %158 {offsets = [2, 0], sizes = [2, 32], strides = [1, 1]} : vector<4x32xf32> to vector<2x32xf32>
    %cst_40 = arith.constant dense<0.000000e+00> : vector<4x128xf32>
    %161 = tpu.matmul %158, %19, %cst_40 {dimension_numbers = #tpu.dot_dimension_numbers<[1], [0], [0], [1], [0, 0, 1, 1], [], []>} : vector<4x32xf32>, vector<32x128xf32>, vector<4x128xf32> -> vector<4x128xf32>
    %cst_41 = arith.constant dense<0.000000e+00> : vector<4x128xf32>
    %162 = tpu.matmul %158, %21, %cst_41 {dimension_numbers = #tpu.dot_dimension_numbers<[1], [0], [0], [1], [0, 0, 1, 1], [], []>} : vector<4x32xf32>, vector<32x128xf32>, vector<4x128xf32> -> vector<4x128xf32>
    %163 = arith.select %72, %161, %162 : vector<4x128xi1>, vector<4x128xf32>
    %164 = arith.addf %46, %163 : vector<4x128xf32>
    %165 = vector.extract_strided_slice %164 {offsets = [0, 0], sizes = [4, 96], strides = [1, 1]} : vector<4x128xf32> to vector<4x96xf32>
    %166 = arith.negf %165 : vector<4x96xf32>
    %167 = math.exp %166 : vector<4x96xf32>
    %cst_42 = arith.constant 1.000000e+00 : f32
    %168 = vector.broadcast %cst_42 : f32 to vector<4x96xf32>
    %169 = arith.addf %168, %167 : vector<4x96xf32>
    %170 = arith.divf %168, %169 : vector<4x96xf32>
    %171 = vector.extract_strided_slice %170 {offsets = [0, 0], sizes = [4, 32], strides = [1, 1]} : vector<4x96xf32> to vector<4x32xf32>
    %172 = vector.extract_strided_slice %170 {offsets = [0, 32], sizes = [4, 32], strides = [1, 1]} : vector<4x96xf32> to vector<4x32xf32>
    %173 = vector.extract_strided_slice %170 {offsets = [0, 64], sizes = [4, 32], strides = [1, 1]} : vector<4x96xf32> to vector<4x32xf32>
    %174 = vector.extract_strided_slice %164 {offsets = [0, 96], sizes = [4, 32], strides = [1, 1]} : vector<4x128xf32> to vector<4x32xf32>
    %175 = math.tanh %174 : vector<4x32xf32>
    %176 = arith.mulf %172, %156 : vector<4x32xf32>
    %177 = arith.mulf %171, %175 : vector<4x32xf32>
    %178 = arith.addf %176, %177 : vector<4x32xf32>
    %179 = math.tanh %178 : vector<4x32xf32>
    %180 = arith.mulf %173, %179 : vector<4x32xf32>
    %181 = vector.extract_strided_slice %180 {offsets = [0, 0], sizes = [2, 32], strides = [1, 1]} : vector<4x32xf32> to vector<2x32xf32>
    %182 = vector.extract_strided_slice %180 {offsets = [2, 0], sizes = [2, 32], strides = [1, 1]} : vector<4x32xf32> to vector<2x32xf32>
    %cst_43 = arith.constant dense<0.000000e+00> : vector<4x128xf32>
    %183 = tpu.matmul %180, %19, %cst_43 {dimension_numbers = #tpu.dot_dimension_numbers<[1], [0], [0], [1], [0, 0, 1, 1], [], []>} : vector<4x32xf32>, vector<32x128xf32>, vector<4x128xf32> -> vector<4x128xf32>
    %cst_44 = arith.constant dense<0.000000e+00> : vector<4x128xf32>
    %184 = tpu.matmul %180, %21, %cst_44 {dimension_numbers = #tpu.dot_dimension_numbers<[1], [0], [0], [1], [0, 0, 1, 1], [], []>} : vector<4x32xf32>, vector<32x128xf32>, vector<4x128xf32> -> vector<4x128xf32>
    %185 = arith.select %72, %183, %184 : vector<4x128xi1>, vector<4x128xf32>
    %186 = arith.addf %49, %185 : vector<4x128xf32>
    %187 = vector.extract_strided_slice %186 {offsets = [0, 0], sizes = [4, 96], strides = [1, 1]} : vector<4x128xf32> to vector<4x96xf32>
    %188 = arith.negf %187 : vector<4x96xf32>
    %189 = math.exp %188 : vector<4x96xf32>
    %cst_45 = arith.constant 1.000000e+00 : f32
    %190 = vector.broadcast %cst_45 : f32 to vector<4x96xf32>
    %191 = arith.addf %190, %189 : vector<4x96xf32>
    %192 = arith.divf %190, %191 : vector<4x96xf32>
    %193 = vector.extract_strided_slice %192 {offsets = [0, 0], sizes = [4, 32], strides = [1, 1]} : vector<4x96xf32> to vector<4x32xf32>
    %194 = vector.extract_strided_slice %192 {offsets = [0, 32], sizes = [4, 32], strides = [1, 1]} : vector<4x96xf32> to vector<4x32xf32>
    %195 = vector.extract_strided_slice %192 {offsets = [0, 64], sizes = [4, 32], strides = [1, 1]} : vector<4x96xf32> to vector<4x32xf32>
    %196 = vector.extract_strided_slice %186 {offsets = [0, 96], sizes = [4, 32], strides = [1, 1]} : vector<4x128xf32> to vector<4x32xf32>
    %197 = math.tanh %196 : vector<4x32xf32>
    %198 = arith.mulf %194, %178 : vector<4x32xf32>
    %199 = arith.mulf %193, %197 : vector<4x32xf32>
    %200 = arith.addf %198, %199 : vector<4x32xf32>
    %201 = math.tanh %200 : vector<4x32xf32>
    %202 = arith.mulf %195, %201 : vector<4x32xf32>
    %203 = vector.extract_strided_slice %202 {offsets = [0, 0], sizes = [2, 32], strides = [1, 1]} : vector<4x32xf32> to vector<2x32xf32>
    %204 = vector.extract_strided_slice %202 {offsets = [2, 0], sizes = [2, 32], strides = [1, 1]} : vector<4x32xf32> to vector<2x32xf32>
    %cst_46 = arith.constant dense<0.000000e+00> : vector<4x128xf32>
    %205 = tpu.matmul %202, %19, %cst_46 {dimension_numbers = #tpu.dot_dimension_numbers<[1], [0], [0], [1], [0, 0, 1, 1], [], []>} : vector<4x32xf32>, vector<32x128xf32>, vector<4x128xf32> -> vector<4x128xf32>
    %cst_47 = arith.constant dense<0.000000e+00> : vector<4x128xf32>
    %206 = tpu.matmul %202, %21, %cst_47 {dimension_numbers = #tpu.dot_dimension_numbers<[1], [0], [0], [1], [0, 0, 1, 1], [], []>} : vector<4x32xf32>, vector<32x128xf32>, vector<4x128xf32> -> vector<4x128xf32>
    %207 = arith.select %72, %205, %206 : vector<4x128xi1>, vector<4x128xf32>
    %208 = arith.addf %52, %207 : vector<4x128xf32>
    %209 = vector.extract_strided_slice %208 {offsets = [0, 0], sizes = [4, 96], strides = [1, 1]} : vector<4x128xf32> to vector<4x96xf32>
    %210 = arith.negf %209 : vector<4x96xf32>
    %211 = math.exp %210 : vector<4x96xf32>
    %cst_48 = arith.constant 1.000000e+00 : f32
    %212 = vector.broadcast %cst_48 : f32 to vector<4x96xf32>
    %213 = arith.addf %212, %211 : vector<4x96xf32>
    %214 = arith.divf %212, %213 : vector<4x96xf32>
    %215 = vector.extract_strided_slice %214 {offsets = [0, 0], sizes = [4, 32], strides = [1, 1]} : vector<4x96xf32> to vector<4x32xf32>
    %216 = vector.extract_strided_slice %214 {offsets = [0, 32], sizes = [4, 32], strides = [1, 1]} : vector<4x96xf32> to vector<4x32xf32>
    %217 = vector.extract_strided_slice %214 {offsets = [0, 64], sizes = [4, 32], strides = [1, 1]} : vector<4x96xf32> to vector<4x32xf32>
    %218 = vector.extract_strided_slice %208 {offsets = [0, 96], sizes = [4, 32], strides = [1, 1]} : vector<4x128xf32> to vector<4x32xf32>
    %219 = math.tanh %218 : vector<4x32xf32>
    %220 = arith.mulf %216, %200 : vector<4x32xf32>
    %221 = arith.mulf %215, %219 : vector<4x32xf32>
    %222 = arith.addf %220, %221 : vector<4x32xf32>
    %223 = math.tanh %222 : vector<4x32xf32>
    %224 = arith.mulf %217, %223 : vector<4x32xf32>
    %225 = vector.extract_strided_slice %224 {offsets = [0, 0], sizes = [2, 32], strides = [1, 1]} : vector<4x32xf32> to vector<2x32xf32>
    %226 = vector.extract_strided_slice %224 {offsets = [2, 0], sizes = [2, 32], strides = [1, 1]} : vector<4x32xf32> to vector<2x32xf32>
    %cst_49 = arith.constant dense<0.000000e+00> : vector<4x128xf32>
    %227 = tpu.matmul %224, %19, %cst_49 {dimension_numbers = #tpu.dot_dimension_numbers<[1], [0], [0], [1], [0, 0, 1, 1], [], []>} : vector<4x32xf32>, vector<32x128xf32>, vector<4x128xf32> -> vector<4x128xf32>
    %cst_50 = arith.constant dense<0.000000e+00> : vector<4x128xf32>
    %228 = tpu.matmul %224, %21, %cst_50 {dimension_numbers = #tpu.dot_dimension_numbers<[1], [0], [0], [1], [0, 0, 1, 1], [], []>} : vector<4x32xf32>, vector<32x128xf32>, vector<4x128xf32> -> vector<4x128xf32>
    %229 = arith.select %72, %227, %228 : vector<4x128xi1>, vector<4x128xf32>
    %230 = arith.addf %55, %229 : vector<4x128xf32>
    %231 = vector.extract_strided_slice %230 {offsets = [0, 0], sizes = [4, 96], strides = [1, 1]} : vector<4x128xf32> to vector<4x96xf32>
    %232 = arith.negf %231 : vector<4x96xf32>
    %233 = math.exp %232 : vector<4x96xf32>
    %cst_51 = arith.constant 1.000000e+00 : f32
    %234 = vector.broadcast %cst_51 : f32 to vector<4x96xf32>
    %235 = arith.addf %234, %233 : vector<4x96xf32>
    %236 = arith.divf %234, %235 : vector<4x96xf32>
    %237 = vector.extract_strided_slice %236 {offsets = [0, 0], sizes = [4, 32], strides = [1, 1]} : vector<4x96xf32> to vector<4x32xf32>
    %238 = vector.extract_strided_slice %236 {offsets = [0, 32], sizes = [4, 32], strides = [1, 1]} : vector<4x96xf32> to vector<4x32xf32>
    %239 = vector.extract_strided_slice %236 {offsets = [0, 64], sizes = [4, 32], strides = [1, 1]} : vector<4x96xf32> to vector<4x32xf32>
    %240 = vector.extract_strided_slice %230 {offsets = [0, 96], sizes = [4, 32], strides = [1, 1]} : vector<4x128xf32> to vector<4x32xf32>
    %241 = math.tanh %240 : vector<4x32xf32>
    %242 = arith.mulf %238, %222 : vector<4x32xf32>
    %243 = arith.mulf %237, %241 : vector<4x32xf32>
    %244 = arith.addf %242, %243 : vector<4x32xf32>
    %245 = math.tanh %244 : vector<4x32xf32>
    %246 = arith.mulf %239, %245 : vector<4x32xf32>
    %247 = vector.extract_strided_slice %246 {offsets = [0, 0], sizes = [2, 32], strides = [1, 1]} : vector<4x32xf32> to vector<2x32xf32>
    %248 = vector.extract_strided_slice %246 {offsets = [2, 0], sizes = [2, 32], strides = [1, 1]} : vector<4x32xf32> to vector<2x32xf32>
    %249 = tpu.concatenate %93, %248 in 1 : vector<2x32xf32>, vector<2x32xf32> -> vector<2x64xf32>
    %250 = tpu.concatenate %115, %226 in 1 : vector<2x32xf32>, vector<2x32xf32> -> vector<2x64xf32>
    %251 = tpu.concatenate %137, %204 in 1 : vector<2x32xf32>, vector<2x32xf32> -> vector<2x64xf32>
    %252 = tpu.concatenate %159, %182 in 1 : vector<2x32xf32>, vector<2x32xf32> -> vector<2x64xf32>
    %253 = tpu.concatenate %181, %160 in 1 : vector<2x32xf32>, vector<2x32xf32> -> vector<2x64xf32>
    %254 = tpu.concatenate %203, %138 in 1 : vector<2x32xf32>, vector<2x32xf32> -> vector<2x64xf32>
    %255 = tpu.concatenate %225, %116 in 1 : vector<2x32xf32>, vector<2x32xf32> -> vector<2x64xf32>
    %256 = tpu.concatenate %247, %94 in 1 : vector<2x32xf32>, vector<2x32xf32> -> vector<2x64xf32>
    %257 = tpu.concatenate %249, %250, %251, %252, %253, %254, %255, %256 in 0 : vector<2x64xf32>, vector<2x64xf32>, vector<2x64xf32>, vector<2x64xf32>, vector<2x64xf32>, vector<2x64xf32>, vector<2x64xf32>, vector<2x64xf32> -> vector<16x64xf32>
    %c0_52 = arith.constant 0 : index
    %c0_53 = arith.constant 0 : index
    %258 = vector.load %arg7[%c0_52, %c0_53] : memref<64x6xf32, #tpu.memory_space<vmem>>, vector<64x6xf32>
    %cst_54 = arith.constant dense<0.000000e+00> : vector<16x6xf32>
    %259 = tpu.matmul %257, %258, %cst_54 {dimension_numbers = #tpu.dot_dimension_numbers<[1], [0], [0], [1], [0, 0, 1, 1], [], []>} : vector<16x64xf32>, vector<64x6xf32>, vector<16x6xf32> -> vector<16x6xf32>
    %c0_55 = arith.constant 0 : index
    %c0_56 = arith.constant 0 : index
    %260 = vector.load %arg8[%c0_55, %c0_56] : memref<1x6xf32, #tpu.memory_space<vmem>>, vector<1x6xf32>
    %261 = vector.broadcast %260 : vector<1x6xf32> to vector<16x6xf32>
    %262 = arith.addf %259, %261 : vector<16x6xf32>
    %c0_57 = arith.constant 0 : index
    %c0_58 = arith.constant 0 : index
    %263 = vector.load %arg9[%c0_57, %c0_58] : memref<6x6xf32, #tpu.memory_space<vmem>>, vector<6x6xf32>
    %264 = vector.shape_cast %263 : vector<6x6xf32> to vector<1x6x6xf32>
    %265 = tpu.iota {dimensions = array<i32: 2>} : vector<2x6x6xi32>
    %266 = arith.sitofp %265 : vector<2x6x6xi32> to vector<2x6x6xf32>
    %267 = tpu.iota {dimensions = array<i32: 1>} : vector<2x6xi32>
    %268 = arith.sitofp %267 : vector<2x6xi32> to vector<2x6xf32>
    %c4_i32 = arith.constant 4 : i32
    %269 = vector.broadcast %c4_i32 : i32 to vector<2x6xi32>
    %270 = arith.cmpi eq, %267, %269 : vector<2x6xi32>
    %cst_59 = arith.constant 0.000000e+00 : f32
    %cst_60 = arith.constant -1.000000e+04 : f32
    %271 = vector.broadcast %cst_59 : f32 to vector<2x6xf32>
    %272 = vector.broadcast %cst_60 : f32 to vector<2x6xf32>
    %273 = arith.select %270, %271, %272 : vector<2x6xi1>, vector<2x6xf32>
    %274 = vector.shape_cast %273 : vector<2x6xf32> to vector<2x1x6xf32>
    %275 = vector.broadcast %274 : vector<2x1x6xf32> to vector<2x6x6xf32>
    %276 = vector.broadcast %264 : vector<1x6x6xf32> to vector<2x6x6xf32>
    %277 = arith.addf %275, %276 : vector<2x6x6xf32>
    %cst_61 = arith.constant dense<0xFF800000> : vector<2x6xf32>
    %278 = vector.multi_reduction <maximumf>, %277, %cst_61 [2] : vector<2x6x6xf32> to vector<2x6xf32>
    %279 = vector.shape_cast %278 : vector<2x6xf32> to vector<2x6x1xf32>
    %280 = vector.broadcast %279 : vector<2x6x1xf32> to vector<2x6x6xf32>
    %281 = arith.cmpf oeq, %277, %280 : vector<2x6x6xf32>
    %cst_62 = arith.constant 6.000000e+00 : f32
    %282 = vector.broadcast %cst_62 : f32 to vector<2x6x6xf32>
    %283 = arith.select %281, %266, %282 : vector<2x6x6xi1>, vector<2x6x6xf32>
    %cst_63 = arith.constant dense<0x7F800000> : vector<2x6xf32>
    %284 = vector.multi_reduction <minimumf>, %283, %cst_63 [2] : vector<2x6x6xf32> to vector<2x6xf32>
    %285 = vector.extract_strided_slice %262 {offsets = [0, 0], sizes = [2, 6], strides = [1, 1]} : vector<16x6xf32> to vector<2x6xf32>
    %286 = arith.addf %278, %285 : vector<2x6xf32>
    %287 = vector.shape_cast %286 : vector<2x6xf32> to vector<2x1x6xf32>
    %288 = vector.broadcast %287 : vector<2x1x6xf32> to vector<2x6x6xf32>
    %289 = vector.broadcast %264 : vector<1x6x6xf32> to vector<2x6x6xf32>
    %290 = arith.addf %288, %289 : vector<2x6x6xf32>
    %cst_64 = arith.constant dense<0xFF800000> : vector<2x6xf32>
    %291 = vector.multi_reduction <maximumf>, %290, %cst_64 [2] : vector<2x6x6xf32> to vector<2x6xf32>
    %292 = vector.shape_cast %291 : vector<2x6xf32> to vector<2x6x1xf32>
    %293 = vector.broadcast %292 : vector<2x6x1xf32> to vector<2x6x6xf32>
    %294 = arith.cmpf oeq, %290, %293 : vector<2x6x6xf32>
    %cst_65 = arith.constant 6.000000e+00 : f32
    %295 = vector.broadcast %cst_65 : f32 to vector<2x6x6xf32>
    %296 = arith.select %294, %266, %295 : vector<2x6x6xi1>, vector<2x6x6xf32>
    %cst_66 = arith.constant dense<0x7F800000> : vector<2x6xf32>
    %297 = vector.multi_reduction <minimumf>, %296, %cst_66 [2] : vector<2x6x6xf32> to vector<2x6xf32>
    %298 = vector.extract_strided_slice %262 {offsets = [2, 0], sizes = [2, 6], strides = [1, 1]} : vector<16x6xf32> to vector<2x6xf32>
    %299 = arith.addf %291, %298 : vector<2x6xf32>
    %300 = vector.shape_cast %299 : vector<2x6xf32> to vector<2x1x6xf32>
    %301 = vector.broadcast %300 : vector<2x1x6xf32> to vector<2x6x6xf32>
    %302 = vector.broadcast %264 : vector<1x6x6xf32> to vector<2x6x6xf32>
    %303 = arith.addf %301, %302 : vector<2x6x6xf32>
    %cst_67 = arith.constant dense<0xFF800000> : vector<2x6xf32>
    %304 = vector.multi_reduction <maximumf>, %303, %cst_67 [2] : vector<2x6x6xf32> to vector<2x6xf32>
    %305 = vector.shape_cast %304 : vector<2x6xf32> to vector<2x6x1xf32>
    %306 = vector.broadcast %305 : vector<2x6x1xf32> to vector<2x6x6xf32>
    %307 = arith.cmpf oeq, %303, %306 : vector<2x6x6xf32>
    %cst_68 = arith.constant 6.000000e+00 : f32
    %308 = vector.broadcast %cst_68 : f32 to vector<2x6x6xf32>
    %309 = arith.select %307, %266, %308 : vector<2x6x6xi1>, vector<2x6x6xf32>
    %cst_69 = arith.constant dense<0x7F800000> : vector<2x6xf32>
    %310 = vector.multi_reduction <minimumf>, %309, %cst_69 [2] : vector<2x6x6xf32> to vector<2x6xf32>
    %311 = vector.extract_strided_slice %262 {offsets = [4, 0], sizes = [2, 6], strides = [1, 1]} : vector<16x6xf32> to vector<2x6xf32>
    %312 = arith.addf %304, %311 : vector<2x6xf32>
    %313 = vector.shape_cast %312 : vector<2x6xf32> to vector<2x1x6xf32>
    %314 = vector.broadcast %313 : vector<2x1x6xf32> to vector<2x6x6xf32>
    %315 = vector.broadcast %264 : vector<1x6x6xf32> to vector<2x6x6xf32>
    %316 = arith.addf %314, %315 : vector<2x6x6xf32>
    %cst_70 = arith.constant dense<0xFF800000> : vector<2x6xf32>
    %317 = vector.multi_reduction <maximumf>, %316, %cst_70 [2] : vector<2x6x6xf32> to vector<2x6xf32>
    %318 = vector.shape_cast %317 : vector<2x6xf32> to vector<2x6x1xf32>
    %319 = vector.broadcast %318 : vector<2x6x1xf32> to vector<2x6x6xf32>
    %320 = arith.cmpf oeq, %316, %319 : vector<2x6x6xf32>
    %cst_71 = arith.constant 6.000000e+00 : f32
    %321 = vector.broadcast %cst_71 : f32 to vector<2x6x6xf32>
    %322 = arith.select %320, %266, %321 : vector<2x6x6xi1>, vector<2x6x6xf32>
    %cst_72 = arith.constant dense<0x7F800000> : vector<2x6xf32>
    %323 = vector.multi_reduction <minimumf>, %322, %cst_72 [2] : vector<2x6x6xf32> to vector<2x6xf32>
    %324 = vector.extract_strided_slice %262 {offsets = [6, 0], sizes = [2, 6], strides = [1, 1]} : vector<16x6xf32> to vector<2x6xf32>
    %325 = arith.addf %317, %324 : vector<2x6xf32>
    %326 = vector.shape_cast %325 : vector<2x6xf32> to vector<2x1x6xf32>
    %327 = vector.broadcast %326 : vector<2x1x6xf32> to vector<2x6x6xf32>
    %328 = vector.broadcast %264 : vector<1x6x6xf32> to vector<2x6x6xf32>
    %329 = arith.addf %327, %328 : vector<2x6x6xf32>
    %cst_73 = arith.constant dense<0xFF800000> : vector<2x6xf32>
    %330 = vector.multi_reduction <maximumf>, %329, %cst_73 [2] : vector<2x6x6xf32> to vector<2x6xf32>
    %331 = vector.shape_cast %330 : vector<2x6xf32> to vector<2x6x1xf32>
    %332 = vector.broadcast %331 : vector<2x6x1xf32> to vector<2x6x6xf32>
    %333 = arith.cmpf oeq, %329, %332 : vector<2x6x6xf32>
    %cst_74 = arith.constant 6.000000e+00 : f32
    %334 = vector.broadcast %cst_74 : f32 to vector<2x6x6xf32>
    %335 = arith.select %333, %266, %334 : vector<2x6x6xi1>, vector<2x6x6xf32>
    %cst_75 = arith.constant dense<0x7F800000> : vector<2x6xf32>
    %336 = vector.multi_reduction <minimumf>, %335, %cst_75 [2] : vector<2x6x6xf32> to vector<2x6xf32>
    %337 = vector.extract_strided_slice %262 {offsets = [8, 0], sizes = [2, 6], strides = [1, 1]} : vector<16x6xf32> to vector<2x6xf32>
    %338 = arith.addf %330, %337 : vector<2x6xf32>
    %339 = vector.shape_cast %338 : vector<2x6xf32> to vector<2x1x6xf32>
    %340 = vector.broadcast %339 : vector<2x1x6xf32> to vector<2x6x6xf32>
    %341 = vector.broadcast %264 : vector<1x6x6xf32> to vector<2x6x6xf32>
    %342 = arith.addf %340, %341 : vector<2x6x6xf32>
    %cst_76 = arith.constant dense<0xFF800000> : vector<2x6xf32>
    %343 = vector.multi_reduction <maximumf>, %342, %cst_76 [2] : vector<2x6x6xf32> to vector<2x6xf32>
    %344 = vector.shape_cast %343 : vector<2x6xf32> to vector<2x6x1xf32>
    %345 = vector.broadcast %344 : vector<2x6x1xf32> to vector<2x6x6xf32>
    %346 = arith.cmpf oeq, %342, %345 : vector<2x6x6xf32>
    %cst_77 = arith.constant 6.000000e+00 : f32
    %347 = vector.broadcast %cst_77 : f32 to vector<2x6x6xf32>
    %348 = arith.select %346, %266, %347 : vector<2x6x6xi1>, vector<2x6x6xf32>
    %cst_78 = arith.constant dense<0x7F800000> : vector<2x6xf32>
    %349 = vector.multi_reduction <minimumf>, %348, %cst_78 [2] : vector<2x6x6xf32> to vector<2x6xf32>
    %350 = vector.extract_strided_slice %262 {offsets = [10, 0], sizes = [2, 6], strides = [1, 1]} : vector<16x6xf32> to vector<2x6xf32>
    %351 = arith.addf %343, %350 : vector<2x6xf32>
    %352 = vector.shape_cast %351 : vector<2x6xf32> to vector<2x1x6xf32>
    %353 = vector.broadcast %352 : vector<2x1x6xf32> to vector<2x6x6xf32>
    %354 = vector.broadcast %264 : vector<1x6x6xf32> to vector<2x6x6xf32>
    %355 = arith.addf %353, %354 : vector<2x6x6xf32>
    %cst_79 = arith.constant dense<0xFF800000> : vector<2x6xf32>
    %356 = vector.multi_reduction <maximumf>, %355, %cst_79 [2] : vector<2x6x6xf32> to vector<2x6xf32>
    %357 = vector.shape_cast %356 : vector<2x6xf32> to vector<2x6x1xf32>
    %358 = vector.broadcast %357 : vector<2x6x1xf32> to vector<2x6x6xf32>
    %359 = arith.cmpf oeq, %355, %358 : vector<2x6x6xf32>
    %cst_80 = arith.constant 6.000000e+00 : f32
    %360 = vector.broadcast %cst_80 : f32 to vector<2x6x6xf32>
    %361 = arith.select %359, %266, %360 : vector<2x6x6xi1>, vector<2x6x6xf32>
    %cst_81 = arith.constant dense<0x7F800000> : vector<2x6xf32>
    %362 = vector.multi_reduction <minimumf>, %361, %cst_81 [2] : vector<2x6x6xf32> to vector<2x6xf32>
    %363 = vector.extract_strided_slice %262 {offsets = [12, 0], sizes = [2, 6], strides = [1, 1]} : vector<16x6xf32> to vector<2x6xf32>
    %364 = arith.addf %356, %363 : vector<2x6xf32>
    %365 = vector.shape_cast %364 : vector<2x6xf32> to vector<2x1x6xf32>
    %366 = vector.broadcast %365 : vector<2x1x6xf32> to vector<2x6x6xf32>
    %367 = vector.broadcast %264 : vector<1x6x6xf32> to vector<2x6x6xf32>
    %368 = arith.addf %366, %367 : vector<2x6x6xf32>
    %cst_82 = arith.constant dense<0xFF800000> : vector<2x6xf32>
    %369 = vector.multi_reduction <maximumf>, %368, %cst_82 [2] : vector<2x6x6xf32> to vector<2x6xf32>
    %370 = vector.shape_cast %369 : vector<2x6xf32> to vector<2x6x1xf32>
    %371 = vector.broadcast %370 : vector<2x6x1xf32> to vector<2x6x6xf32>
    %372 = arith.cmpf oeq, %368, %371 : vector<2x6x6xf32>
    %cst_83 = arith.constant 6.000000e+00 : f32
    %373 = vector.broadcast %cst_83 : f32 to vector<2x6x6xf32>
    %374 = arith.select %372, %266, %373 : vector<2x6x6xi1>, vector<2x6x6xf32>
    %cst_84 = arith.constant dense<0x7F800000> : vector<2x6xf32>
    %375 = vector.multi_reduction <minimumf>, %374, %cst_84 [2] : vector<2x6x6xf32> to vector<2x6xf32>
    %376 = vector.extract_strided_slice %262 {offsets = [14, 0], sizes = [2, 6], strides = [1, 1]} : vector<16x6xf32> to vector<2x6xf32>
    %377 = arith.addf %369, %376 : vector<2x6xf32>
    %c0_85 = arith.constant 0 : index
    %c0_86 = arith.constant 0 : index
    %378 = vector.load %arg10[%c0_85, %c0_86] : memref<1x6xf32, #tpu.memory_space<vmem>>, vector<1x6xf32>
    %379 = vector.broadcast %378 : vector<1x6xf32> to vector<2x6xf32>
    %380 = arith.addf %377, %379 : vector<2x6xf32>
    %cst_87 = arith.constant dense<0xFF800000> : vector<2xf32>
    %381 = vector.multi_reduction <maximumf>, %380, %cst_87 [1] : vector<2x6xf32> to vector<2xf32>
    %382 = vector.shape_cast %381 : vector<2xf32> to vector<2x1xf32>
    %383 = vector.broadcast %382 : vector<2x1xf32> to vector<2x6xf32>
    %384 = arith.cmpf oeq, %380, %383 : vector<2x6xf32>
    %cst_88 = arith.constant 6.000000e+00 : f32
    %385 = vector.broadcast %cst_88 : f32 to vector<2x6xf32>
    %386 = arith.select %384, %268, %385 : vector<2x6xi1>, vector<2x6xf32>
    %cst_89 = arith.constant dense<0x7F800000> : vector<2xf32>
    %387 = vector.multi_reduction <minimumf>, %386, %cst_89 [1] : vector<2x6xf32> to vector<2xf32>
    %388 = vector.shape_cast %387 : vector<2xf32> to vector<2x1xf32>
    %c0_90 = arith.constant 0 : index
    %c0_91 = arith.constant 0 : index
    %389 = vector.load %arg11[%c0_90, %c0_91] : memref<2x1xf32, #tpu.memory_space<vmem>>, vector<2x1xf32>
    tpu.vector_store %arg11[%c0_90, %c0_91], %382 {strides = array<i32>} : memref<2x1xf32, #tpu.memory_space<vmem>>, vector<2x1xf32>,
    %390 = vector.broadcast %388 : vector<2x1xf32> to vector<2x6xf32>
    %391 = arith.cmpf oeq, %268, %390 : vector<2x6xf32>
    %cst_92 = arith.constant -1.000000e+00 : f32
    %392 = vector.broadcast %cst_92 : f32 to vector<2x6xf32>
    %393 = arith.select %391, %375, %392 : vector<2x6xi1>, vector<2x6xf32>
    %cst_93 = arith.constant dense<0xFF800000> : vector<2xf32>
    %394 = vector.multi_reduction <maximumf>, %393, %cst_93 [1] : vector<2x6xf32> to vector<2xf32>
    %395 = vector.shape_cast %394 : vector<2xf32> to vector<2x1xf32>
    %396 = vector.broadcast %395 : vector<2x1xf32> to vector<2x6xf32>
    %397 = arith.cmpf oeq, %268, %396 : vector<2x6xf32>
    %cst_94 = arith.constant -1.000000e+00 : f32
    %398 = vector.broadcast %cst_94 : f32 to vector<2x6xf32>
    %399 = arith.select %397, %362, %398 : vector<2x6xi1>, vector<2x6xf32>
    %cst_95 = arith.constant dense<0xFF800000> : vector<2xf32>
    %400 = vector.multi_reduction <maximumf>, %399, %cst_95 [1] : vector<2x6xf32> to vector<2xf32>
    %401 = vector.shape_cast %400 : vector<2xf32> to vector<2x1xf32>
    %402 = vector.broadcast %401 : vector<2x1xf32> to vector<2x6xf32>
    %403 = arith.cmpf oeq, %268, %402 : vector<2x6xf32>
    %cst_96 = arith.constant -1.000000e+00 : f32
    %404 = vector.broadcast %cst_96 : f32 to vector<2x6xf32>
    %405 = arith.select %403, %349, %404 : vector<2x6xi1>, vector<2x6xf32>
    %cst_97 = arith.constant dense<0xFF800000> : vector<2xf32>
    %406 = vector.multi_reduction <maximumf>, %405, %cst_97 [1] : vector<2x6xf32> to vector<2xf32>
    %407 = vector.shape_cast %406 : vector<2xf32> to vector<2x1xf32>
    %408 = vector.broadcast %407 : vector<2x1xf32> to vector<2x6xf32>
    %409 = arith.cmpf oeq, %268, %408 : vector<2x6xf32>
    %cst_98 = arith.constant -1.000000e+00 : f32
    %410 = vector.broadcast %cst_98 : f32 to vector<2x6xf32>
    %411 = arith.select %409, %336, %410 : vector<2x6xi1>, vector<2x6xf32>
    %cst_99 = arith.constant dense<0xFF800000> : vector<2xf32>
    %412 = vector.multi_reduction <maximumf>, %411, %cst_99 [1] : vector<2x6xf32> to vector<2xf32>
    %413 = vector.shape_cast %412 : vector<2xf32> to vector<2x1xf32>
    %414 = vector.broadcast %413 : vector<2x1xf32> to vector<2x6xf32>
    %415 = arith.cmpf oeq, %268, %414 : vector<2x6xf32>
    %cst_100 = arith.constant -1.000000e+00 : f32
    %416 = vector.broadcast %cst_100 : f32 to vector<2x6xf32>
    %417 = arith.select %415, %323, %416 : vector<2x6xi1>, vector<2x6xf32>
    %cst_101 = arith.constant dense<0xFF800000> : vector<2xf32>
    %418 = vector.multi_reduction <maximumf>, %417, %cst_101 [1] : vector<2x6xf32> to vector<2xf32>
    %419 = vector.shape_cast %418 : vector<2xf32> to vector<2x1xf32>
    %420 = vector.broadcast %419 : vector<2x1xf32> to vector<2x6xf32>
    %421 = arith.cmpf oeq, %268, %420 : vector<2x6xf32>
    %cst_102 = arith.constant -1.000000e+00 : f32
    %422 = vector.broadcast %cst_102 : f32 to vector<2x6xf32>
    %423 = arith.select %421, %310, %422 : vector<2x6xi1>, vector<2x6xf32>
    %cst_103 = arith.constant dense<0xFF800000> : vector<2xf32>
    %424 = vector.multi_reduction <maximumf>, %423, %cst_103 [1] : vector<2x6xf32> to vector<2xf32>
    %425 = vector.shape_cast %424 : vector<2xf32> to vector<2x1xf32>
    %426 = vector.broadcast %425 : vector<2x1xf32> to vector<2x6xf32>
    %427 = arith.cmpf oeq, %268, %426 : vector<2x6xf32>
    %cst_104 = arith.constant -1.000000e+00 : f32
    %428 = vector.broadcast %cst_104 : f32 to vector<2x6xf32>
    %429 = arith.select %427, %297, %428 : vector<2x6xi1>, vector<2x6xf32>
    %cst_105 = arith.constant dense<0xFF800000> : vector<2xf32>
    %430 = vector.multi_reduction <maximumf>, %429, %cst_105 [1] : vector<2x6xf32> to vector<2xf32>
    %431 = vector.shape_cast %430 : vector<2xf32> to vector<2x1xf32>
    %432 = vector.broadcast %431 : vector<2x1xf32> to vector<2x6xf32>
    %433 = arith.cmpf oeq, %268, %432 : vector<2x6xf32>
    %cst_106 = arith.constant -1.000000e+00 : f32
    %434 = vector.broadcast %cst_106 : f32 to vector<2x6xf32>
    %435 = arith.select %433, %284, %434 : vector<2x6xi1>, vector<2x6xf32>
    %cst_107 = arith.constant dense<0xFF800000> : vector<2xf32>
    %436 = vector.multi_reduction <maximumf>, %435, %cst_107 [1] : vector<2x6xf32> to vector<2xf32>
    %437 = vector.shape_cast %436 : vector<2xf32> to vector<2x1xf32>
    %438 = tpu.concatenate %431, %425, %419, %413, %407, %401, %395, %388 in 1 : vector<2x1xf32>, vector<2x1xf32>, vector<2x1xf32>, vector<2x1xf32>, vector<2x1xf32>, vector<2x1xf32>, vector<2x1xf32>, vector<2x1xf32> -> vector<2x8xf32>
    %439 = arith.fptosi %438 : vector<2x8xf32> to vector<2x8xi32>
    %c0_108 = arith.constant 0 : index
    %c0_109 = arith.constant 0 : index
    %440 = vector.load %arg12[%c0_108, %c0_109] : memref<2x8xi32, #tpu.memory_space<vmem>>, vector<2x8xi32>
    tpu.vector_store %arg12[%c0_108, %c0_109], %439 {strides = array<i32>} : memref<2x8xi32, #tpu.memory_space<vmem>>, vector<2x8xi32>,
    %441 = arith.fptosi %437 : vector<2x1xf32> to vector<2x1xi32>
    %c0_110 = arith.constant 0 : index
    %c0_111 = arith.constant 0 : index
    %442 = vector.load %arg13[%c0_110, %c0_111] : memref<2x1xi32, #tpu.memory_space<vmem>>, vector<2x1xi32>
    tpu.vector_store %arg13[%c0_110, %c0_111], %441 {strides = array<i32>} : memref<2x1xi32, #tpu.memory_space<vmem>>, vector<2x1xi32>,
    return
  }
}

</mosaic_0001>

<llo_original>
// kernel: _forward_impl.1
$region0: #{_forward_impl.1}
  #allocation0 [shape = 'u32[]', space=smem, size = 0x4, offset = 0x4, fixed_abs, tag = 'smem constant byte address 0x4 - core index']
  #allocation1 [shape = 'u32[72,128]{1,0:T(1,128)}', space=vmem, size = 0x9000, scoped, tag = 'internal scratch']
  %s0 = inlined_call_operand.vmem [shape: s32[32,1], index: 0, kind: input, shape index: {}]
  %s1 = inlined_call_operand.vmem [shape: f32[50,16], index: 1, kind: input, shape index: {}]
  %s2 = inlined_call_operand.vmem [shape: f32[2,16,128], index: 2, kind: input, shape index: {}]
  %s3 = inlined_call_operand.vmem [shape: f32[2,32,128], index: 3, kind: input, shape index: {}]
  %s4 = inlined_call_operand.vmem [shape: f32[2,1,128], index: 4, kind: input, shape index: {}]
  %s5 = inlined_call_operand.vmem [shape: f32[1,2,32], index: 5, kind: input, shape index: {}]
  %s6 = inlined_call_operand.vmem [shape: f32[1,2,32], index: 6, kind: input, shape index: {}]
  %s7 = inlined_call_operand.vmem [shape: f32[64,6], index: 7, kind: input, shape index: {}]
  %s8 = inlined_call_operand.vmem [shape: f32[1,6], index: 8, kind: input, shape index: {}]
  %s9 = inlined_call_operand.vmem [shape: f32[6,6], index: 9, kind: input, shape index: {}]
  %s10 = inlined_call_operand.vmem [shape: f32[1,6], index: 10, kind: input, shape index: {}]
  %s11 = inlined_call_operand.vmem [shape: f32[2,1], index: 11, kind: output, shape index: {0}]
  %s12 = inlined_call_operand.hbm [shape: s32[2,8], index: 12, kind: output, shape index: {1}]
  %s13 = inlined_call_operand.vmem [shape: s32[2,1], index: 13, kind: output, shape index: {2}]
  %14 = xla_tuple %s11, %s12, %s13
  %s15 = sld [smem:[#allocation0]]
  $region70: #{_forward_impl.1} parent=0
    _
  %s17 = ssub.s32 1, %s15
  %s18 = scalar_select 0, %s17, %s15
  $region1: #{_forward_impl.1} parent=0
    #allocation2 [shape = 'u8[1024]{0}', space=vmem, size = 0x400, scoped, tag = 'output window, operand 1, single buffered']
    #allocation3 [shape = 's32[1]{0}', space=sflag, size = 0x4, scoped, tag = 'scoped memory for _forward_impl.1']
    %19 = vsyncpa [#allocation3], 0
    // Predicated region
    $region2: #{_forward_impl.1} parent=1 // pred_check
      _
    $region3: #{_forward_impl.1} parent=1 // pred_check_branch
      %21 = sbr.rel (0) target = $region5
    $region4: #{_forward_impl.1} parent=1 // pred_region
      _
    $region5: #{_forward_impl.1} parent=1 // pred_fallthru
      _
    // Predicated region
    $region6: #{_forward_impl.1} parent=1 // pred_check
      _
    $region7: #{_forward_impl.1} parent=1 // pred_check_branch
      %23 = sbr.rel (0) target = $region9
    $region8: #{_forward_impl.1} parent=1 // pred_region
      _
    $region9: #{_forward_impl.1} parent=1 // pred_fallthru
      _
    // Predicated region
    $region10: #{_forward_impl.1} parent=1 // pred_check
      _
    $region11: #{_forward_impl.1} parent=1 // pred_check_branch
      %25 = sbr.rel (0) target = $region13
    $region12: #{_forward_impl.1} parent=1 // pred_region
      _
    $region13: #{_forward_impl.1} parent=1 // pred_fallthru
      _
    // Predicated region
    $region14: #{_forward_impl.1} parent=1 // pred_check
      _
    $region15: #{_forward_impl.1} parent=1 // pred_check_branch
      %27 = sbr.rel (0) target = $region17
    $region16: #{_forward_impl.1} parent=1 // pred_region
      _
    $region17: #{_forward_impl.1} parent=1 // pred_fallthru
      _
    // Predicated region
    $region18: #{_forward_impl.1} parent=1 // pred_check
      _
    $region19: #{_forward_impl.1} parent=1 // pred_check_branch
      %29 = sbr.rel (0) target = $region21
    $region20: #{_forward_impl.1} parent=1 // pred_region
      _
    $region21: #{_forward_impl.1} parent=1 // pred_fallthru
      _
    // Predicated region
    $region22: #{_forward_impl.1} parent=1 // pred_check
      _
    $region23: #{_forward_impl.1} parent=1 // pred_check_branch
      %31 = sbr.rel (0) target = $region25
    $region24: #{_forward_impl.1} parent=1 // pred_region
      _
    $region25: #{_forward_impl.1} parent=1 // pred_fallthru
      _
    // Predicated region
    $region26: #{_forward_impl.1} parent=1 // pred_check
      _
    $region27: #{_forward_impl.1} parent=1 // pred_check_branch
      %33 = sbr.rel (0) target = $region29
    $region28: #{_forward_impl.1} parent=1 // pred_region
      _
    $region29: #{_forward_impl.1} parent=1 // pred_fallthru
      _
    // Predicated region
    $region30: #{_forward_impl.1} parent=1 // pred_check
      _
    $region31: #{_forward_impl.1} parent=1 // pred_check_branch
      %35 = sbr.rel (0) target = $region33
    $region32: #{_forward_impl.1} parent=1 // pred_region
      _
    $region33: #{_forward_impl.1} parent=1 // pred_fallthru
      _
    // Predicated region
    $region34: #{_forward_impl.1} parent=1 // pred_check
      _
    $region35: #{_forward_impl.1} parent=1 // pred_check_branch
      %37 = sbr.rel (0) target = $region37
    $region36: #{_forward_impl.1} parent=1 // pred_region
      _
    $region37: #{_forward_impl.1} parent=1 // pred_fallthru
      _
    // Predicated region
    $region38: #{_forward_impl.1} parent=1 // pred_check
      _
    $region39: #{_forward_impl.1} parent=1 // pred_check_branch
      %39 = sbr.rel (0) target = $region41
    $region40: #{_forward_impl.1} parent=1 // pred_region
      _
    $region41: #{_forward_impl.1} parent=1 // pred_fallthru
      _
    // Predicated region
    $region42: #{_forward_impl.1} parent=1 // pred_check
      _
    $region43: #{_forward_impl.1} parent=1 // pred_check_branch
      %41 = sbr.rel (0) target = $region45
    $region44: #{_forward_impl.1} parent=1 // pred_region
      _
    $region45: #{_forward_impl.1} parent=1 // pred_fallthru
      _
    %v42 = vld [vmem:[%s0] sm:$0xff]
    %v43 = vld [vmem:[%s0 + $0x8] sm:$0xff]
    %v44 = vld [vmem:[%s0 + $0x10] sm:$0xff]
    %v45 = vld [vmem:[%s0 + $0x18] sm:$0xff]
    %v46 = vlaneseq
    %v47 = vand.u32 %v46, 127
    %48 = vset.pattern.permute.xlu0 0
    %49 = vperm.xlu0 %48, %v42
    %v50 = vpop.permute.xlu0 %49
    %51 = vset.pattern.permute.xlu0 0
    %52 = vperm.xlu0 %51, %v43
    %v53 = vpop.permute.xlu0 %52
    %54 = vset.pattern.permute.xlu0 0
    %55 = vperm.xlu0 %54, %v44
    %v56 = vpop.permute.xlu0 %55
    %57 = vset.pattern.permute.xlu0 0
    %58 = vperm.xlu0 %57, %v45
    %v59 = vpop.permute.xlu0 %58
    %vm60 = vcmp.eq.s32.totalorder %v47, %v50
    %vm61 = vcmp.eq.s32.totalorder %v47, %v53
    %vm62 = vcmp.eq.s32.totalorder %v47, %v56
    %vm63 = vcmp.eq.s32.totalorder %v47, %v59
    %v64 = vsel %vm60, 1, 0
    %v65 = vsel %vm61, 1, 0
    %v66 = vsel %vm62, 1, 0
    %v67 = vsel %vm63, 1, 0
    %v68 = vcvt.s32.f32 %v64
    %v69 = vcvt.s32.f32 %v65
    %v70 = vcvt.s32.f32 %v66
    %v71 = vcvt.s32.f32 %v67
    %v72 = vld [vmem:[%s1] sm:$0xff]
    %v73 = vld [vmem:[%s1 + $0x8] sm:$0xff]
    %v74 = vld [vmem:[%s1 + $0x10] sm:$0xff]
    %v75 = vld [vmem:[%s1 + $0x18] sm:$0xff]
    %v76 = vld [vmem:[%s1 + $0x20] sm:$0xff]
    %v77 = vld [vmem:[%s1 + $0x28] sm:$0xff]
    %v78 = vld [vmem:[%s1 + $0x30] sm:$0x3]
    %vm79 = vcmask 408576
    %v81 = vsel %vm79, %v68, 0
    %v84 = vsel %vm79, %v69, 0
    %v87 = vsel %vm79, %v70, 0
    %v90 = vsel %vm79, %v71, 0
    %vm92 = vcmask 1041408
    %v94 = vsel %vm92, %v78, 0
    %96 = vmatpush.msra.mxu0 0.0
    %97 = vmatpush.msra.mxu0 0.0
    %98 = vmatpush.msra.mxu0 0.0
    %99 = vmatpush.msra.mxu0 0.0
    %100 = vmatpush.msra.mxu0 0.0
    %101 = vmatpush.msra.mxu0 0.0
    %102 = vmatpush.msra.mxu0 0.0
    %103 = vmatpush.msra.mxu0 0.0
    %104 = vmatpush.msra.mxu0 0.0
    %105 = vmatpush.msra.mxu0 %v94
    %106 = vmatpush.msra.mxu0 %v77
    %107 = vmatpush.msra.mxu0 %v76
    %108 = vmatpush.msra.mxu0 %v75
    %109 = vmatpush.msra.mxu0 %v74
    %110 = vmatpush.msra.mxu0 %v73
    %111 = vmatpush.msra.mxu0 %v72
    %112 = vmatmul.f32.gmra.mxu0 %v81
    %v113 = vpop.f32.mrf.mxu0
    %v114 = vadd.f32 0.0, %v113
    %115 = vmatmul.f32.gmra.mxu0 %v84
    %v116 = vpop.f32.mrf.mxu0
    %v117 = vadd.f32 0.0, %v116
    %118 = vmatmul.f32.gmra.mxu0 %v87
    %v119 = vpop.f32.mrf.mxu0
    %v120 = vadd.f32 0.0, %v119
    %121 = vmatmul.f32.gmra.mxu0 %v90
    %v122 = vpop.f32.mrf.mxu0
    %v123 = vadd.f32 0.0, %v122
    %124 = vdwg.mxu0
    %v125 = vld [vmem:[%s5] sm:$0x3]
    %v126 = vld [vmem:[%s6] sm:$0x3]
    %v127 = vld [vmem:[%s2] sm:$0xff]
    %v128 = vld [vmem:[%s2 + $0x8] sm:$0xff]
    %s129 = scalar_lea.vmem %s2, 16
    %v130 = vld [vmem:[%s129] sm:$0xff]
    %v131 = vld [vmem:[%s129 + $0x8] sm:$0xff]
    %v132 = vld [vmem:[%s3] sm:$0xff]
    %v133 = vld [vmem:[%s3 + $0x8] sm:$0xff]
    %v134 = vld [vmem:[%s3 + $0x10] sm:$0xff]
    %v135 = vld [vmem:[%s3 + $0x18] sm:$0xff]
    %s136 = scalar_lea.vmem %s3, 32
    %v137 = vld [vmem:[%s136] sm:$0xff]
    %v138 = vld [vmem:[%s136 + $0x8] sm:$0xff]
    %v139 = vld [vmem:[%s136 + $0x10] sm:$0xff]
    %v140 = vld [vmem:[%s136 + $0x18] sm:$0xff]
    %v141 = vld [vmem:[%s4] sm:$0x1]
    %s142 = scalar_lea.vmem %s4, 1
    %v143 = vld [vmem:[%s142] sm:$0x1]
    %v145 = vperm.slane %v141, 0
    %vm147 = vcmask 130048
    %v149 = vsel %vm147, %v114, 0
    %v152 = vsel %vm147, %v117, 0
    %154 = vmatpush.msra.mxu0 0.0
    %155 = vmatpush.msra.mxu0 0.0
    %156 = vmatpush.msra.mxu0 0.0
    %157 = vmatpush.msra.mxu0 0.0
    %158 = vmatpush.msra.mxu0 0.0
    %159 = vmatpush.msra.mxu0 0.0
    %160 = vmatpush.msra.mxu0 0.0
    %161 = vmatpush.msra.mxu0 0.0
    %162 = vmatpush.msra.mxu0 0.0
    %163 = vmatpush.msra.mxu0 0.0
    %164 = vmatpush.msra.mxu0 0.0
    %165 = vmatpush.msra.mxu0 0.0
    %166 = vmatpush.msra.mxu0 0.0
    %167 = vmatpush.msra.mxu0 0.0
    %168 = vmatpush.msra.mxu0 %v128
    %169 = vmatpush.msra.mxu0 %v127
    %170 = vmatmul.f32.gmra.mxu0 %v149
    %v171 = vpop.f32.mrf.mxu0
    %v172 = vadd.f32 %v145, %v171
    %173 = vmatmul.f32.gmra.mxu0 %v152
    %v174 = vpop.f32.mrf.mxu0
    %v175 = vadd.f32 %v145, %v174
    %176 = vdwg.mxu0
    %v178 = vperm.slane %v143, 0
    %v181 = vsel %vm147, %v120, 0
    %v184 = vsel %vm147, %v123, 0
    %186 = vmatpush.msra.mxu0 0.0
    %187 = vmatpush.msra.mxu0 0.0
    %188 = vmatpush.msra.mxu0 0.0
    %189 = vmatpush.msra.mxu0 0.0
    %190 = vmatpush.msra.mxu0 0.0
    %191 = vmatpush.msra.mxu0 0.0
    %192 = vmatpush.msra.mxu0 0.0
    %193 = vmatpush.msra.mxu0 0.0
    %194 = vmatpush.msra.mxu0 0.0
    %195 = vmatpush.msra.mxu0 0.0
    %196 = vmatpush.msra.mxu0 0.0
    %197 = vmatpush.msra.mxu0 0.0
    %198 = vmatpush.msra.mxu0 0.0
    %199 = vmatpush.msra.mxu0 0.0
    %200 = vmatpush.msra.mxu0 %v131
    %201 = vmatpush.msra.mxu0 %v130
    %202 = vmatmul.f32.gmra.mxu0 %v181
    %v203 = vpop.f32.mrf.mxu0
    %v204 = vadd.f32 %v178, %v203
    %205 = vmatmul.f32.gmra.mxu0 %v184
    %v206 = vpop.f32.mrf.mxu0
    %v207 = vadd.f32 %v178, %v206
    %208 = vdwg.mxu0
    %v210 = vrot.slane %v204, 6
    %v212 = vsel %vm92, %v172, %v210
    %v214 = vrot.slane %v172, 2
    %v216 = vsel %vm92, %v214, %v204
    %v217 = vrot.slane %v172, 4
    %v219 = vrot.slane %v204, 2
    %v221 = vsel %vm92, %v217, %v219
    %v222 = vrot.slane %v172, 6
    %v224 = vrot.slane %v204, 4
    %v226 = vsel %vm92, %v222, %v224
    %v228 = vrot.slane %v207, 6
    %v230 = vsel %vm92, %v175, %v228
    %v232 = vrot.slane %v175, 2
    %v234 = vsel %vm92, %v232, %v207
    %v235 = vrot.slane %v175, 4
    %v237 = vrot.slane %v207, 2
    %v239 = vsel %vm92, %v235, %v237
    %v240 = vrot.slane %v175, 6
    %v242 = vrot.slane %v207, 4
    %v244 = vsel %vm92, %v240, %v242
    %v245 = vperm.slane %v125, 0
    %v246 = vperm.slane %v125, 1
    %v247 = vsel %vm92, %v245, %v246
    %v248 = vperm.slane %v126, 0
    %v249 = vperm.slane %v126, 1
    %v250 = vsel %vm92, %v248, %v249
    %v251 = vlaneseq
    %v252 = vshrl.u32 %v251, 7
    %vm253 = vcmp.lt.s32.totalorder %v252, 2
    %vm254 = vcmask 261120
    %v256 = vsel %vm254, %v247, 0
    %258 = vmatpush.msra.mxu0 0.0
    %259 = vmatpush.msra.mxu0 0.0
    %260 = vmatpush.msra.mxu0 0.0
    %261 = vmatpush.msra.mxu0 0.0
    %262 = vmatpush.msra.mxu0 0.0
    %263 = vmatpush.msra.mxu0 0.0
    %264 = vmatpush.msra.mxu0 0.0
    %265 = vmatpush.msra.mxu0 0.0
    %266 = vmatpush.msra.mxu0 0.0
    %267 = vmatpush.msra.mxu0 0.0
    %268 = vmatpush.msra.mxu0 0.0
    %269 = vmatpush.msra.mxu0 0.0
    %270 = vmatpush.msra.mxu0 %v135
    %271 = vmatpush.msra.mxu0 %v134
    %272 = vmatpush.msra.mxu0 %v133
    %273 = vmatpush.msra.mxu0 %v132
    %274 = vmatmul.f32.gmra.mxu0 %v256
    %v275 = vpop.f32.mrf.mxu0
    %v276 = vadd.f32 0.0, %v275
    %277 = vdwg.mxu0
    %278 = vmatpush.msra.mxu0 0.0
    %279 = vmatpush.msra.mxu0 0.0
    %280 = vmatpush.msra.mxu0 0.0
    %281 = vmatpush.msra.mxu0 0.0
    %282 = vmatpush.msra.mxu0 0.0
    %283 = vmatpush.msra.mxu0 0.0
    %284 = vmatpush.msra.mxu0 0.0
    %285 = vmatpush.msra.mxu0 0.0
    %286 = vmatpush.msra.mxu0 0.0
    %287 = vmatpush.msra.mxu0 0.0
    %288 = vmatpush.msra.mxu0 0.0
    %289 = vmatpush.msra.mxu0 0.0
    %290 = vmatpush.msra.mxu0 %v140
    %291 = vmatpush.msra.mxu0 %v139
    %292 = vmatpush.msra.mxu0 %v138
    %293 = vmatpush.msra.mxu0 %v137
    %294 = vmatmul.f32.gmra.mxu0 %v256
    %v295 = vpop.f32.mrf.mxu0
    %v296 = vadd.f32 0.0, %v295
    %297 = vdwg.mxu0
    %v298 = vsel %vm253, %v276, %v296
    %v299 = vadd.f32 %v212, %v298
    %v300 = vxor.u32 %v299, 2147483648
    %v301 = vmul.f32 %v300, 1.442695
    %v302 = vpow.pop %v301
    %v303 = vadd.f32 %v302, 1.0
    %v304 = vrcp.pop %v303
    %v305 = vmul.f32 %v303, %v304
    %v306 = vsub.f32 1.0, %v305
    %v307 = vmul.f32 %v304, %v306
    %v308 = vadd.f32 %v304, %v307
    %vm309 = vweird.f32 %v303
    %vm310 = vweird.f32 %v304
    %vm311 = vmor %vm309, %vm310
    %v312 = vsel %vm311, %v304, %v308
    %v313 = vand.u32 2147483647, %v303
    %vm314 = vcmp.eq.f32.partialorder %v313, 8.507059e+37
    %v315 = vand.u32 %v303, 2147483648
    %v316 = vor.u32 1.1754944e-38, %v315
    %v317 = vsel %vm314, %v316, %v312
    %v318 = vmul.f32 1.0, %v317
    %v319 = vtanh.pop %v299
    %321 = vrot.lane.b32.xlu0 %v250, 32
    %v322 = vpop.permute.xlu0 %321
    %v324 = vmul.f32 %v318, %v322
    %326 = vrot.lane.b32.xlu0 %v319, 32
    %v327 = vpop.permute.xlu0 %326
    %v329 = vmul.f32 %v318, %v327
    %331 = vrot.lane.b32.xlu0 %v329, 32
    %v332 = vpop.permute.xlu0 %331
    %v334 = vadd.f32 %v324, %v332
    %v335 = vtanh.pop %v334
    %337 = vrot.lane.b32.xlu0 %v335, 32
    %v338 = vpop.permute.xlu0 %337
    %v340 = vmul.f32 %v318, %v338
    %342 = vrot.lane.b32.xlu0 %v340, 64
    %v343 = vpop.permute.xlu0 %342
    %v344 = vsel %vm254, %v343, 0
    %346 = vmatpush.msra.mxu0 0.0
    %347 = vmatpush.msra.mxu0 0.0
    %348 = vmatpush.msra.mxu0 0.0
    %349 = vmatpush.msra.mxu0 0.0
    %350 = vmatpush.msra.mxu0 0.0
    %351 = vmatpush.msra.mxu0 0.0
    %352 = vmatpush.msra.mxu0 0.0
    %353 = vmatpush.msra.mxu0 0.0
    %354 = vmatpush.msra.mxu0 0.0
    %355 = vmatpush.msra.mxu0 0.0
    %356 = vmatpush.msra.mxu0 0.0
    %357 = vmatpush.msra.mxu0 0.0
    %358 = vmatpush.msra.mxu0 %v135
    %359 = vmatpush.msra.mxu0 %v134
    %360 = vmatpush.msra.mxu0 %v133
    %361 = vmatpush.msra.mxu0 %v132
    %362 = vmatmul.f32.gmra.mxu0 %v344
    %v363 = vpop.f32.mrf.mxu0
    %v364 = vadd.f32 0.0, %v363
    %365 = vdwg.mxu0
    %366 = vmatpush.msra.mxu0 0.0
    %367 = vmatpush.msra.mxu0 0.0
    %368 = vmatpush.msra.mxu0 0.0
    %369 = vmatpush.msra.mxu0 0.0
    %370 = vmatpush.msra.mxu0 0.0
    %371 = vmatpush.msra.mxu0 0.0
    %372 = vmatpush.msra.mxu0 0.0
    %373 = vmatpush.msra.mxu0 0.0
    %374 = vmatpush.msra.mxu0 0.0
    %375 = vmatpush.msra.mxu0 0.0
    %376 = vmatpush.msra.mxu0 0.0
    %377 = vmatpush.msra.mxu0 0.0
    %378 = vmatpush.msra.mxu0 %v140
    %379 = vmatpush.msra.mxu0 %v139
    %380 = vmatpush.msra.mxu0 %v138
    %381 = vmatpush.msra.mxu0 %v137
    %382 = vmatmul.f32.gmra.mxu0 %v344
    %v383 = vpop.f32.mrf.mxu0
    %v384 = vadd.f32 0.0, %v383
    %385 = vdwg.mxu0
    %v386 = vsel %vm253, %v364, %v384
    %v387 = vadd.f32 %v216, %v386
    %v388 = vxor.u32 %v387, 2147483648
    %v389 = vmul.f32 %v388, 1.442695
    %v390 = vpow.pop %v389
    %v391 = vadd.f32 %v390, 1.0
    %v392 = vrcp.pop %v391
    %v393 = vmul.f32 %v391, %v392
    %v394 = vsub.f32 1.0, %v393
    %v395 = vmul.f32 %v392, %v394
    %v396 = vadd.f32 %v392, %v395
    %vm397 = vweird.f32 %v391
    %vm398 = vweird.f32 %v392
    %vm399 = vmor %vm397, %vm398
    %v400 = vsel %vm399, %v392, %v396
    %v401 = vand.u32 2147483647, %v391
    %vm402 = vcmp.eq.f32.partialorder %v401, 8.507059e+37
    %v403 = vand.u32 %v391, 2147483648
    %v404 = vor.u32 1.1754944e-38, %v403
    %v405 = vsel %vm402, %v404, %v400
    %v406 = vmul.f32 1.0, %v405
    %v407 = vtanh.pop %v387
    %v408 = vmul.f32 %v406, %v334
    %410 = vrot.lane.b32.xlu0 %v407, 32
    %v411 = vpop.permute.xlu0 %410
    %v413 = vmul.f32 %v406, %v411
    %415 = vrot.lane.b32.xlu0 %v413, 32
    %v416 = vpop.permute.xlu0 %415
    %v418 = vadd.f32 %v408, %v416
    %v419 = vtanh.pop %v418
    %421 = vrot.lane.b32.xlu0 %v419, 32
    %v422 = vpop.permute.xlu0 %421
    %v424 = vmul.f32 %v406, %v422
    %426 = vrot.lane.b32.xlu0 %v424, 64
    %v427 = vpop.permute.xlu0 %426
    %v428 = vsel %vm254, %v427, 0
    %430 = vmatpush.msra.mxu0 0.0
    %431 = vmatpush.msra.mxu0 0.0
    %432 = vmatpush.msra.mxu0 0.0
    %433 = vmatpush.msra.mxu0 0.0
    %434 = vmatpush.msra.mxu0 0.0
    %435 = vmatpush.msra.mxu0 0.0
    %436 = vmatpush.msra.mxu0 0.0
    %437 = vmatpush.msra.mxu0 0.0
    %438 = vmatpush.msra.mxu0 0.0
    %439 = vmatpush.msra.mxu0 0.0
    %440 = vmatpush.msra.mxu0 0.0
    %441 = vmatpush.msra.mxu0 0.0
    %442 = vmatpush.msra.mxu0 %v135
    %443 = vmatpush.msra.mxu0 %v134
    %444 = vmatpush.msra.mxu0 %v133
    %445 = vmatpush.msra.mxu0 %v132
    %446 = vmatmul.f32.gmra.mxu0 %v428
    %v447 = vpop.f32.mrf.mxu0
    %v448 = vadd.f32 0.0, %v447
    %449 = vdwg.mxu0
    %450 = vmatpush.msra.mxu0 0.0
    %451 = vmatpush.msra.mxu0 0.0
    %452 = vmatpush.msra.mxu0 0.0
    %453 = vmatpush.msra.mxu0 0.0
    %454 = vmatpush.msra.mxu0 0.0
    %455 = vmatpush.msra.mxu0 0.0
    %456 = vmatpush.msra.mxu0 0.0
    %457 = vmatpush.msra.mxu0 0.0
    %458 = vmatpush.msra.mxu0 0.0
    %459 = vmatpush.msra.mxu0 0.0
    %460 = vmatpush.msra.mxu0 0.0
    %461 = vmatpush.msra.mxu0 0.0
    %462 = vmatpush.msra.mxu0 %v140
    %463 = vmatpush.msra.mxu0 %v139
    %464 = vmatpush.msra.mxu0 %v138
    %465 = vmatpush.msra.mxu0 %v137
    %466 = vmatmul.f32.gmra.mxu0 %v428
    %v467 = vpop.f32.mrf.mxu0
    %v468 = vadd.f32 0.0, %v467
    %469 = vdwg.mxu0
    %v470 = vsel %vm253, %v448, %v468
    %v471 = vadd.f32 %v221, %v470
    %v472 = vxor.u32 %v471, 2147483648
    %v473 = vmul.f32 %v472, 1.442695
    %v474 = vpow.pop %v473
    %v475 = vadd.f32 %v474, 1.0
    %v476 = vrcp.pop %v475
    %v477 = vmul.f32 %v475, %v476
    %v478 = vsub.f32 1.0, %v477
    %v479 = vmul.f32 %v476, %v478
    %v480 = vadd.f32 %v476, %v479
    %vm481 = vweird.f32 %v475
    %vm482 = vweird.f32 %v476
    %vm483 = vmor %vm481, %vm482
    %v484 = vsel %vm483, %v476, %v480
    %v485 = vand.u32 2147483647, %v475
    %vm486 = vcmp.eq.f32.partialorder %v485, 8.507059e+37
    %v487 = vand.u32 %v475, 2147483648
    %v488 = vor.u32 1.1754944e-38, %v487
    %v489 = vsel %vm486, %v488, %v484
    %v490 = vmul.f32 1.0, %v489
    %v491 = vtanh.pop %v471
    %v492 = vmul.f32 %v490, %v418
    %494 = vrot.lane.b32.xlu0 %v491, 32
    %v495 = vpop.permute.xlu0 %494
    %v497 = vmul.f32 %v490, %v495
    %499 = vrot.lane.b32.xlu0 %v497, 32
    %v500 = vpop.permute.xlu0 %499
    %v502 = vadd.f32 %v492, %v500
    %v503 = vtanh.pop %v502
    %505 = vrot.lane.b32.xlu0 %v503, 32
    %v506 = vpop.permute.xlu0 %505
    %v508 = vmul.f32 %v490, %v506
    %510 = vrot.lane.b32.xlu0 %v508, 64
    %v511 = vpop.permute.xlu0 %510
    %v512 = vsel %vm254, %v511, 0
    %514 = vmatpush.msra.mxu0 0.0
    %515 = vmatpush.msra.mxu0 0.0
    %516 = vmatpush.msra.mxu0 0.0
    %517 = vmatpush.msra.mxu0 0.0
    %518 = vmatpush.msra.mxu0 0.0
    %519 = vmatpush.msra.mxu0 0.0
    %520 = vmatpush.msra.mxu0 0.0
    %521 = vmatpush.msra.mxu0 0.0
    %522 = vmatpush.msra.mxu0 0.0
    %523 = vmatpush.msra.mxu0 0.0
    %524 = vmatpush.msra.mxu0 0.0
    %525 = vmatpush.msra.mxu0 0.0
    %526 = vmatpush.msra.mxu0 %v135
    %527 = vmatpush.msra.mxu0 %v134
    %528 = vmatpush.msra.mxu0 %v133
    %529 = vmatpush.msra.mxu0 %v132
    %530 = vmatmul.f32.gmra.mxu0 %v512
    %v531 = vpop.f32.mrf.mxu0
    %v532 = vadd.f32 0.0, %v531
    %533 = vdwg.mxu0
    %534 = vmatpush.msra.mxu0 0.0
    %535 = vmatpush.msra.mxu0 0.0
    %536 = vmatpush.msra.mxu0 0.0
    %537 = vmatpush.msra.mxu0 0.0
    %538 = vmatpush.msra.mxu0 0.0
    %539 = vmatpush.msra.mxu0 0.0
    %540 = vmatpush.msra.mxu0 0.0
    %541 = vmatpush.msra.mxu0 0.0
    %542 = vmatpush.msra.mxu0 0.0
    %543 = vmatpush.msra.mxu0 0.0
    %544 = vmatpush.msra.mxu0 0.0
    %545 = vmatpush.msra.mxu0 0.0
    %546 = vmatpush.msra.mxu0 %v140
    %547 = vmatpush.msra.mxu0 %v139
    %548 = vmatpush.msra.mxu0 %v138
    %549 = vmatpush.msra.mxu0 %v137
    %550 = vmatmul.f32.gmra.mxu0 %v512
    %v551 = vpop.f32.mrf.mxu0
    %v552 = vadd.f32 0.0, %v551
    %553 = vdwg.mxu0
    %v554 = vsel %vm253, %v532, %v552
    %v555 = vadd.f32 %v226, %v554
    %v556 = vxor.u32 %v555, 2147483648
    %v557 = vmul.f32 %v556, 1.442695
    %v558 = vpow.pop %v557
    %v559 = vadd.f32 %v558, 1.0
    %v560 = vrcp.pop %v559
    %v561 = vmul.f32 %v559, %v560
    %v562 = vsub.f32 1.0, %v561
    %v563 = vmul.f32 %v560, %v562
    %v564 = vadd.f32 %v560, %v563
    %vm565 = vweird.f32 %v559
    %vm566 = vweird.f32 %v560
    %vm567 = vmor %vm565, %vm566
    %v568 = vsel %vm567, %v560, %v564
    %v569 = vand.u32 2147483647, %v559
    %vm570 = vcmp.eq.f32.partialorder %v569, 8.507059e+37
    %v571 = vand.u32 %v559, 2147483648
    %v572 = vor.u32 1.1754944e-38, %v571
    %v573 = vsel %vm570, %v572, %v568
    %v574 = vmul.f32 1.0, %v573
    %v575 = vtanh.pop %v555
    %v576 = vmul.f32 %v574, %v502
    %578 = vrot.lane.b32.xlu0 %v575, 32
    %v579 = vpop.permute.xlu0 %578
    %v581 = vmul.f32 %v574, %v579
    %583 = vrot.lane.b32.xlu0 %v581, 32
    %v584 = vpop.permute.xlu0 %583
    %v586 = vadd.f32 %v576, %v584
    %v587 = vtanh.pop %v586
    %589 = vrot.lane.b32.xlu0 %v587, 32
    %v590 = vpop.permute.xlu0 %589
    %v592 = vmul.f32 %v574, %v590
    %594 = vrot.lane.b32.xlu0 %v592, 64
    %v595 = vpop.permute.xlu0 %594
    %v596 = vsel %vm254, %v595, 0
    %598 = vmatpush.msra.mxu0 0.0
    %599 = vmatpush.msra.mxu0 0.0
    %600 = vmatpush.msra.mxu0 0.0
    %601 = vmatpush.msra.mxu0 0.0
    %602 = vmatpush.msra.mxu0 0.0
    %603 = vmatpush.msra.mxu0 0.0
    %604 = vmatpush.msra.mxu0 0.0
    %605 = vmatpush.msra.mxu0 0.0
    %606 = vmatpush.msra.mxu0 0.0
    %607 = vmatpush.msra.mxu0 0.0
    %608 = vmatpush.msra.mxu0 0.0
    %609 = vmatpush.msra.mxu0 0.0
    %610 = vmatpush.msra.mxu0 %v135
    %611 = vmatpush.msra.mxu0 %v134
    %612 = vmatpush.msra.mxu0 %v133
    %613 = vmatpush.msra.mxu0 %v132
    %614 = vmatmul.f32.gmra.mxu0 %v596
    %v615 = vpop.f32.mrf.mxu0
    %v616 = vadd.f32 0.0, %v615
    %617 = vdwg.mxu0
    %618 = vmatpush.msra.mxu0 0.0
    %619 = vmatpush.msra.mxu0 0.0
    %620 = vmatpush.msra.mxu0 0.0
    %621 = vmatpush.msra.mxu0 0.0
    %622 = vmatpush.msra.mxu0 0.0
    %623 = vmatpush.msra.mxu0 0.0
    %624 = vmatpush.msra.mxu0 0.0
    %625 = vmatpush.msra.mxu0 0.0
    %626 = vmatpush.msra.mxu0 0.0
    %627 = vmatpush.msra.mxu0 0.0
    %628 = vmatpush.msra.mxu0 0.0
    %629 = vmatpush.msra.mxu0 0.0
    %630 = vmatpush.msra.mxu0 %v140
    %631 = vmatpush.msra.mxu0 %v139
    %632 = vmatpush.msra.mxu0 %v138
    %633 = vmatpush.msra.mxu0 %v137
    %634 = vmatmul.f32.gmra.mxu0 %v596
    %v635 = vpop.f32.mrf.mxu0
    %v636 = vadd.f32 0.0, %v635
    %637 = vdwg.mxu0
    %v638 = vsel %vm253, %v616, %v636
    %v639 = vadd.f32 %v230, %v638
    %v640 = vxor.u32 %v639, 2147483648
    %v641 = vmul.f32 %v640, 1.442695
    %v642 = vpow.pop %v641
    %v643 = vadd.f32 %v642, 1.0
    %v644 = vrcp.pop %v643
    %v645 = vmul.f32 %v643, %v644
    %v646 = vsub.f32 1.0, %v645
    %v647 = vmul.f32 %v644, %v646
    %v648 = vadd.f32 %v644, %v647
    %vm649 = vweird.f32 %v643
    %vm650 = vweird.f32 %v644
    %vm651 = vmor %vm649, %vm650
    %v652 = vsel %vm651, %v644, %v648
    %v653 = vand.u32 2147483647, %v643
    %vm654 = vcmp.eq.f32.partialorder %v653, 8.507059e+37
    %v655 = vand.u32 %v643, 2147483648
    %v656 = vor.u32 1.1754944e-38, %v655
    %v657 = vsel %vm654, %v656, %v652
    %v658 = vmul.f32 1.0, %v657
    %v659 = vtanh.pop %v639
    %v660 = vmul.f32 %v658, %v586
    %662 = vrot.lane.b32.xlu0 %v659, 32
    %v663 = vpop.permute.xlu0 %662
    %v665 = vmul.f32 %v658, %v663
    %667 = vrot.lane.b32.xlu0 %v665, 32
    %v668 = vpop.permute.xlu0 %667
    %v670 = vadd.f32 %v660, %v668
    %v671 = vtanh.pop %v670
    %673 = vrot.lane.b32.xlu0 %v671, 32
    %v674 = vpop.permute.xlu0 %673
    %v676 = vmul.f32 %v658, %v674
    %678 = vrot.lane.b32.xlu0 %v676, 64
    %v679 = vpop.permute.xlu0 %678
    %v680 = vsel %vm254, %v679, 0
    %682 = vmatpush.msra.mxu0 0.0
    %683 = vmatpush.msra.mxu0 0.0
    %684 = vmatpush.msra.mxu0 0.0
    %685 = vmatpush.msra.mxu0 0.0
    %686 = vmatpush.msra.mxu0 0.0
    %687 = vmatpush.msra.mxu0 0.0
    %688 = vmatpush.msra.mxu0 0.0
    %689 = vmatpush.msra.mxu0 0.0
    %690 = vmatpush.msra.mxu0 0.0
    %691 = vmatpush.msra.mxu0 0.0
    %692 = vmatpush.msra.mxu0 0.0
    %693 = vmatpush.msra.mxu0 0.0
    %694 = vmatpush.msra.mxu0 %v135
    %695 = vmatpush.msra.mxu0 %v134
    %696 = vmatpush.msra.mxu0 %v133
    %697 = vmatpush.msra.mxu0 %v132
    %698 = vmatmul.f32.gmra.mxu0 %v680
    %v699 = vpop.f32.mrf.mxu0
    %v700 = vadd.f32 0.0, %v699
    %701 = vdwg.mxu0
    %702 = vmatpush.msra.mxu0 0.0
    %703 = vmatpush.msra.mxu0 0.0
    %704 = vmatpush.msra.mxu0 0.0
    %705 = vmatpush.msra.mxu0 0.0
    %706 = vmatpush.msra.mxu0 0.0
    %707 = vmatpush.msra.mxu0 0.0
    %708 = vmatpush.msra.mxu0 0.0
    %709 = vmatpush.msra.mxu0 0.0
    %710 = vmatpush.msra.mxu0 0.0
    %711 = vmatpush.msra.mxu0 0.0
    %712 = vmatpush.msra.mxu0 0.0
    %713 = vmatpush.msra.mxu0 0.0
    %714 = vmatpush.msra.mxu0 %v140
    %715 = vmatpush.msra.mxu0 %v139
    %716 = vmatpush.msra.mxu0 %v138
    %717 = vmatpush.msra.mxu0 %v137
    %718 = vmatmul.f32.gmra.mxu0 %v680
    %v719 = vpop.f32.mrf.mxu0
    %v720 = vadd.f32 0.0, %v719
    %721 = vdwg.mxu0
    %v722 = vsel %vm253, %v700, %v720
    %v723 = vadd.f32 %v234, %v722
    %v724 = vxor.u32 %v723, 2147483648
    %v725 = vmul.f32 %v724, 1.442695
    %v726 = vpow.pop %v725
    %v727 = vadd.f32 %v726, 1.0
    %v728 = vrcp.pop %v727
    %v729 = vmul.f32 %v727, %v728
    %v730 = vsub.f32 1.0, %v729
    %v731 = vmul.f32 %v728, %v730
    %v732 = vadd.f32 %v728, %v731
    %vm733 = vweird.f32 %v727
    %vm734 = vweird.f32 %v728
    %vm735 = vmor %vm733, %vm734
    %v736 = vsel %vm735, %v728, %v732
    %v737 = vand.u32 2147483647, %v727
    %vm738 = vcmp.eq.f32.partialorder %v737, 8.507059e+37
    %v739 = vand.u32 %v727, 2147483648
    %v740 = vor.u32 1.1754944e-38, %v739
    %v741 = vsel %vm738, %v740, %v736
    %v742 = vmul.f32 1.0, %v741
    %v743 = vtanh.pop %v723
    %v744 = vmul.f32 %v742, %v670
    %746 = vrot.lane.b32.xlu0 %v743, 32
    %v747 = vpop.permute.xlu0 %746
    %v749 = vmul.f32 %v742, %v747
    %751 = vrot.lane.b32.xlu0 %v749, 32
    %v752 = vpop.permute.xlu0 %751
    %v754 = vadd.f32 %v744, %v752
    %v755 = vtanh.pop %v754
    %757 = vrot.lane.b32.xlu0 %v755, 32
    %v758 = vpop.permute.xlu0 %757
    %v760 = vmul.f32 %v742, %v758
    %762 = vrot.lane.b32.xlu0 %v760, 64
    %v763 = vpop.permute.xlu0 %762
    %v764 = vsel %vm254, %v763, 0
    %766 = vmatpush.msra.mxu0 0.0
    %767 = vmatpush.msra.mxu0 0.0
    %768 = vmatpush.msra.mxu0 0.0
    %769 = vmatpush.msra.mxu0 0.0
    %770 = vmatpush.msra.mxu0 0.0
    %771 = vmatpush.msra.mxu0 0.0
    %772 = vmatpush.msra.mxu0 0.0
    %773 = vmatpush.msra.mxu0 0.0
    %774 = vmatpush.msra.mxu0 0.0
    %775 = vmatpush.msra.mxu0 0.0
    %776 = vmatpush.msra.mxu0 0.0
    %777 = vmatpush.msra.mxu0 0.0
    %778 = vmatpush.msra.mxu0 %v135
    %779 = vmatpush.msra.mxu0 %v134
    %780 = vmatpush.msra.mxu0 %v133
    %781 = vmatpush.msra.mxu0 %v132
    %782 = vmatmul.f32.gmra.mxu0 %v764
    %v783 = vpop.f32.mrf.mxu0
    %v784 = vadd.f32 0.0, %v783
    %785 = vdwg.mxu0
    %786 = vmatpush.msra.mxu0 0.0
    %787 = vmatpush.msra.mxu0 0.0
    %788 = vmatpush.msra.mxu0 0.0
    %789 = vmatpush.msra.mxu0 0.0
    %790 = vmatpush.msra.mxu0 0.0
    %791 = vmatpush.msra.mxu0 0.0
    %792 = vmatpush.msra.mxu0 0.0
    %793 = vmatpush.msra.mxu0 0.0
    %794 = vmatpush.msra.mxu0 0.0
    %795 = vmatpush.msra.mxu0 0.0
    %796 = vmatpush.msra.mxu0 0.0
    %797 = vmatpush.msra.mxu0 0.0
    %798 = vmatpush.msra.mxu0 %v140
    %799 = vmatpush.msra.mxu0 %v139
    %800 = vmatpush.msra.mxu0 %v138
    %801 = vmatpush.msra.mxu0 %v137
    %802 = vmatmul.f32.gmra.mxu0 %v764
    %v803 = vpop.f32.mrf.mxu0
    %v804 = vadd.f32 0.0, %v803
    %805 = vdwg.mxu0
    %v806 = vsel %vm253, %v784, %v804
    %v807 = vadd.f32 %v239, %v806
    %v808 = vxor.u32 %v807, 2147483648
    %v809 = vmul.f32 %v808, 1.442695
    %v810 = vpow.pop %v809
    %v811 = vadd.f32 %v810, 1.0
    %v812 = vrcp.pop %v811
    %v813 = vmul.f32 %v811, %v812
    %v814 = vsub.f32 1.0, %v813
    %v815 = vmul.f32 %v812, %v814
    %v816 = vadd.f32 %v812, %v815
    %vm817 = vweird.f32 %v811
    %vm818 = vweird.f32 %v812
    %vm819 = vmor %vm817, %vm818
    %v820 = vsel %vm819, %v812, %v816
    %v821 = vand.u32 2147483647, %v811
    %vm822 = vcmp.eq.f32.partialorder %v821, 8.507059e+37
    %v823 = vand.u32 %v811, 2147483648
    %v824 = vor.u32 1.1754944e-38, %v823
    %v825 = vsel %vm822, %v824, %v820
    %v826 = vmul.f32 1.0, %v825
    %v827 = vtanh.pop %v807
    %v828 = vmul.f32 %v826, %v754
    %830 = vrot.lane.b32.xlu0 %v827, 32
    %v831 = vpop.permute.xlu0 %830
    %v833 = vmul.f32 %v826, %v831
    %835 = vrot.lane.b32.xlu0 %v833, 32
    %v836 = vpop.permute.xlu0 %835
    %v838 = vadd.f32 %v828, %v836
    %v839 = vtanh.pop %v838
    %841 = vrot.lane.b32.xlu0 %v839, 32
    %v842 = vpop.permute.xlu0 %841
    %v844 = vmul.f32 %v826, %v842
    %846 = vrot.lane.b32.xlu0 %v844, 64
    %v847 = vpop.permute.xlu0 %846
    %v848 = vsel %vm254, %v847, 0
    %850 = vmatpush.msra.mxu0 0.0
    %851 = vmatpush.msra.mxu0 0.0
    %852 = vmatpush.msra.mxu0 0.0
    %853 = vmatpush.msra.mxu0 0.0
    %854 = vmatpush.msra.mxu0 0.0
    %855 = vmatpush.msra.mxu0 0.0
    %856 = vmatpush.msra.mxu0 0.0
    %857 = vmatpush.msra.mxu0 0.0
    %858 = vmatpush.msra.mxu0 0.0
    %859 = vmatpush.msra.mxu0 0.0
    %860 = vmatpush.msra.mxu0 0.0
    %861 = vmatpush.msra.mxu0 0.0
    %862 = vmatpush.msra.mxu0 %v135
    %863 = vmatpush.msra.mxu0 %v134
    %864 = vmatpush.msra.mxu0 %v133
    %865 = vmatpush.msra.mxu0 %v132
    %866 = vmatmul.f32.gmra.mxu0 %v848
    %v867 = vpop.f32.mrf.mxu0
    %v868 = vadd.f32 0.0, %v867
    %869 = vdwg.mxu0
    %870 = vmatpush.msra.mxu0 0.0
    %871 = vmatpush.msra.mxu0 0.0
    %872 = vmatpush.msra.mxu0 0.0
    %873 = vmatpush.msra.mxu0 0.0
    %874 = vmatpush.msra.mxu0 0.0
    %875 = vmatpush.msra.mxu0 0.0
    %876 = vmatpush.msra.mxu0 0.0
    %877 = vmatpush.msra.mxu0 0.0
    %878 = vmatpush.msra.mxu0 0.0
    %879 = vmatpush.msra.mxu0 0.0
    %880 = vmatpush.msra.mxu0 0.0
    %881 = vmatpush.msra.mxu0 0.0
    %882 = vmatpush.msra.mxu0 %v140
    %883 = vmatpush.msra.mxu0 %v139
    %884 = vmatpush.msra.mxu0 %v138
    %885 = vmatpush.msra.mxu0 %v137
    %886 = vmatmul.f32.gmra.mxu0 %v848
    %v887 = vpop.f32.mrf.mxu0
    %v888 = vadd.f32 0.0, %v887
    %889 = vdwg.mxu0
    %v890 = vsel %vm253, %v868, %v888
    %v891 = vadd.f32 %v244, %v890
    %v892 = vxor.u32 %v891, 2147483648
    %v893 = vmul.f32 %v892, 1.442695
    %v894 = vpow.pop %v893
    %v895 = vadd.f32 %v894, 1.0
    %v896 = vrcp.pop %v895
    %v897 = vmul.f32 %v895, %v896
    %v898 = vsub.f32 1.0, %v897
    %v899 = vmul.f32 %v896, %v898
    %v900 = vadd.f32 %v896, %v899
    %vm901 = vweird.f32 %v895
    %vm902 = vweird.f32 %v896
    %vm903 = vmor %vm901, %vm902
    %v904 = vsel %vm903, %v896, %v900
    %v905 = vand.u32 2147483647, %v895
    %vm906 = vcmp.eq.f32.partialorder %v905, 8.507059e+37
    %v907 = vand.u32 %v895, 2147483648
    %v908 = vor.u32 1.1754944e-38, %v907
    %v909 = vsel %vm906, %v908, %v904
    %v910 = vmul.f32 1.0, %v909
    %v911 = vtanh.pop %v891
    %v912 = vmul.f32 %v910, %v838
    %914 = vrot.lane.b32.xlu0 %v911, 32
    %v915 = vpop.permute.xlu0 %914
    %v917 = vmul.f32 %v910, %v915
    %919 = vrot.lane.b32.xlu0 %v917, 32
    %v920 = vpop.permute.xlu0 %919
    %v922 = vadd.f32 %v912, %v920
    %v923 = vtanh.pop %v922
    %925 = vrot.lane.b32.xlu0 %v923, 32
    %v926 = vpop.permute.xlu0 %925
    %v928 = vmul.f32 %v910, %v926
    %v931 = vrot.slane %v928, 2
    %932 = vrot.lane.b32.xlu0 %v931, 96
    %v933 = vpop.permute.xlu0 %932
    %v935 = vsel %vm254, %v343, %v933
    %v937 = vrot.slane %v844, 2
    %938 = vrot.lane.b32.xlu0 %v937, 96
    %v939 = vpop.permute.xlu0 %938
    %v941 = vsel %vm254, %v427, %v939
    %v943 = vrot.slane %v760, 2
    %944 = vrot.lane.b32.xlu0 %v943, 96
    %v945 = vpop.permute.xlu0 %944
    %v947 = vsel %vm254, %v511, %v945
    %v949 = vrot.slane %v676, 2
    %950 = vrot.lane.b32.xlu0 %v949, 96
    %v951 = vpop.permute.xlu0 %950
    %v953 = vsel %vm254, %v595, %v951
    %v955 = vrot.slane %v592, 2
    %956 = vrot.lane.b32.xlu0 %v955, 96
    %v957 = vpop.permute.xlu0 %956
    %v959 = vsel %vm254, %v679, %v957
    %v961 = vrot.slane %v508, 2
    %962 = vrot.lane.b32.xlu0 %v961, 96
    %v963 = vpop.permute.xlu0 %962
    %v965 = vsel %vm254, %v763, %v963
    %v967 = vrot.slane %v424, 2
    %968 = vrot.lane.b32.xlu0 %v967, 96
    %v969 = vpop.permute.xlu0 %968
    %v971 = vsel %vm254, %v847, %v969
    %972 = vrot.lane.b32.xlu0 %v928, 64
    %v973 = vpop.permute.xlu0 %972
    %v975 = vrot.slane %v340, 2
    %976 = vrot.lane.b32.xlu0 %v975, 96
    %v977 = vpop.permute.xlu0 %976
    %v979 = vsel %vm254, %v973, %v977
    %v981 = vrot.slane %v941, 6
    %v984 = vrot.slane %v947, 4
    %v987 = vrot.slane %v953, 2
    %v990 = vrot.slane %v965, 6
    %v993 = vrot.slane %v971, 4
    %v996 = vrot.slane %v979, 2
    %v998 = vsel %vm92, %v935, %v981
    %vm999 = vcmask 1043456
    %v1000 = vsel %vm999, %v998, %v984
    %vm1001 = vcmask 1045504
    %v1002 = vsel %vm1001, %v1000, %v987
    %v1003 = vsel %vm92, %v959, %v990
    %v1004 = vsel %vm999, %v1003, %v993
    %v1005 = vsel %vm1001, %v1004, %v996
    %v1006 = vld [vmem:[%s7] sm:$0xff]
    %v1007 = vld [vmem:[%s7 + $0x8] sm:$0xff]
    %v1008 = vld [vmem:[%s7 + $0x10] sm:$0xff]
    %v1009 = vld [vmem:[%s7 + $0x18] sm:$0xff]
    %v1010 = vld [vmem:[%s7 + $0x20] sm:$0xff]
    %v1011 = vld [vmem:[%s7 + $0x28] sm:$0xff]
    %v1012 = vld [vmem:[%s7 + $0x30] sm:$0xff]
    %v1013 = vld [vmem:[%s7 + $0x38] sm:$0xff]
    %v1014 = vld [vmem:[%s8] sm:$0x1]
    %v1016 = vperm.slane %v1014, 0
    %vm1018 = vcmask 523264
    %v1020 = vsel %vm1018, %v1002, 0
    %v1023 = vsel %vm1018, %v1005, 0
    %1025 = vmatpush.msra.mxu0 0.0
    %1026 = vmatpush.msra.mxu0 0.0
    %1027 = vmatpush.msra.mxu0 0.0
    %1028 = vmatpush.msra.mxu0 0.0
    %1029 = vmatpush.msra.mxu0 0.0
    %1030 = vmatpush.msra.mxu0 0.0
    %1031 = vmatpush.msra.mxu0 0.0
    %1032 = vmatpush.msra.mxu0 0.0
    %1033 = vmatpush.msra.mxu0 %v1013
    %1034 = vmatpush.msra.mxu0 %v1012
    %1035 = vmatpush.msra.mxu0 %v1011
    %1036 = vmatpush.msra.mxu0 %v1010
    %1037 = vmatpush.msra.mxu0 %v1009
    %1038 = vmatpush.msra.mxu0 %v1008
    %1039 = vmatpush.msra.mxu0 %v1007
    %1040 = vmatpush.msra.mxu0 %v1006
    %1041 = vmatmul.f32.gmra.mxu0 %v1020
    %v1042 = vpop.f32.mrf.mxu0
    %v1043 = vadd.f32 %v1016, %v1042
    %1044 = vmatmul.f32.gmra.mxu0 %v1023
    %v1045 = vpop.f32.mrf.mxu0
    %v1046 = vadd.f32 %v1016, %v1045
    %1047 = vdwg.mxu0
    %v1048 = vld [vmem:[%s9] sm:$0x3f]
    %v1049 = vcvt.s32.f32 %v47
    %vm1050 = vcmp.eq.s32.totalorder %v47, 4
    %v1051 = vsel %vm1050, 0.0, -10000.0
    %v1053 = vrot.slane %v1051, 1
    %v1054 = vperm.slane %v1051, 0
    %v1055 = vperm.slane %v1053, 0
    %v1058 = vadd.f32 %v1054, %v1048
    %v1059 = vadd.f32 %v1055, %v1048
    %vm1060 = vcmask 46080
    %v1061 = vsel %vm1060, %v1058, -inf
    %1062 = vmax.xlane.f32.xlu0 %v1061
    %v1063 = vpop.xlane.xlu0 %1062
    %v1064 = vsel %vm1060, %v1059, -inf
    %1065 = vmax.xlane.f32.xlu0 %v1064
    %v1066 = vpop.xlane.xlu0 %1065
    %vm1067 = vcmp.eq.f32.partialorder %v1058, %v1063
    %vm1068 = vcmp.eq.f32.partialorder %v1059, %v1066
    %v1069 = vsel %vm1067, %v1049, 6.0
    %v1070 = vsel %vm1068, %v1049, 6.0
    %v1071 = vsel %vm1060, %v1069, inf
    %1072 = vmin.xlane.f32.xlu0 %v1071
    %v1073 = vpop.xlane.xlu0 %1072
    %v1074 = vsel %vm1060, %v1070, inf
    %1075 = vmin.xlane.f32.xlu0 %v1074
    %v1076 = vpop.xlane.xlu0 %1075
    %v1078 = vperm.slane %v1043, 0
    %v1079 = vlaneseq
    %v1080 = vshrl.u32 %v1079, 7
    %1082 = vset.pattern.permute.xlu0 %v1080
    %1083 = vperm.xlu0 %1082, %v1078
    %v1084 = vpop.permute.xlu0 %1083
    %v1085 = vperm.slane %v1043, 1
    %v1086 = vlaneseq
    %v1087 = vshrl.u32 %v1086, 7
    %1089 = vset.pattern.permute.xlu0 %v1087
    %1090 = vperm.xlu0 %1089, %v1085
    %v1091 = vpop.permute.xlu0 %1090
    %v1094 = vadd.f32 %v1063, %v1084
    %v1095 = vadd.f32 %v1066, %v1091
    %v1097 = vperm.slane %v1048, 0
    %v1098 = vlaneseq
    %v1099 = vshrl.u32 %v1098, 7
    %1101 = vset.pattern.permute.xlu0 %v1099
    %1102 = vperm.xlu0 %1101, %v1097
    %v1103 = vpop.permute.xlu0 %1102
    %v1104 = vperm.slane %v1048, 1
    %v1105 = vlaneseq
    %v1106 = vshrl.u32 %v1105, 7
    %1108 = vset.pattern.permute.xlu0 %v1106
    %1109 = vperm.xlu0 %1108, %v1104
    %v1110 = vpop.permute.xlu0 %1109
    %v1111 = vperm.slane %v1048, 2
    %v1112 = vlaneseq
    %v1113 = vshrl.u32 %v1112, 7
    %1115 = vset.pattern.permute.xlu0 %v1113
    %1116 = vperm.xlu0 %1115, %v1111
    %v1117 = vpop.permute.xlu0 %1116
    %v1118 = vperm.slane %v1048, 3
    %v1119 = vlaneseq
    %v1120 = vshrl.u32 %v1119, 7
    %1122 = vset.pattern.permute.xlu0 %v1120
    %1123 = vperm.xlu0 %1122, %v1118
    %v1124 = vpop.permute.xlu0 %1123
    %v1125 = vperm.slane %v1048, 4
    %v1126 = vlaneseq
    %v1127 = vshrl.u32 %v1126, 7
    %1129 = vset.pattern.permute.xlu0 %v1127
    %1130 = vperm.xlu0 %1129, %v1125
    %v1131 = vpop.permute.xlu0 %1130
    %v1132 = vperm.slane %v1048, 5
    %v1133 = vlaneseq
    %v1134 = vshrl.u32 %v1133, 7
    %1136 = vset.pattern.permute.xlu0 %v1134
    %1137 = vperm.xlu0 %1136, %v1132
    %v1138 = vpop.permute.xlu0 %1137
    %v1145 = vadd.f32 %v1094, %v1103
    %v1146 = vadd.f32 %v1094, %v1110
    %v1147 = vadd.f32 %v1094, %v1117
    %v1148 = vadd.f32 %v1094, %v1124
    %v1149 = vadd.f32 %v1094, %v1131
    %v1150 = vadd.f32 %v1094, %v1138
    %v1151 = vadd.f32 %v1095, %v1103
    %v1152 = vadd.f32 %v1095, %v1110
    %v1153 = vadd.f32 %v1095, %v1117
    %v1154 = vadd.f32 %v1095, %v1124
    %v1155 = vadd.f32 %v1095, %v1131
    %v1156 = vadd.f32 %v1095, %v1138
    %1169 = vset.pattern.permute.xlu0 0
    %1170 = vperm.xlu0 %1169, %v1145
    %v1171 = vpop.permute.xlu0 %1170
    %1172 = vset.pattern.permute.xlu0 0
    %1173 = vperm.xlu0 %1172, %v1146
    %v1174 = vpop.permute.xlu0 %1173
    %1175 = vset.pattern.permute.xlu0 0
    %1176 = vperm.xlu0 %1175, %v1147
    %v1177 = vpop.permute.xlu0 %1176
    %1178 = vset.pattern.permute.xlu0 0
    %1179 = vperm.xlu0 %1178, %v1148
    %v1180 = vpop.permute.xlu0 %1179
    %1181 = vset.pattern.permute.xlu0 0
    %1182 = vperm.xlu0 %1181, %v1149
    %v1183 = vpop.permute.xlu0 %1182
    %1184 = vset.pattern.permute.xlu0 0
    %1185 = vperm.xlu0 %1184, %v1150
    %v1186 = vpop.permute.xlu0 %1185
    %1187 = vset.pattern.permute.xlu0 0
    %1188 = vperm.xlu0 %1187, %v1151
    %v1189 = vpop.permute.xlu0 %1188
    %1190 = vset.pattern.permute.xlu0 0
    %1191 = vperm.xlu0 %1190, %v1152
    %v1192 = vpop.permute.xlu0 %1191
    %1193 = vset.pattern.permute.xlu0 0
    %1194 = vperm.xlu0 %1193, %v1153
    %v1195 = vpop.permute.xlu0 %1194
    %1196 = vset.pattern.permute.xlu0 0
    %1197 = vperm.xlu0 %1196, %v1154
    %v1198 = vpop.permute.xlu0 %1197
    %1199 = vset.pattern.permute.xlu0 0
    %1200 = vperm.xlu0 %1199, %v1155
    %v1201 = vpop.permute.xlu0 %1200
    %1202 = vset.pattern.permute.xlu0 0
    %1203 = vperm.xlu0 %1202, %v1156
    %v1204 = vpop.permute.xlu0 %1203
    %v1205 = vperm.slane %v1171, %v47
    %v1206 = vperm.slane %v1174, %v47
    %v1207 = vperm.slane %v1177, %v47
    %v1208 = vperm.slane %v1180, %v47
    %v1209 = vperm.slane %v1183, %v47
    %v1210 = vperm.slane %v1186, %v47
    %v1211 = vperm.slane %v1189, %v47
    %v1212 = vperm.slane %v1192, %v47
    %v1213 = vperm.slane %v1195, %v47
    %v1214 = vperm.slane %v1198, %v47
    %v1215 = vperm.slane %v1201, %v47
    %v1216 = vperm.slane %v1204, %v47
    %vm1217 = vcmask 1041409
    %v1218 = vsel %vm1217, %v1206, %v1205
    %vm1219 = vcmask 1042434
    %v1220 = vsel %vm1219, %v1207, %v1218
    %vm1221 = vcmask 1043459
    %v1222 = vsel %vm1221, %v1208, %v1220
    %vm1223 = vcmask 1044484
    %v1224 = vsel %vm1223, %v1209, %v1222
    %vm1225 = vcmask 1045509
    %v1226 = vsel %vm1225, %v1210, %v1224
    %v1227 = vsel %vm1217, %v1212, %v1211
    %v1228 = vsel %vm1219, %v1213, %v1227
    %v1229 = vsel %vm1221, %v1214, %v1228
    %v1230 = vsel %vm1223, %v1215, %v1229
    %v1231 = vsel %vm1225, %v1216, %v1230
    %v1234 = vsel %vm1060, %v1226, -inf
    %1235 = vmax.xlane.f32.xlu0 %v1234
    %v1236 = vpop.xlane.xlu0 %1235
    %v1237 = vsel %vm1060, %v1231, -inf
    %1238 = vmax.xlane.f32.xlu0 %v1237
    %v1239 = vpop.xlane.xlu0 %1238
    %v1242 = vperm.slane %v1236, 0
    %v1243 = vperm.slane %v1236, 1
    %v1244 = vperm.slane %v1236, 2
    %v1245 = vperm.slane %v1236, 3
    %v1246 = vperm.slane %v1236, 4
    %v1247 = vperm.slane %v1236, 5
    %v1248 = vperm.slane %v1239, 0
    %v1249 = vperm.slane %v1239, 1
    %v1250 = vperm.slane %v1239, 2
    %v1251 = vperm.slane %v1239, 3
    %v1252 = vperm.slane %v1239, 4
    %v1253 = vperm.slane %v1239, 5
    %vm1266 = vcmp.eq.f32.partialorder %v1145, %v1242
    %vm1267 = vcmp.eq.f32.partialorder %v1146, %v1243
    %vm1268 = vcmp.eq.f32.partialorder %v1147, %v1244
    %vm1269 = vcmp.eq.f32.partialorder %v1148, %v1245
    %vm1270 = vcmp.eq.f32.partialorder %v1149, %v1246
    %vm1271 = vcmp.eq.f32.partialorder %v1150, %v1247
    %vm1272 = vcmp.eq.f32.partialorder %v1151, %v1248
    %vm1273 = vcmp.eq.f32.partialorder %v1152, %v1249
    %vm1274 = vcmp.eq.f32.partialorder %v1153, %v1250
    %vm1275 = vcmp.eq.f32.partialorder %v1154, %v1251
    %vm1276 = vcmp.eq.f32.partialorder %v1155, %v1252
    %vm1277 = vcmp.eq.f32.partialorder %v1156, %v1253
    %v1279 = vlaneseq
    %v1280 = vshrl.u32 %v1279, 7
    %1282 = vset.pattern.permute.xlu0 %v1280
    %1283 = vperm.xlu0 %1282, %v1049
    %v1284 = vpop.permute.xlu0 %1283
    %v1286 = vsel %vm1266, %v1284, 6.0
    %v1287 = vsel %vm1267, %v1284, 6.0
    %v1288 = vsel %vm1268, %v1284, 6.0
    %v1289 = vsel %vm1269, %v1284, 6.0
    %v1290 = vsel %vm1270, %v1284, 6.0
    %v1291 = vsel %vm1271, %v1284, 6.0
    %v1292 = vsel %vm1272, %v1284, 6.0
    %v1293 = vsel %vm1273, %v1284, 6.0
    %v1294 = vsel %vm1274, %v1284, 6.0
    %v1295 = vsel %vm1275, %v1284, 6.0
    %v1296 = vsel %vm1276, %v1284, 6.0
    %v1297 = vsel %vm1277, %v1284, 6.0
    %1310 = vset.pattern.permute.xlu0 0
    %1311 = vperm.xlu0 %1310, %v1286
    %v1312 = vpop.permute.xlu0 %1311
    %1313 = vset.pattern.permute.xlu0 0
    %1314 = vperm.xlu0 %1313, %v1287
    %v1315 = vpop.permute.xlu0 %1314
    %1316 = vset.pattern.permute.xlu0 0
    %1317 = vperm.xlu0 %1316, %v1288
    %v1318 = vpop.permute.xlu0 %1317
    %1319 = vset.pattern.permute.xlu0 0
    %1320 = vperm.xlu0 %1319, %v1289
    %v1321 = vpop.permute.xlu0 %1320
    %1322 = vset.pattern.permute.xlu0 0
    %1323 = vperm.xlu0 %1322, %v1290
    %v1324 = vpop.permute.xlu0 %1323
    %1325 = vset.pattern.permute.xlu0 0
    %1326 = vperm.xlu0 %1325, %v1291
    %v1327 = vpop.permute.xlu0 %1326
    %1328 = vset.pattern.permute.xlu0 0
    %1329 = vperm.xlu0 %1328, %v1292
    %v1330 = vpop.permute.xlu0 %1329
    %1331 = vset.pattern.permute.xlu0 0
    %1332 = vperm.xlu0 %1331, %v1293
    %v1333 = vpop.permute.xlu0 %1332
    %1334 = vset.pattern.permute.xlu0 0
    %1335 = vperm.xlu0 %1334, %v1294
    %v1336 = vpop.permute.xlu0 %1335
    %1337 = vset.pattern.permute.xlu0 0
    %1338 = vperm.xlu0 %1337, %v1295
    %v1339 = vpop.permute.xlu0 %1338
    %1340 = vset.pattern.permute.xlu0 0
    %1341 = vperm.xlu0 %1340, %v1296
    %v1342 = vpop.permute.xlu0 %1341
    %1343 = vset.pattern.permute.xlu0 0
    %1344 = vperm.xlu0 %1343, %v1297
    %v1345 = vpop.permute.xlu0 %1344
    %v1346 = vperm.slane %v1312, %v47
    %v1347 = vperm.slane %v1315, %v47
    %v1348 = vperm.slane %v1318, %v47
    %v1349 = vperm.slane %v1321, %v47
    %v1350 = vperm.slane %v1324, %v47
    %v1351 = vperm.slane %v1327, %v47
    %v1352 = vperm.slane %v1330, %v47
    %v1353 = vperm.slane %v1333, %v47
    %v1354 = vperm.slane %v1336, %v47
    %v1355 = vperm.slane %v1339, %v47
    %v1356 = vperm.slane %v1342, %v47
    %v1357 = vperm.slane %v1345, %v47
    %v1358 = vsel %vm1217, %v1347, %v1346
    %v1359 = vsel %vm1219, %v1348, %v1358
    %v1360 = vsel %vm1221, %v1349, %v1359
    %v1361 = vsel %vm1223, %v1350, %v1360
    %v1362 = vsel %vm1225, %v1351, %v1361
    %v1363 = vsel %vm1217, %v1353, %v1352
    %v1364 = vsel %vm1219, %v1354, %v1363
    %v1365 = vsel %vm1221, %v1355, %v1364
    %v1366 = vsel %vm1223, %v1356, %v1365
    %v1367 = vsel %vm1225, %v1357, %v1366
    %v1370 = vsel %vm1060, %v1362, inf
    %1371 = vmin.xlane.f32.xlu0 %v1370
    %v1372 = vpop.xlane.xlu0 %1371
    %v1373 = vsel %vm1060, %v1367, inf
    %1374 = vmin.xlane.f32.xlu0 %v1373
    %v1375 = vpop.xlane.xlu0 %1374
    %v1376 = vperm.slane %v1043, 2
    %v1377 = vlaneseq
    %v1378 = vshrl.u32 %v1377, 7
    %1380 = vset.pattern.permute.xlu0 %v1378
    %1381 = vperm.xlu0 %1380, %v1376
    %v1382 = vpop.permute.xlu0 %1381
    %v1383 = vperm.slane %v1043, 3
    %v1384 = vlaneseq
    %v1385 = vshrl.u32 %v1384, 7
    %1387 = vset.pattern.permute.xlu0 %v1385
    %1388 = vperm.xlu0 %1387, %v1383
    %v1389 = vpop.permute.xlu0 %1388
    %v1392 = vadd.f32 %v1236, %v1382
    %v1393 = vadd.f32 %v1239, %v1389
    %v1394 = vadd.f32 %v1392, %v1103
    %v1395 = vadd.f32 %v1392, %v1110
    %v1396 = vadd.f32 %v1392, %v1117
    %v1397 = vadd.f32 %v1392, %v1124
    %v1398 = vadd.f32 %v1392, %v1131
    %v1399 = vadd.f32 %v1392, %v1138
    %v1400 = vadd.f32 %v1393, %v1103
    %v1401 = vadd.f32 %v1393, %v1110
    %v1402 = vadd.f32 %v1393, %v1117
    %v1403 = vadd.f32 %v1393, %v1124
    %v1404 = vadd.f32 %v1393, %v1131
    %v1405 = vadd.f32 %v1393, %v1138
    %1418 = vset.pattern.permute.xlu0 0
    %1419 = vperm.xlu0 %1418, %v1394
    %v1420 = vpop.permute.xlu0 %1419
    %1421 = vset.pattern.permute.xlu0 0
    %1422 = vperm.xlu0 %1421, %v1395
    %v1423 = vpop.permute.xlu0 %1422
    %1424 = vset.pattern.permute.xlu0 0
    %1425 = vperm.xlu0 %1424, %v1396
    %v1426 = vpop.permute.xlu0 %1425
    %1427 = vset.pattern.permute.xlu0 0
    %1428 = vperm.xlu0 %1427, %v1397
    %v1429 = vpop.permute.xlu0 %1428
    %1430 = vset.pattern.permute.xlu0 0
    %1431 = vperm.xlu0 %1430, %v1398
    %v1432 = vpop.permute.xlu0 %1431
    %1433 = vset.pattern.permute.xlu0 0
    %1434 = vperm.xlu0 %1433, %v1399
    %v1435 = vpop.permute.xlu0 %1434
    %1436 = vset.pattern.permute.xlu0 0
    %1437 = vperm.xlu0 %1436, %v1400
    %v1438 = vpop.permute.xlu0 %1437
    %1439 = vset.pattern.permute.xlu0 0
    %1440 = vperm.xlu0 %1439, %v1401
    %v1441 = vpop.permute.xlu0 %1440
    %1442 = vset.pattern.permute.xlu0 0
    %1443 = vperm.xlu0 %1442, %v1402
    %v1444 = vpop.permute.xlu0 %1443
    %1445 = vset.pattern.permute.xlu0 0
    %1446 = vperm.xlu0 %1445, %v1403
    %v1447 = vpop.permute.xlu0 %1446
    %1448 = vset.pattern.permute.xlu0 0
    %1449 = vperm.xlu0 %1448, %v1404
    %v1450 = vpop.permute.xlu0 %1449
    %1451 = vset.pattern.permute.xlu0 0
    %1452 = vperm.xlu0 %1451, %v1405
    %v1453 = vpop.permute.xlu0 %1452
    %v1454 = vperm.slane %v1420, %v47
    %v1455 = vperm.slane %v1423, %v47
    %v1456 = vperm.slane %v1426, %v47
    %v1457 = vperm.slane %v1429, %v47
    %v1458 = vperm.slane %v1432, %v47
    %v1459 = vperm.slane %v1435, %v47
    %v1460 = vperm.slane %v1438, %v47
    %v1461 = vperm.slane %v1441, %v47
    %v1462 = vperm.slane %v1444, %v47
    %v1463 = vperm.slane %v1447, %v47
    %v1464 = vperm.slane %v1450, %v47
    %v1465 = vperm.slane %v1453, %v47
    %v1466 = vsel %vm1217, %v1455, %v1454
    %v1467 = vsel %vm1219, %v1456, %v1466
    %v1468 = vsel %vm1221, %v1457, %v1467
    %v1469 = vsel %vm1223, %v1458, %v1468
    %v1470 = vsel %vm1225, %v1459, %v1469
    %v1471 = vsel %vm1217, %v1461, %v1460
    %v1472 = vsel %vm1219, %v1462, %v1471
    %v1473 = vsel %vm1221, %v1463, %v1472
    %v1474 = vsel %vm1223, %v1464, %v1473
    %v1475 = vsel %vm1225, %v1465, %v1474
    %v1478 = vsel %vm1060, %v1470, -inf
    %1479 = vmax.xlane.f32.xlu0 %v1478
    %v1480 = vpop.xlane.xlu0 %1479
    %v1481 = vsel %vm1060, %v1475, -inf
    %1482 = vmax.xlane.f32.xlu0 %v1481
    %v1483 = vpop.xlane.xlu0 %1482
    %v1486 = vperm.slane %v1480, 0
    %v1487 = vperm.slane %v1480, 1
    %v1488 = vperm.slane %v1480, 2
    %v1489 = vperm.slane %v1480, 3
    %v1490 = vperm.slane %v1480, 4
    %v1491 = vperm.slane %v1480, 5
    %v1492 = vperm.slane %v1483, 0
    %v1493 = vperm.slane %v1483, 1
    %v1494 = vperm.slane %v1483, 2
    %v1495 = vperm.slane %v1483, 3
    %v1496 = vperm.slane %v1483, 4
    %v1497 = vperm.slane %v1483, 5
    %vm1510 = vcmp.eq.f32.partialorder %v1394, %v1486
    %vm1511 = vcmp.eq.f32.partialorder %v1395, %v1487
    %vm1512 = vcmp.eq.f32.partialorder %v1396, %v1488
    %vm1513 = vcmp.eq.f32.partialorder %v1397, %v1489
    %vm1514 = vcmp.eq.f32.partialorder %v1398, %v1490
    %vm1515 = vcmp.eq.f32.partialorder %v1399, %v1491
    %vm1516 = vcmp.eq.f32.partialorder %v1400, %v1492
    %vm1517 = vcmp.eq.f32.partialorder %v1401, %v1493
    %vm1518 = vcmp.eq.f32.partialorder %v1402, %v1494
    %vm1519 = vcmp.eq.f32.partialorder %v1403, %v1495
    %vm1520 = vcmp.eq.f32.partialorder %v1404, %v1496
    %vm1521 = vcmp.eq.f32.partialorder %v1405, %v1497
    %v1522 = vsel %vm1510, %v1284, 6.0
    %v1523 = vsel %vm1511, %v1284, 6.0
    %v1524 = vsel %vm1512, %v1284, 6.0
    %v1525 = vsel %vm1513, %v1284, 6.0
    %v1526 = vsel %vm1514, %v1284, 6.0
    %v1527 = vsel %vm1515, %v1284, 6.0
    %v1528 = vsel %vm1516, %v1284, 6.0
    %v1529 = vsel %vm1517, %v1284, 6.0
    %v1530 = vsel %vm1518, %v1284, 6.0
    %v1531 = vsel %vm1519, %v1284, 6.0
    %v1532 = vsel %vm1520, %v1284, 6.0
    %v1533 = vsel %vm1521, %v1284, 6.0
    %1546 = vset.pattern.permute.xlu0 0
    %1547 = vperm.xlu0 %1546, %v1522
    %v1548 = vpop.permute.xlu0 %1547
    %1549 = vset.pattern.permute.xlu0 0
    %1550 = vperm.xlu0 %1549, %v1523
    %v1551 = vpop.permute.xlu0 %1550
    %1552 = vset.pattern.permute.xlu0 0
    %1553 = vperm.xlu0 %1552, %v1524
    %v1554 = vpop.permute.xlu0 %1553
    %1555 = vset.pattern.permute.xlu0 0
    %1556 = vperm.xlu0 %1555, %v1525
    %v1557 = vpop.permute.xlu0 %1556
    %1558 = vset.pattern.permute.xlu0 0
    %1559 = vperm.xlu0 %1558, %v1526
    %v1560 = vpop.permute.xlu0 %1559
    %1561 = vset.pattern.permute.xlu0 0
    %1562 = vperm.xlu0 %1561, %v1527
    %v1563 = vpop.permute.xlu0 %1562
    %1564 = vset.pattern.permute.xlu0 0
    %1565 = vperm.xlu0 %1564, %v1528
    %v1566 = vpop.permute.xlu0 %1565
    %1567 = vset.pattern.permute.xlu0 0
    %1568 = vperm.xlu0 %1567, %v1529
    %v1569 = vpop.permute.xlu0 %1568
    %1570 = vset.pattern.permute.xlu0 0
    %1571 = vperm.xlu0 %1570, %v1530
    %v1572 = vpop.permute.xlu0 %1571
    %1573 = vset.pattern.permute.xlu0 0
    %1574 = vperm.xlu0 %1573, %v1531
    %v1575 = vpop.permute.xlu0 %1574
    %1576 = vset.pattern.permute.xlu0 0
    %1577 = vperm.xlu0 %1576, %v1532
    %v1578 = vpop.permute.xlu0 %1577
    %1579 = vset.pattern.permute.xlu0 0
    %1580 = vperm.xlu0 %1579, %v1533
    %v1581 = vpop.permute.xlu0 %1580
    %v1582 = vperm.slane %v1548, %v47
    %v1583 = vperm.slane %v1551, %v47
    %v1584 = vperm.slane %v1554, %v47
    %v1585 = vperm.slane %v1557, %v47
    %v1586 = vperm.slane %v1560, %v47
    %v1587 = vperm.slane %v1563, %v47
    %v1588 = vperm.slane %v1566, %v47
    %v1589 = vperm.slane %v1569, %v47
    %v1590 = vperm.slane %v1572, %v47
    %v1591 = vperm.slane %v1575, %v47
    %v1592 = vperm.slane %v1578, %v47
    %v1593 = vperm.slane %v1581, %v47
    %v1594 = vsel %vm1217, %v1583, %v1582
    %v1595 = vsel %vm1219, %v1584, %v1594
    %v1596 = vsel %vm1221, %v1585, %v1595
    %v1597 = vsel %vm1223, %v1586, %v1596
    %v1598 = vsel %vm1225, %v1587, %v1597
    %v1599 = vsel %vm1217, %v1589, %v1588
    %v1600 = vsel %vm1219, %v1590, %v1599
    %v1601 = vsel %vm1221, %v1591, %v1600
    %v1602 = vsel %vm1223, %v1592, %v1601
    %v1603 = vsel %vm1225, %v1593, %v1602
    %v1606 = vsel %vm1060, %v1598, inf
    %1607 = vmin.xlane.f32.xlu0 %v1606
    %v1608 = vpop.xlane.xlu0 %1607
    %v1609 = vsel %vm1060, %v1603, inf
    %1610 = vmin.xlane.f32.xlu0 %v1609
    %v1611 = vpop.xlane.xlu0 %1610
    %v1612 = vperm.slane %v1043, 4
    %v1613 = vlaneseq
    %v1614 = vshrl.u32 %v1613, 7
    %1616 = vset.pattern.permute.xlu0 %v1614
    %1617 = vperm.xlu0 %1616, %v1612
    %v1618 = vpop.permute.xlu0 %1617
    %v1619 = vperm.slane %v1043, 5
    %v1620 = vlaneseq
    %v1621 = vshrl.u32 %v1620, 7
    %1623 = vset.pattern.permute.xlu0 %v1621
    %1624 = vperm.xlu0 %1623, %v1619
    %v1625 = vpop.permute.xlu0 %1624
    %v1628 = vadd.f32 %v1480, %v1618
    %v1629 = vadd.f32 %v1483, %v1625
    %v1630 = vadd.f32 %v1628, %v1103
    %v1631 = vadd.f32 %v1628, %v1110
    %v1632 = vadd.f32 %v1628, %v1117
    %v1633 = vadd.f32 %v1628, %v1124
    %v1634 = vadd.f32 %v1628, %v1131
    %v1635 = vadd.f32 %v1628, %v1138
    %v1636 = vadd.f32 %v1629, %v1103
    %v1637 = vadd.f32 %v1629, %v1110
    %v1638 = vadd.f32 %v1629, %v1117
    %v1639 = vadd.f32 %v1629, %v1124
    %v1640 = vadd.f32 %v1629, %v1131
    %v1641 = vadd.f32 %v1629, %v1138
    %1654 = vset.pattern.permute.xlu0 0
    %1655 = vperm.xlu0 %1654, %v1630
    %v1656 = vpop.permute.xlu0 %1655
    %1657 = vset.pattern.permute.xlu0 0
    %1658 = vperm.xlu0 %1657, %v1631
    %v1659 = vpop.permute.xlu0 %1658
    %1660 = vset.pattern.permute.xlu0 0
    %1661 = vperm.xlu0 %1660, %v1632
    %v1662 = vpop.permute.xlu0 %1661
    %1663 = vset.pattern.permute.xlu0 0
    %1664 = vperm.xlu0 %1663, %v1633
    %v1665 = vpop.permute.xlu0 %1664
    %1666 = vset.pattern.permute.xlu0 0
    %1667 = vperm.xlu0 %1666, %v1634
    %v1668 = vpop.permute.xlu0 %1667
    %1669 = vset.pattern.permute.xlu0 0
    %1670 = vperm.xlu0 %1669, %v1635
    %v1671 = vpop.permute.xlu0 %1670
    %1672 = vset.pattern.permute.xlu0 0
    %1673 = vperm.xlu0 %1672, %v1636
    %v1674 = vpop.permute.xlu0 %1673
    %1675 = vset.pattern.permute.xlu0 0
    %1676 = vperm.xlu0 %1675, %v1637
    %v1677 = vpop.permute.xlu0 %1676
    %1678 = vset.pattern.permute.xlu0 0
    %1679 = vperm.xlu0 %1678, %v1638
    %v1680 = vpop.permute.xlu0 %1679
    %1681 = vset.pattern.permute.xlu0 0
    %1682 = vperm.xlu0 %1681, %v1639
    %v1683 = vpop.permute.xlu0 %1682
    %1684 = vset.pattern.permute.xlu0 0
    %1685 = vperm.xlu0 %1684, %v1640
    %v1686 = vpop.permute.xlu0 %1685
    %1687 = vset.pattern.permute.xlu0 0
    %1688 = vperm.xlu0 %1687, %v1641
    %v1689 = vpop.permute.xlu0 %1688
    %v1690 = vperm.slane %v1656, %v47
    %v1691 = vperm.slane %v1659, %v47
    %v1692 = vperm.slane %v1662, %v47
    %v1693 = vperm.slane %v1665, %v47
    %v1694 = vperm.slane %v1668, %v47
    %v1695 = vperm.slane %v1671, %v47
    %v1696 = vperm.slane %v1674, %v47
    %v1697 = vperm.slane %v1677, %v47
    %v1698 = vperm.slane %v1680, %v47
    %v1699 = vperm.slane %v1683, %v47
    %v1700 = vperm.slane %v1686, %v47
    %v1701 = vperm.slane %v1689, %v47
    %v1702 = vsel %vm1217, %v1691, %v1690
    %v1703 = vsel %vm1219, %v1692, %v1702
    %v1704 = vsel %vm1221, %v1693, %v1703
    %v1705 = vsel %vm1223, %v1694, %v1704
    %v1706 = vsel %vm1225, %v1695, %v1705
    %v1707 = vsel %vm1217, %v1697, %v1696
    %v1708 = vsel %vm1219, %v1698, %v1707
    %v1709 = vsel %vm1221, %v1699, %v1708
    %v1710 = vsel %vm1223, %v1700, %v1709
    %v1711 = vsel %vm1225, %v1701, %v1710
    %v1714 = vsel %vm1060, %v1706, -inf
    %1715 = vmax.xlane.f32.xlu0 %v1714
    %v1716 = vpop.xlane.xlu0 %1715
    %v1717 = vsel %vm1060, %v1711, -inf
    %1718 = vmax.xlane.f32.xlu0 %v1717
    %v1719 = vpop.xlane.xlu0 %1718
    %v1722 = vperm.slane %v1716, 0
    %v1723 = vperm.slane %v1716, 1
    %v1724 = vperm.slane %v1716, 2
    %v1725 = vperm.slane %v1716, 3
    %v1726 = vperm.slane %v1716, 4
    %v1727 = vperm.slane %v1716, 5
    %v1728 = vperm.slane %v1719, 0
    %v1729 = vperm.slane %v1719, 1
    %v1730 = vperm.slane %v1719, 2
    %v1731 = vperm.slane %v1719, 3
    %v1732 = vperm.slane %v1719, 4
    %v1733 = vperm.slane %v1719, 5
    %vm1746 = vcmp.eq.f32.partialorder %v1630, %v1722
    %vm1747 = vcmp.eq.f32.partialorder %v1631, %v1723
    %vm1748 = vcmp.eq.f32.partialorder %v1632, %v1724
    %vm1749 = vcmp.eq.f32.partialorder %v1633, %v1725
    %vm1750 = vcmp.eq.f32.partialorder %v1634, %v1726
    %vm1751 = vcmp.eq.f32.partialorder %v1635, %v1727
    %vm1752 = vcmp.eq.f32.partialorder %v1636, %v1728
    %vm1753 = vcmp.eq.f32.partialorder %v1637, %v1729
    %vm1754 = vcmp.eq.f32.partialorder %v1638, %v1730
    %vm1755 = vcmp.eq.f32.partialorder %v1639, %v1731
    %vm1756 = vcmp.eq.f32.partialorder %v1640, %v1732
    %vm1757 = vcmp.eq.f32.partialorder %v1641, %v1733
    %v1758 = vsel %vm1746, %v1284, 6.0
    %v1759 = vsel %vm1747, %v1284, 6.0
    %v1760 = vsel %vm1748, %v1284, 6.0
    %v1761 = vsel %vm1749, %v1284, 6.0
    %v1762 = vsel %vm1750, %v1284, 6.0
    %v1763 = vsel %vm1751, %v1284, 6.0
    %v1764 = vsel %vm1752, %v1284, 6.0
    %v1765 = vsel %vm1753, %v1284, 6.0
    %v1766 = vsel %vm1754, %v1284, 6.0
    %v1767 = vsel %vm1755, %v1284, 6.0
    %v1768 = vsel %vm1756, %v1284, 6.0
    %v1769 = vsel %vm1757, %v1284, 6.0
    %1782 = vset.pattern.permute.xlu0 0
    %1783 = vperm.xlu0 %1782, %v1758
    %v1784 = vpop.permute.xlu0 %1783
    %1785 = vset.pattern.permute.xlu0 0
    %1786 = vperm.xlu0 %1785, %v1759
    %v1787 = vpop.permute.xlu0 %1786
    %1788 = vset.pattern.permute.xlu0 0
    %1789 = vperm.xlu0 %1788, %v1760
    %v1790 = vpop.permute.xlu0 %1789
    %1791 = vset.pattern.permute.xlu0 0
    %1792 = vperm.xlu0 %1791, %v1761
    %v1793 = vpop.permute.xlu0 %1792
    %1794 = vset.pattern.permute.xlu0 0
    %1795 = vperm.xlu0 %1794, %v1762
    %v1796 = vpop.permute.xlu0 %1795
    %1797 = vset.pattern.permute.xlu0 0
    %1798 = vperm.xlu0 %1797, %v1763
    %v1799 = vpop.permute.xlu0 %1798
    %1800 = vset.pattern.permute.xlu0 0
    %1801 = vperm.xlu0 %1800, %v1764
    %v1802 = vpop.permute.xlu0 %1801
    %1803 = vset.pattern.permute.xlu0 0
    %1804 = vperm.xlu0 %1803, %v1765
    %v1805 = vpop.permute.xlu0 %1804
    %1806 = vset.pattern.permute.xlu0 0
    %1807 = vperm.xlu0 %1806, %v1766
    %v1808 = vpop.permute.xlu0 %1807
    %1809 = vset.pattern.permute.xlu0 0
    %1810 = vperm.xlu0 %1809, %v1767
    %v1811 = vpop.permute.xlu0 %1810
    %1812 = vset.pattern.permute.xlu0 0
    %1813 = vperm.xlu0 %1812, %v1768
    %v1814 = vpop.permute.xlu0 %1813
    %1815 = vset.pattern.permute.xlu0 0
    %1816 = vperm.xlu0 %1815, %v1769
    %v1817 = vpop.permute.xlu0 %1816
    %v1818 = vperm.slane %v1784, %v47
    %v1819 = vperm.slane %v1787, %v47
    %v1820 = vperm.slane %v1790, %v47
    %v1821 = vperm.slane %v1793, %v47
    %v1822 = vperm.slane %v1796, %v47
    %v1823 = vperm.slane %v1799, %v47
    %v1824 = vperm.slane %v1802, %v47
    %v1825 = vperm.slane %v1805, %v47
    %v1826 = vperm.slane %v1808, %v47
    %v1827 = vperm.slane %v1811, %v47
    %v1828 = vperm.slane %v1814, %v47
    %v1829 = vperm.slane %v1817, %v47
    %v1830 = vsel %vm1217, %v1819, %v1818
    %v1831 = vsel %vm1219, %v1820, %v1830
    %v1832 = vsel %vm1221, %v1821, %v1831
    %v1833 = vsel %vm1223, %v1822, %v1832
    %v1834 = vsel %vm1225, %v1823, %v1833
    %v1835 = vsel %vm1217, %v1825, %v1824
    %v1836 = vsel %vm1219, %v1826, %v1835
    %v1837 = vsel %vm1221, %v1827, %v1836
    %v1838 = vsel %vm1223, %v1828, %v1837
    %v1839 = vsel %vm1225, %v1829, %v1838
    %v1842 = vsel %vm1060, %v1834, inf
    %1843 = vmin.xlane.f32.xlu0 %v1842
    %v1844 = vpop.xlane.xlu0 %1843
    %v1845 = vsel %vm1060, %v1839, inf
    %1846 = vmin.xlane.f32.xlu0 %v1845
    %v1847 = vpop.xlane.xlu0 %1846
    %v1848 = vperm.slane %v1043, 6
    %v1849 = vlaneseq
    %v1850 = vshrl.u32 %v1849, 7
    %1852 = vset.pattern.permute.xlu0 %v1850
    %1853 = vperm.xlu0 %1852, %v1848
    %v1854 = vpop.permute.xlu0 %1853
    %v1855 = vperm.slane %v1043, 7
    %v1856 = vlaneseq
    %v1857 = vshrl.u32 %v1856, 7
    %1859 = vset.pattern.permute.xlu0 %v1857
    %1860 = vperm.xlu0 %1859, %v1855
    %v1861 = vpop.permute.xlu0 %1860
    %v1864 = vadd.f32 %v1716, %v1854
    %v1865 = vadd.f32 %v1719, %v1861
    %v1866 = vadd.f32 %v1864, %v1103
    %v1867 = vadd.f32 %v1864, %v1110
    %v1868 = vadd.f32 %v1864, %v1117
    %v1869 = vadd.f32 %v1864, %v1124
    %v1870 = vadd.f32 %v1864, %v1131
    %v1871 = vadd.f32 %v1864, %v1138
    %v1872 = vadd.f32 %v1865, %v1103
    %v1873 = vadd.f32 %v1865, %v1110
    %v1874 = vadd.f32 %v1865, %v1117
    %v1875 = vadd.f32 %v1865, %v1124
    %v1876 = vadd.f32 %v1865, %v1131
    %v1877 = vadd.f32 %v1865, %v1138
    %1890 = vset.pattern.permute.xlu0 0
    %1891 = vperm.xlu0 %1890, %v1866
    %v1892 = vpop.permute.xlu0 %1891
    %1893 = vset.pattern.permute.xlu0 0
    %1894 = vperm.xlu0 %1893, %v1867
    %v1895 = vpop.permute.xlu0 %1894
    %1896 = vset.pattern.permute.xlu0 0
    %1897 = vperm.xlu0 %1896, %v1868
    %v1898 = vpop.permute.xlu0 %1897
    %1899 = vset.pattern.permute.xlu0 0
    %1900 = vperm.xlu0 %1899, %v1869
    %v1901 = vpop.permute.xlu0 %1900
    %1902 = vset.pattern.permute.xlu0 0
    %1903 = vperm.xlu0 %1902, %v1870
    %v1904 = vpop.permute.xlu0 %1903
    %1905 = vset.pattern.permute.xlu0 0
    %1906 = vperm.xlu0 %1905, %v1871
    %v1907 = vpop.permute.xlu0 %1906
    %1908 = vset.pattern.permute.xlu0 0
    %1909 = vperm.xlu0 %1908, %v1872
    %v1910 = vpop.permute.xlu0 %1909
    %1911 = vset.pattern.permute.xlu0 0
    %1912 = vperm.xlu0 %1911, %v1873
    %v1913 = vpop.permute.xlu0 %1912
    %1914 = vset.pattern.permute.xlu0 0
    %1915 = vperm.xlu0 %1914, %v1874
    %v1916 = vpop.permute.xlu0 %1915
    %1917 = vset.pattern.permute.xlu0 0
    %1918 = vperm.xlu0 %1917, %v1875
    %v1919 = vpop.permute.xlu0 %1918
    %1920 = vset.pattern.permute.xlu0 0
    %1921 = vperm.xlu0 %1920, %v1876
    %v1922 = vpop.permute.xlu0 %1921
    %1923 = vset.pattern.permute.xlu0 0
    %1924 = vperm.xlu0 %1923, %v1877
    %v1925 = vpop.permute.xlu0 %1924
    %v1926 = vperm.slane %v1892, %v47
    %v1927 = vperm.slane %v1895, %v47
    %v1928 = vperm.slane %v1898, %v47
    %v1929 = vperm.slane %v1901, %v47
    %v1930 = vperm.slane %v1904, %v47
    %v1931 = vperm.slane %v1907, %v47
    %v1932 = vperm.slane %v1910, %v47
    %v1933 = vperm.slane %v1913, %v47
    %v1934 = vperm.slane %v1916, %v47
    %v1935 = vperm.slane %v1919, %v47
    %v1936 = vperm.slane %v1922, %v47
    %v1937 = vperm.slane %v1925, %v47
    %v1938 = vsel %vm1217, %v1927, %v1926
    %v1939 = vsel %vm1219, %v1928, %v1938
    %v1940 = vsel %vm1221, %v1929, %v1939
    %v1941 = vsel %vm1223, %v1930, %v1940
    %v1942 = vsel %vm1225, %v1931, %v1941
    %v1943 = vsel %vm1217, %v1933, %v1932
    %v1944 = vsel %vm1219, %v1934, %v1943
    %v1945 = vsel %vm1221, %v1935, %v1944
    %v1946 = vsel %vm1223, %v1936, %v1945
    %v1947 = vsel %vm1225, %v1937, %v1946
    %v1950 = vsel %vm1060, %v1942, -inf
    %1951 = vmax.xlane.f32.xlu0 %v1950
    %v1952 = vpop.xlane.xlu0 %1951
    %v1953 = vsel %vm1060, %v1947, -inf
    %1954 = vmax.xlane.f32.xlu0 %v1953
    %v1955 = vpop.xlane.xlu0 %1954
    %v1958 = vperm.slane %v1952, 0
    %v1959 = vperm.slane %v1952, 1
    %v1960 = vperm.slane %v1952, 2
    %v1961 = vperm.slane %v1952, 3
    %v1962 = vperm.slane %v1952, 4
    %v1963 = vperm.slane %v1952, 5
    %v1964 = vperm.slane %v1955, 0
    %v1965 = vperm.slane %v1955, 1
    %v1966 = vperm.slane %v1955, 2
    %v1967 = vperm.slane %v1955, 3
    %v1968 = vperm.slane %v1955, 4
    %v1969 = vperm.slane %v1955, 5
    %vm1982 = vcmp.eq.f32.partialorder %v1866, %v1958
    %vm1983 = vcmp.eq.f32.partialorder %v1867, %v1959
    %vm1984 = vcmp.eq.f32.partialorder %v1868, %v1960
    %vm1985 = vcmp.eq.f32.partialorder %v1869, %v1961
    %vm1986 = vcmp.eq.f32.partialorder %v1870, %v1962
    %vm1987 = vcmp.eq.f32.partialorder %v1871, %v1963
    %vm1988 = vcmp.eq.f32.partialorder %v1872, %v1964
    %vm1989 = vcmp.eq.f32.partialorder %v1873, %v1965
    %vm1990 = vcmp.eq.f32.partialorder %v1874, %v1966
    %vm1991 = vcmp.eq.f32.partialorder %v1875, %v1967
    %vm1992 = vcmp.eq.f32.partialorder %v1876, %v1968
    %vm1993 = vcmp.eq.f32.partialorder %v1877, %v1969
    %v1994 = vsel %vm1982, %v1284, 6.0
    %v1995 = vsel %vm1983, %v1284, 6.0
    %v1996 = vsel %vm1984, %v1284, 6.0
    %v1997 = vsel %vm1985, %v1284, 6.0
    %v1998 = vsel %vm1986, %v1284, 6.0
    %v1999 = vsel %vm1987, %v1284, 6.0
    %v2000 = vsel %vm1988, %v1284, 6.0
    %v2001 = vsel %vm1989, %v1284, 6.0
    %v2002 = vsel %vm1990, %v1284, 6.0
    %v2003 = vsel %vm1991, %v1284, 6.0
    %v2004 = vsel %vm1992, %v1284, 6.0
    %v2005 = vsel %vm1993, %v1284, 6.0
    %2018 = vset.pattern.permute.xlu0 0
    %2019 = vperm.xlu0 %2018, %v1994
    %v2020 = vpop.permute.xlu0 %2019
    %2021 = vset.pattern.permute.xlu0 0
    %2022 = vperm.xlu0 %2021, %v1995
    %v2023 = vpop.permute.xlu0 %2022
    %2024 = vset.pattern.permute.xlu0 0
    %2025 = vperm.xlu0 %2024, %v1996
    %v2026 = vpop.permute.xlu0 %2025
    %2027 = vset.pattern.permute.xlu0 0
    %2028 = vperm.xlu0 %2027, %v1997
    %v2029 = vpop.permute.xlu0 %2028
    %2030 = vset.pattern.permute.xlu0 0
    %2031 = vperm.xlu0 %2030, %v1998
    %v2032 = vpop.permute.xlu0 %2031
    %2033 = vset.pattern.permute.xlu0 0
    %2034 = vperm.xlu0 %2033, %v1999
    %v2035 = vpop.permute.xlu0 %2034
    %2036 = vset.pattern.permute.xlu0 0
    %2037 = vperm.xlu0 %2036, %v2000
    %v2038 = vpop.permute.xlu0 %2037
    %2039 = vset.pattern.permute.xlu0 0
    %2040 = vperm.xlu0 %2039, %v2001
    %v2041 = vpop.permute.xlu0 %2040
    %2042 = vset.pattern.permute.xlu0 0
    %2043 = vperm.xlu0 %2042, %v2002
    %v2044 = vpop.permute.xlu0 %2043
    %2045 = vset.pattern.permute.xlu0 0
    %2046 = vperm.xlu0 %2045, %v2003
    %v2047 = vpop.permute.xlu0 %2046
    %2048 = vset.pattern.permute.xlu0 0
    %2049 = vperm.xlu0 %2048, %v2004
    %v2050 = vpop.permute.xlu0 %2049
    %2051 = vset.pattern.permute.xlu0 0
    %2052 = vperm.xlu0 %2051, %v2005
    %v2053 = vpop.permute.xlu0 %2052
    %v2054 = vperm.slane %v2020, %v47
    %v2055 = vperm.slane %v2023, %v47
    %v2056 = vperm.slane %v2026, %v47
    %v2057 = vperm.slane %v2029, %v47
    %v2058 = vperm.slane %v2032, %v47
    %v2059 = vperm.slane %v2035, %v47
    %v2060 = vperm.slane %v2038, %v47
    %v2061 = vperm.slane %v2041, %v47
    %v2062 = vperm.slane %v2044, %v47
    %v2063 = vperm.slane %v2047, %v47
    %v2064 = vperm.slane %v2050, %v47
    %v2065 = vperm.slane %v2053, %v47
    %v2066 = vsel %vm1217, %v2055, %v2054
    %v2067 = vsel %vm1219, %v2056, %v2066
    %v2068 = vsel %vm1221, %v2057, %v2067
    %v2069 = vsel %vm1223, %v2058, %v2068
    %v2070 = vsel %vm1225, %v2059, %v2069
    %v2071 = vsel %vm1217, %v2061, %v2060
    %v2072 = vsel %vm1219, %v2062, %v2071
    %v2073 = vsel %vm1221, %v2063, %v2072
    %v2074 = vsel %vm1223, %v2064, %v2073
    %v2075 = vsel %vm1225, %v2065, %v2074
    %v2078 = vsel %vm1060, %v2070, inf
    %2079 = vmin.xlane.f32.xlu0 %v2078
    %v2080 = vpop.xlane.xlu0 %2079
    %v2081 = vsel %vm1060, %v2075, inf
    %2082 = vmin.xlane.f32.xlu0 %v2081
    %v2083 = vpop.xlane.xlu0 %2082
    %v2085 = vperm.slane %v1046, 0
    %v2086 = vlaneseq
    %v2087 = vshrl.u32 %v2086, 7
    %2089 = vset.pattern.permute.xlu0 %v2087
    %2090 = vperm.xlu0 %2089, %v2085
    %v2091 = vpop.permute.xlu0 %2090
    %v2092 = vperm.slane %v1046, 1
    %v2093 = vlaneseq
    %v2094 = vshrl.u32 %v2093, 7
    %2096 = vset.pattern.permute.xlu0 %v2094
    %2097 = vperm.xlu0 %2096, %v2092
    %v2098 = vpop.permute.xlu0 %2097
    %v2101 = vadd.f32 %v1952, %v2091
    %v2102 = vadd.f32 %v1955, %v2098
    %v2103 = vadd.f32 %v2101, %v1103
    %v2104 = vadd.f32 %v2101, %v1110
    %v2105 = vadd.f32 %v2101, %v1117
    %v2106 = vadd.f32 %v2101, %v1124
    %v2107 = vadd.f32 %v2101, %v1131
    %v2108 = vadd.f32 %v2101, %v1138
    %v2109 = vadd.f32 %v2102, %v1103
    %v2110 = vadd.f32 %v2102, %v1110
    %v2111 = vadd.f32 %v2102, %v1117
    %v2112 = vadd.f32 %v2102, %v1124
    %v2113 = vadd.f32 %v2102, %v1131
    %v2114 = vadd.f32 %v2102, %v1138
    %2127 = vset.pattern.permute.xlu0 0
    %2128 = vperm.xlu0 %2127, %v2103
    %v2129 = vpop.permute.xlu0 %2128
    %2130 = vset.pattern.permute.xlu0 0
    %2131 = vperm.xlu0 %2130, %v2104
    %v2132 = vpop.permute.xlu0 %2131
    %2133 = vset.pattern.permute.xlu0 0
    %2134 = vperm.xlu0 %2133, %v2105
    %v2135 = vpop.permute.xlu0 %2134
    %2136 = vset.pattern.permute.xlu0 0
    %2137 = vperm.xlu0 %2136, %v2106
    %v2138 = vpop.permute.xlu0 %2137
    %2139 = vset.pattern.permute.xlu0 0
    %2140 = vperm.xlu0 %2139, %v2107
    %v2141 = vpop.permute.xlu0 %2140
    %2142 = vset.pattern.permute.xlu0 0
    %2143 = vperm.xlu0 %2142, %v2108
    %v2144 = vpop.permute.xlu0 %2143
    %2145 = vset.pattern.permute.xlu0 0
    %2146 = vperm.xlu0 %2145, %v2109
    %v2147 = vpop.permute.xlu0 %2146
    %2148 = vset.pattern.permute.xlu0 0
    %2149 = vperm.xlu0 %2148, %v2110
    %v2150 = vpop.permute.xlu0 %2149
    %2151 = vset.pattern.permute.xlu0 0
    %2152 = vperm.xlu0 %2151, %v2111
    %v2153 = vpop.permute.xlu0 %2152
    %2154 = vset.pattern.permute.xlu0 0
    %2155 = vperm.xlu0 %2154, %v2112
    %v2156 = vpop.permute.xlu0 %2155
    %2157 = vset.pattern.permute.xlu0 0
    %2158 = vperm.xlu0 %2157, %v2113
    %v2159 = vpop.permute.xlu0 %2158
    %2160 = vset.pattern.permute.xlu0 0
    %2161 = vperm.xlu0 %2160, %v2114
    %v2162 = vpop.permute.xlu0 %2161
    %v2163 = vperm.slane %v2129, %v47
    %v2164 = vperm.slane %v2132, %v47
    %v2165 = vperm.slane %v2135, %v47
    %v2166 = vperm.slane %v2138, %v47
    %v2167 = vperm.slane %v2141, %v47
    %v2168 = vperm.slane %v2144, %v47
    %v2169 = vperm.slane %v2147, %v47
    %v2170 = vperm.slane %v2150, %v47
    %v2171 = vperm.slane %v2153, %v47
    %v2172 = vperm.slane %v2156, %v47
    %v2173 = vperm.slane %v2159, %v47
    %v2174 = vperm.slane %v2162, %v47
    %v2175 = vsel %vm1217, %v2164, %v2163
    %v2176 = vsel %vm1219, %v2165, %v2175
    %v2177 = vsel %vm1221, %v2166, %v2176
    %v2178 = vsel %vm1223, %v2167, %v2177
    %v2179 = vsel %vm1225, %v2168, %v2178
    %v2180 = vsel %vm1217, %v2170, %v2169
    %v2181 = vsel %vm1219, %v2171, %v2180
    %v2182 = vsel %vm1221, %v2172, %v2181
    %v2183 = vsel %vm1223, %v2173, %v2182
    %v2184 = vsel %vm1225, %v2174, %v2183
    %v2187 = vsel %vm1060, %v2179, -inf
    %2188 = vmax.xlane.f32.xlu0 %v2187
    %v2189 = vpop.xlane.xlu0 %2188
    %v2190 = vsel %vm1060, %v2184, -inf
    %2191 = vmax.xlane.f32.xlu0 %v2190
    %v2192 = vpop.xlane.xlu0 %2191
    %v2195 = vperm.slane %v2189, 0
    %v2196 = vperm.slane %v2189, 1
    %v2197 = vperm.slane %v2189, 2
    %v2198 = vperm.slane %v2189, 3
    %v2199 = vperm.slane %v2189, 4
    %v2200 = vperm.slane %v2189, 5
    %v2201 = vperm.slane %v2192, 0
    %v2202 = vperm.slane %v2192, 1
    %v2203 = vperm.slane %v2192, 2
    %v2204 = vperm.slane %v2192, 3
    %v2205 = vperm.slane %v2192, 4
    %v2206 = vperm.slane %v2192, 5
    %vm2219 = vcmp.eq.f32.partialorder %v2103, %v2195
    %vm2220 = vcmp.eq.f32.partialorder %v2104, %v2196
    %vm2221 = vcmp.eq.f32.partialorder %v2105, %v2197
    %vm2222 = vcmp.eq.f32.partialorder %v2106, %v2198
    %vm2223 = vcmp.eq.f32.partialorder %v2107, %v2199
    %vm2224 = vcmp.eq.f32.partialorder %v2108, %v2200
    %vm2225 = vcmp.eq.f32.partialorder %v2109, %v2201
    %vm2226 = vcmp.eq.f32.partialorder %v2110, %v2202
    %vm2227 = vcmp.eq.f32.partialorder %v2111, %v2203
    %vm2228 = vcmp.eq.f32.partialorder %v2112, %v2204
    %vm2229 = vcmp.eq.f32.partialorder %v2113, %v2205
    %vm2230 = vcmp.eq.f32.partialorder %v2114, %v2206
    %v2231 = vsel %vm2219, %v1284, 6.0
    %v2232 = vsel %vm2220, %v1284, 6.0
    %v2233 = vsel %vm2221, %v1284, 6.0
    %v2234 = vsel %vm2222, %v1284, 6.0
    %v2235 = vsel %vm2223, %v1284, 6.0
    %v2236 = vsel %vm2224, %v1284, 6.0
    %v2237 = vsel %vm2225, %v1284, 6.0
    %v2238 = vsel %vm2226, %v1284, 6.0
    %v2239 = vsel %vm2227, %v1284, 6.0
    %v2240 = vsel %vm2228, %v1284, 6.0
    %v2241 = vsel %vm2229, %v1284, 6.0
    %v2242 = vsel %vm2230, %v1284, 6.0
    %2255 = vset.pattern.permute.xlu0 0
    %2256 = vperm.xlu0 %2255, %v2231
    %v2257 = vpop.permute.xlu0 %2256
    %2258 = vset.pattern.permute.xlu0 0
    %2259 = vperm.xlu0 %2258, %v2232
    %v2260 = vpop.permute.xlu0 %2259
    %2261 = vset.pattern.permute.xlu0 0
    %2262 = vperm.xlu0 %2261, %v2233
    %v2263 = vpop.permute.xlu0 %2262
    %2264 = vset.pattern.permute.xlu0 0
    %2265 = vperm.xlu0 %2264, %v2234
    %v2266 = vpop.permute.xlu0 %2265
    %2267 = vset.pattern.permute.xlu0 0
    %2268 = vperm.xlu0 %2267, %v2235
    %v2269 = vpop.permute.xlu0 %2268
    %2270 = vset.pattern.permute.xlu0 0
    %2271 = vperm.xlu0 %2270, %v2236
    %v2272 = vpop.permute.xlu0 %2271
    %2273 = vset.pattern.permute.xlu0 0
    %2274 = vperm.xlu0 %2273, %v2237
    %v2275 = vpop.permute.xlu0 %2274
    %2276 = vset.pattern.permute.xlu0 0
    %2277 = vperm.xlu0 %2276, %v2238
    %v2278 = vpop.permute.xlu0 %2277
    %2279 = vset.pattern.permute.xlu0 0
    %2280 = vperm.xlu0 %2279, %v2239
    %v2281 = vpop.permute.xlu0 %2280
    %2282 = vset.pattern.permute.xlu0 0
    %2283 = vperm.xlu0 %2282, %v2240
    %v2284 = vpop.permute.xlu0 %2283
    %2285 = vset.pattern.permute.xlu0 0
    %2286 = vperm.xlu0 %2285, %v2241
    %v2287 = vpop.permute.xlu0 %2286
    %2288 = vset.pattern.permute.xlu0 0
    %2289 = vperm.xlu0 %2288, %v2242
    %v2290 = vpop.permute.xlu0 %2289
    %v2291 = vperm.slane %v2257, %v47
    %v2292 = vperm.slane %v2260, %v47
    %v2293 = vperm.slane %v2263, %v47
    %v2294 = vperm.slane %v2266, %v47
    %v2295 = vperm.slane %v2269, %v47
    %v2296 = vperm.slane %v2272, %v47
    %v2297 = vperm.slane %v2275, %v47
    %v2298 = vperm.slane %v2278, %v47
    %v2299 = vperm.slane %v2281, %v47
    %v2300 = vperm.slane %v2284, %v47
    %v2301 = vperm.slane %v2287, %v47
    %v2302 = vperm.slane %v2290, %v47
    %v2303 = vsel %vm1217, %v2292, %v2291
    %v2304 = vsel %vm1219, %v2293, %v2303
    %v2305 = vsel %vm1221, %v2294, %v2304
    %v2306 = vsel %vm1223, %v2295, %v2305
    %v2307 = vsel %vm1225, %v2296, %v2306
    %v2308 = vsel %vm1217, %v2298, %v2297
    %v2309 = vsel %vm1219, %v2299, %v2308
    %v2310 = vsel %vm1221, %v2300, %v2309
    %v2311 = vsel %vm1223, %v2301, %v2310
    %v2312 = vsel %vm1225, %v2302, %v2311
    %v2315 = vsel %vm1060, %v2307, inf
    %2316 = vmin.xlane.f32.xlu0 %v2315
    %v2317 = vpop.xlane.xlu0 %2316
    %v2318 = vsel %vm1060, %v2312, inf
    %2319 = vmin.xlane.f32.xlu0 %v2318
    %v2320 = vpop.xlane.xlu0 %2319
    %v2321 = vperm.slane %v1046, 2
    %v2322 = vlaneseq
    %v2323 = vshrl.u32 %v2322, 7
    %2325 = vset.pattern.permute.xlu0 %v2323
    %2326 = vperm.xlu0 %2325, %v2321
    %v2327 = vpop.permute.xlu0 %2326
    %v2328 = vperm.slane %v1046, 3
    %v2329 = vlaneseq
    %v2330 = vshrl.u32 %v2329, 7
    %2332 = vset.pattern.permute.xlu0 %v2330
    %2333 = vperm.xlu0 %2332, %v2328
    %v2334 = vpop.permute.xlu0 %2333
    %v2337 = vadd.f32 %v2189, %v2327
    %v2338 = vadd.f32 %v2192, %v2334
    %v2339 = vadd.f32 %v2337, %v1103
    %v2340 = vadd.f32 %v2337, %v1110
    %v2341 = vadd.f32 %v2337, %v1117
    %v2342 = vadd.f32 %v2337, %v1124
    %v2343 = vadd.f32 %v2337, %v1131
    %v2344 = vadd.f32 %v2337, %v1138
    %v2345 = vadd.f32 %v2338, %v1103
    %v2346 = vadd.f32 %v2338, %v1110
    %v2347 = vadd.f32 %v2338, %v1117
    %v2348 = vadd.f32 %v2338, %v1124
    %v2349 = vadd.f32 %v2338, %v1131
    %v2350 = vadd.f32 %v2338, %v1138
    %2363 = vset.pattern.permute.xlu0 0
    %2364 = vperm.xlu0 %2363, %v2339
    %v2365 = vpop.permute.xlu0 %2364
    %2366 = vset.pattern.permute.xlu0 0
    %2367 = vperm.xlu0 %2366, %v2340
    %v2368 = vpop.permute.xlu0 %2367
    %2369 = vset.pattern.permute.xlu0 0
    %2370 = vperm.xlu0 %2369, %v2341
    %v2371 = vpop.permute.xlu0 %2370
    %2372 = vset.pattern.permute.xlu0 0
    %2373 = vperm.xlu0 %2372, %v2342
    %v2374 = vpop.permute.xlu0 %2373
    %2375 = vset.pattern.permute.xlu0 0
    %2376 = vperm.xlu0 %2375, %v2343
    %v2377 = vpop.permute.xlu0 %2376
    %2378 = vset.pattern.permute.xlu0 0
    %2379 = vperm.xlu0 %2378, %v2344
    %v2380 = vpop.permute.xlu0 %2379
    %2381 = vset.pattern.permute.xlu0 0
    %2382 = vperm.xlu0 %2381, %v2345
    %v2383 = vpop.permute.xlu0 %2382
    %2384 = vset.pattern.permute.xlu0 0
    %2385 = vperm.xlu0 %2384, %v2346
    %v2386 = vpop.permute.xlu0 %2385
    %2387 = vset.pattern.permute.xlu0 0
    %2388 = vperm.xlu0 %2387, %v2347
    %v2389 = vpop.permute.xlu0 %2388
    %2390 = vset.pattern.permute.xlu0 0
    %2391 = vperm.xlu0 %2390, %v2348
    %v2392 = vpop.permute.xlu0 %2391
    %2393 = vset.pattern.permute.xlu0 0
    %2394 = vperm.xlu0 %2393, %v2349
    %v2395 = vpop.permute.xlu0 %2394
    %2396 = vset.pattern.permute.xlu0 0
    %2397 = vperm.xlu0 %2396, %v2350
    %v2398 = vpop.permute.xlu0 %2397
    %v2399 = vperm.slane %v2365, %v47
    %v2400 = vperm.slane %v2368, %v47
    %v2401 = vperm.slane %v2371, %v47
    %v2402 = vperm.slane %v2374, %v47
    %v2403 = vperm.slane %v2377, %v47
    %v2404 = vperm.slane %v2380, %v47
    %v2405 = vperm.slane %v2383, %v47
    %v2406 = vperm.slane %v2386, %v47
    %v2407 = vperm.slane %v2389, %v47
    %v2408 = vperm.slane %v2392, %v47
    %v2409 = vperm.slane %v2395, %v47
    %v2410 = vperm.slane %v2398, %v47
    %v2411 = vsel %vm1217, %v2400, %v2399
    %v2412 = vsel %vm1219, %v2401, %v2411
    %v2413 = vsel %vm1221, %v2402, %v2412
    %v2414 = vsel %vm1223, %v2403, %v2413
    %v2415 = vsel %vm1225, %v2404, %v2414
    %v2416 = vsel %vm1217, %v2406, %v2405
    %v2417 = vsel %vm1219, %v2407, %v2416
    %v2418 = vsel %vm1221, %v2408, %v2417
    %v2419 = vsel %vm1223, %v2409, %v2418
    %v2420 = vsel %vm1225, %v2410, %v2419
    %v2423 = vsel %vm1060, %v2415, -inf
    %2424 = vmax.xlane.f32.xlu0 %v2423
    %v2425 = vpop.xlane.xlu0 %2424
    %v2426 = vsel %vm1060, %v2420, -inf
    %2427 = vmax.xlane.f32.xlu0 %v2426
    %v2428 = vpop.xlane.xlu0 %2427
    %v2431 = vperm.slane %v2425, 0
    %v2432 = vperm.slane %v2425, 1
    %v2433 = vperm.slane %v2425, 2
    %v2434 = vperm.slane %v2425, 3
    %v2435 = vperm.slane %v2425, 4
    %v2436 = vperm.slane %v2425, 5
    %v2437 = vperm.slane %v2428, 0
    %v2438 = vperm.slane %v2428, 1
    %v2439 = vperm.slane %v2428, 2
    %v2440 = vperm.slane %v2428, 3
    %v2441 = vperm.slane %v2428, 4
    %v2442 = vperm.slane %v2428, 5
    %vm2455 = vcmp.eq.f32.partialorder %v2339, %v2431
    %vm2456 = vcmp.eq.f32.partialorder %v2340, %v2432
    %vm2457 = vcmp.eq.f32.partialorder %v2341, %v2433
    %vm2458 = vcmp.eq.f32.partialorder %v2342, %v2434
    %vm2459 = vcmp.eq.f32.partialorder %v2343, %v2435
    %vm2460 = vcmp.eq.f32.partialorder %v2344, %v2436
    %vm2461 = vcmp.eq.f32.partialorder %v2345, %v2437
    %vm2462 = vcmp.eq.f32.partialorder %v2346, %v2438
    %vm2463 = vcmp.eq.f32.partialorder %v2347, %v2439
    %vm2464 = vcmp.eq.f32.partialorder %v2348, %v2440
    %vm2465 = vcmp.eq.f32.partialorder %v2349, %v2441
    %vm2466 = vcmp.eq.f32.partialorder %v2350, %v2442
    %v2467 = vsel %vm2455, %v1284, 6.0
    %v2468 = vsel %vm2456, %v1284, 6.0
    %v2469 = vsel %vm2457, %v1284, 6.0
    %v2470 = vsel %vm2458, %v1284, 6.0
    %v2471 = vsel %vm2459, %v1284, 6.0
    %v2472 = vsel %vm2460, %v1284, 6.0
    %v2473 = vsel %vm2461, %v1284, 6.0
    %v2474 = vsel %vm2462, %v1284, 6.0
    %v2475 = vsel %vm2463, %v1284, 6.0
    %v2476 = vsel %vm2464, %v1284, 6.0
    %v2477 = vsel %vm2465, %v1284, 6.0
    %v2478 = vsel %vm2466, %v1284, 6.0
    %2491 = vset.pattern.permute.xlu0 0
    %2492 = vperm.xlu0 %2491, %v2467
    %v2493 = vpop.permute.xlu0 %2492
    %2494 = vset.pattern.permute.xlu0 0
    %2495 = vperm.xlu0 %2494, %v2468
    %v2496 = vpop.permute.xlu0 %2495
    %2497 = vset.pattern.permute.xlu0 0
    %2498 = vperm.xlu0 %2497, %v2469
    %v2499 = vpop.permute.xlu0 %2498
    %2500 = vset.pattern.permute.xlu0 0
    %2501 = vperm.xlu0 %2500, %v2470
    %v2502 = vpop.permute.xlu0 %2501
    %2503 = vset.pattern.permute.xlu0 0
    %2504 = vperm.xlu0 %2503, %v2471
    %v2505 = vpop.permute.xlu0 %2504
    %2506 = vset.pattern.permute.xlu0 0
    %2507 = vperm.xlu0 %2506, %v2472
    %v2508 = vpop.permute.xlu0 %2507
    %2509 = vset.pattern.permute.xlu0 0
    %2510 = vperm.xlu0 %2509, %v2473
    %v2511 = vpop.permute.xlu0 %2510
    %2512 = vset.pattern.permute.xlu0 0
    %2513 = vperm.xlu0 %2512, %v2474
    %v2514 = vpop.permute.xlu0 %2513
    %2515 = vset.pattern.permute.xlu0 0
    %2516 = vperm.xlu0 %2515, %v2475
    %v2517 = vpop.permute.xlu0 %2516
    %2518 = vset.pattern.permute.xlu0 0
    %2519 = vperm.xlu0 %2518, %v2476
    %v2520 = vpop.permute.xlu0 %2519
    %2521 = vset.pattern.permute.xlu0 0
    %2522 = vperm.xlu0 %2521, %v2477
    %v2523 = vpop.permute.xlu0 %2522
    %2524 = vset.pattern.permute.xlu0 0
    %2525 = vperm.xlu0 %2524, %v2478
    %v2526 = vpop.permute.xlu0 %2525
    %v2527 = vperm.slane %v2493, %v47
    %v2528 = vperm.slane %v2496, %v47
    %v2529 = vperm.slane %v2499, %v47
    %v2530 = vperm.slane %v2502, %v47
    %v2531 = vperm.slane %v2505, %v47
    %v2532 = vperm.slane %v2508, %v47
    %v2533 = vperm.slane %v2511, %v47
    %v2534 = vperm.slane %v2514, %v47
    %v2535 = vperm.slane %v2517, %v47
    %v2536 = vperm.slane %v2520, %v47
    %v2537 = vperm.slane %v2523, %v47
    %v2538 = vperm.slane %v2526, %v47
    %v2539 = vsel %vm1217, %v2528, %v2527
    %v2540 = vsel %vm1219, %v2529, %v2539
    %v2541 = vsel %vm1221, %v2530, %v2540
    %v2542 = vsel %vm1223, %v2531, %v2541
    %v2543 = vsel %vm1225, %v2532, %v2542
    %v2544 = vsel %vm1217, %v2534, %v2533
    %v2545 = vsel %vm1219, %v2535, %v2544
    %v2546 = vsel %vm1221, %v2536, %v2545
    %v2547 = vsel %vm1223, %v2537, %v2546
    %v2548 = vsel %vm1225, %v2538, %v2547
    %v2551 = vsel %vm1060, %v2543, inf
    %2552 = vmin.xlane.f32.xlu0 %v2551
    %v2553 = vpop.xlane.xlu0 %2552
    %v2554 = vsel %vm1060, %v2548, inf
    %2555 = vmin.xlane.f32.xlu0 %v2554
    %v2556 = vpop.xlane.xlu0 %2555
    %v2557 = vperm.slane %v1046, 4
    %v2558 = vlaneseq
    %v2559 = vshrl.u32 %v2558, 7
    %2561 = vset.pattern.permute.xlu0 %v2559
    %2562 = vperm.xlu0 %2561, %v2557
    %v2563 = vpop.permute.xlu0 %2562
    %v2564 = vperm.slane %v1046, 5
    %v2565 = vlaneseq
    %v2566 = vshrl.u32 %v2565, 7
    %2568 = vset.pattern.permute.xlu0 %v2566
    %2569 = vperm.xlu0 %2568, %v2564
    %v2570 = vpop.permute.xlu0 %2569
    %v2573 = vadd.f32 %v2425, %v2563
    %v2574 = vadd.f32 %v2428, %v2570
    %v2575 = vadd.f32 %v2573, %v1103
    %v2576 = vadd.f32 %v2573, %v1110
    %v2577 = vadd.f32 %v2573, %v1117
    %v2578 = vadd.f32 %v2573, %v1124
    %v2579 = vadd.f32 %v2573, %v1131
    %v2580 = vadd.f32 %v2573, %v1138
    %v2581 = vadd.f32 %v2574, %v1103
    %v2582 = vadd.f32 %v2574, %v1110
    %v2583 = vadd.f32 %v2574, %v1117
    %v2584 = vadd.f32 %v2574, %v1124
    %v2585 = vadd.f32 %v2574, %v1131
    %v2586 = vadd.f32 %v2574, %v1138
    %2599 = vset.pattern.permute.xlu0 0
    %2600 = vperm.xlu0 %2599, %v2575
    %v2601 = vpop.permute.xlu0 %2600
    %2602 = vset.pattern.permute.xlu0 0
    %2603 = vperm.xlu0 %2602, %v2576
    %v2604 = vpop.permute.xlu0 %2603
    %2605 = vset.pattern.permute.xlu0 0
    %2606 = vperm.xlu0 %2605, %v2577
    %v2607 = vpop.permute.xlu0 %2606
    %2608 = vset.pattern.permute.xlu0 0
    %2609 = vperm.xlu0 %2608, %v2578
    %v2610 = vpop.permute.xlu0 %2609
    %2611 = vset.pattern.permute.xlu0 0
    %2612 = vperm.xlu0 %2611, %v2579
    %v2613 = vpop.permute.xlu0 %2612
    %2614 = vset.pattern.permute.xlu0 0
    %2615 = vperm.xlu0 %2614, %v2580
    %v2616 = vpop.permute.xlu0 %2615
    %2617 = vset.pattern.permute.xlu0 0
    %2618 = vperm.xlu0 %2617, %v2581
    %v2619 = vpop.permute.xlu0 %2618
    %2620 = vset.pattern.permute.xlu0 0
    %2621 = vperm.xlu0 %2620, %v2582
    %v2622 = vpop.permute.xlu0 %2621
    %2623 = vset.pattern.permute.xlu0 0
    %2624 = vperm.xlu0 %2623, %v2583
    %v2625 = vpop.permute.xlu0 %2624
    %2626 = vset.pattern.permute.xlu0 0
    %2627 = vperm.xlu0 %2626, %v2584
    %v2628 = vpop.permute.xlu0 %2627
    %2629 = vset.pattern.permute.xlu0 0
    %2630 = vperm.xlu0 %2629, %v2585
    %v2631 = vpop.permute.xlu0 %2630
    %2632 = vset.pattern.permute.xlu0 0
    %2633 = vperm.xlu0 %2632, %v2586
    %v2634 = vpop.permute.xlu0 %2633
    %v2635 = vperm.slane %v2601, %v47
    %v2636 = vperm.slane %v2604, %v47
    %v2637 = vperm.slane %v2607, %v47
    %v2638 = vperm.slane %v2610, %v47
    %v2639 = vperm.slane %v2613, %v47
    %v2640 = vperm.slane %v2616, %v47
    %v2641 = vperm.slane %v2619, %v47
    %v2642 = vperm.slane %v2622, %v47
    %v2643 = vperm.slane %v2625, %v47
    %v2644 = vperm.slane %v2628, %v47
    %v2645 = vperm.slane %v2631, %v47
    %v2646 = vperm.slane %v2634, %v47
    %v2647 = vsel %vm1217, %v2636, %v2635
    %v2648 = vsel %vm1219, %v2637, %v2647
    %v2649 = vsel %vm1221, %v2638, %v2648
    %v2650 = vsel %vm1223, %v2639, %v2649
    %v2651 = vsel %vm1225, %v2640, %v2650
    %v2652 = vsel %vm1217, %v2642, %v2641
    %v2653 = vsel %vm1219, %v2643, %v2652
    %v2654 = vsel %vm1221, %v2644, %v2653
    %v2655 = vsel %vm1223, %v2645, %v2654
    %v2656 = vsel %vm1225, %v2646, %v2655
    %v2659 = vsel %vm1060, %v2651, -inf
    %2660 = vmax.xlane.f32.xlu0 %v2659
    %v2661 = vpop.xlane.xlu0 %2660
    %v2662 = vsel %vm1060, %v2656, -inf
    %2663 = vmax.xlane.f32.xlu0 %v2662
    %v2664 = vpop.xlane.xlu0 %2663
    %v2667 = vperm.slane %v2661, 0
    %v2668 = vperm.slane %v2661, 1
    %v2669 = vperm.slane %v2661, 2
    %v2670 = vperm.slane %v2661, 3
    %v2671 = vperm.slane %v2661, 4
    %v2672 = vperm.slane %v2661, 5
    %v2673 = vperm.slane %v2664, 0
    %v2674 = vperm.slane %v2664, 1
    %v2675 = vperm.slane %v2664, 2
    %v2676 = vperm.slane %v2664, 3
    %v2677 = vperm.slane %v2664, 4
    %v2678 = vperm.slane %v2664, 5
    %vm2691 = vcmp.eq.f32.partialorder %v2575, %v2667
    %vm2692 = vcmp.eq.f32.partialorder %v2576, %v2668
    %vm2693 = vcmp.eq.f32.partialorder %v2577, %v2669
    %vm2694 = vcmp.eq.f32.partialorder %v2578, %v2670
    %vm2695 = vcmp.eq.f32.partialorder %v2579, %v2671
    %vm2696 = vcmp.eq.f32.partialorder %v2580, %v2672
    %vm2697 = vcmp.eq.f32.partialorder %v2581, %v2673
    %vm2698 = vcmp.eq.f32.partialorder %v2582, %v2674
    %vm2699 = vcmp.eq.f32.partialorder %v2583, %v2675
    %vm2700 = vcmp.eq.f32.partialorder %v2584, %v2676
    %vm2701 = vcmp.eq.f32.partialorder %v2585, %v2677
    %vm2702 = vcmp.eq.f32.partialorder %v2586, %v2678
    %v2703 = vsel %vm2691, %v1284, 6.0
    %v2704 = vsel %vm2692, %v1284, 6.0
    %v2705 = vsel %vm2693, %v1284, 6.0
    %v2706 = vsel %vm2694, %v1284, 6.0
    %v2707 = vsel %vm2695, %v1284, 6.0
    %v2708 = vsel %vm2696, %v1284, 6.0
    %v2709 = vsel %vm2697, %v1284, 6.0
    %v2710 = vsel %vm2698, %v1284, 6.0
    %v2711 = vsel %vm2699, %v1284, 6.0
    %v2712 = vsel %vm2700, %v1284, 6.0
    %v2713 = vsel %vm2701, %v1284, 6.0
    %v2714 = vsel %vm2702, %v1284, 6.0
    %2727 = vset.pattern.permute.xlu0 0
    %2728 = vperm.xlu0 %2727, %v2703
    %v2729 = vpop.permute.xlu0 %2728
    %2730 = vset.pattern.permute.xlu0 0
    %2731 = vperm.xlu0 %2730, %v2704
    %v2732 = vpop.permute.xlu0 %2731
    %2733 = vset.pattern.permute.xlu0 0
    %2734 = vperm.xlu0 %2733, %v2705
    %v2735 = vpop.permute.xlu0 %2734
    %2736 = vset.pattern.permute.xlu0 0
    %2737 = vperm.xlu0 %2736, %v2706
    %v2738 = vpop.permute.xlu0 %2737
    %2739 = vset.pattern.permute.xlu0 0
    %2740 = vperm.xlu0 %2739, %v2707
    %v2741 = vpop.permute.xlu0 %2740
    %2742 = vset.pattern.permute.xlu0 0
    %2743 = vperm.xlu0 %2742, %v2708
    %v2744 = vpop.permute.xlu0 %2743
    %2745 = vset.pattern.permute.xlu0 0
    %2746 = vperm.xlu0 %2745, %v2709
    %v2747 = vpop.permute.xlu0 %2746
    %2748 = vset.pattern.permute.xlu0 0
    %2749 = vperm.xlu0 %2748, %v2710
    %v2750 = vpop.permute.xlu0 %2749
    %2751 = vset.pattern.permute.xlu0 0
    %2752 = vperm.xlu0 %2751, %v2711
    %v2753 = vpop.permute.xlu0 %2752
    %2754 = vset.pattern.permute.xlu0 0
    %2755 = vperm.xlu0 %2754, %v2712
    %v2756 = vpop.permute.xlu0 %2755
    %2757 = vset.pattern.permute.xlu0 0
    %2758 = vperm.xlu0 %2757, %v2713
    %v2759 = vpop.permute.xlu0 %2758
    %2760 = vset.pattern.permute.xlu0 0
    %2761 = vperm.xlu0 %2760, %v2714
    %v2762 = vpop.permute.xlu0 %2761
    %v2763 = vperm.slane %v2729, %v47
    %v2764 = vperm.slane %v2732, %v47
    %v2765 = vperm.slane %v2735, %v47
    %v2766 = vperm.slane %v2738, %v47
    %v2767 = vperm.slane %v2741, %v47
    %v2768 = vperm.slane %v2744, %v47
    %v2769 = vperm.slane %v2747, %v47
    %v2770 = vperm.slane %v2750, %v47
    %v2771 = vperm.slane %v2753, %v47
    %v2772 = vperm.slane %v2756, %v47
    %v2773 = vperm.slane %v2759, %v47
    %v2774 = vperm.slane %v2762, %v47
    %v2775 = vsel %vm1217, %v2764, %v2763
    %v2776 = vsel %vm1219, %v2765, %v2775
    %v2777 = vsel %vm1221, %v2766, %v2776
    %v2778 = vsel %vm1223, %v2767, %v2777
    %v2779 = vsel %vm1225, %v2768, %v2778
    %v2780 = vsel %vm1217, %v2770, %v2769
    %v2781 = vsel %vm1219, %v2771, %v2780
    %v2782 = vsel %vm1221, %v2772, %v2781
    %v2783 = vsel %vm1223, %v2773, %v2782
    %v2784 = vsel %vm1225, %v2774, %v2783
    %v2787 = vsel %vm1060, %v2779, inf
    %2788 = vmin.xlane.f32.xlu0 %v2787
    %v2789 = vpop.xlane.xlu0 %2788
    %v2790 = vsel %vm1060, %v2784, inf
    %2791 = vmin.xlane.f32.xlu0 %v2790
    %v2792 = vpop.xlane.xlu0 %2791
    %v2793 = vperm.slane %v1046, 6
    %v2794 = vlaneseq
    %v2795 = vshrl.u32 %v2794, 7
    %2797 = vset.pattern.permute.xlu0 %v2795
    %2798 = vperm.xlu0 %2797, %v2793
    %v2799 = vpop.permute.xlu0 %2798
    %v2800 = vperm.slane %v1046, 7
    %v2801 = vlaneseq
    %v2802 = vshrl.u32 %v2801, 7
    %2804 = vset.pattern.permute.xlu0 %v2802
    %2805 = vperm.xlu0 %2804, %v2800
    %v2806 = vpop.permute.xlu0 %2805
    %v2809 = vadd.f32 %v2661, %v2799
    %v2810 = vadd.f32 %v2664, %v2806
    %v2811 = vld [vmem:[%s10] sm:$0x1]
    %v2813 = vperm.slane %v2811, 0
    %v2814 = vlaneseq
    %v2815 = vshrl.u32 %v2814, 7
    %2817 = vset.pattern.permute.xlu0 %v2815
    %2818 = vperm.xlu0 %2817, %v2813
    %v2819 = vpop.permute.xlu0 %2818
    %v2821 = vadd.f32 %v2809, %v2819
    %v2822 = vadd.f32 %v2810, %v2819
    %2825 = vset.pattern.permute.xlu0 0
    %2826 = vperm.xlu0 %2825, %v2821
    %v2827 = vpop.permute.xlu0 %2826
    %2828 = vset.pattern.permute.xlu0 0
    %2829 = vperm.xlu0 %2828, %v2822
    %v2830 = vpop.permute.xlu0 %2829
    %v2831 = vperm.slane %v2827, %v47
    %v2832 = vperm.slane %v2830, %v47
    %v2833 = vsel %vm1217, %v2832, %v2831
    %vm2835 = vcmask 41984
    %v2836 = vsel %vm2835, %v2833, -inf
    %2837 = vmax.xlane.f32.xlu0 %v2836
    %v2838 = vpop.xlane.xlu0 %2837
    %v2840 = vperm.slane %v2838, 0
    %v2841 = vperm.slane %v2838, 1
    %vm2844 = vcmp.eq.f32.partialorder %v2821, %v2840
    %vm2845 = vcmp.eq.f32.partialorder %v2822, %v2841
    %v2846 = vsel %vm2844, %v1284, 6.0
    %v2847 = vsel %vm2845, %v1284, 6.0
    %2850 = vset.pattern.permute.xlu0 0
    %2851 = vperm.xlu0 %2850, %v2846
    %v2852 = vpop.permute.xlu0 %2851
    %2853 = vset.pattern.permute.xlu0 0
    %2854 = vperm.xlu0 %2853, %v2847
    %v2855 = vpop.permute.xlu0 %2854
    %v2856 = vperm.slane %v2852, %v47
    %v2857 = vperm.slane %v2855, %v47
    %v2858 = vsel %vm1217, %v2857, %v2856
    %v2860 = vsel %vm2835, %v2858, inf
    %2861 = vmin.xlane.f32.xlu0 %v2860
    %v2862 = vpop.xlane.xlu0 %2861
    %vm2863 = vcmask 1024
    %2864 = vst.msk [vmem:[%s11] sm:$0x3] %vm2863, %v2838
    %vm2865 = vcmp.eq.f32.partialorder %v1049, %v2862
    %v2868 = vperm.slane %v2789, %v47
    %v2869 = vperm.slane %v2792, %v47
    %v2870 = vsel %vm1217, %v2869, %v2868
    %v2872 = vsel %vm2865, %v2870, -1.0
    %v2873 = vsel %vm2835, %v2872, -inf
    %2874 = vmax.xlane.f32.xlu0 %v2873
    %v2875 = vpop.xlane.xlu0 %2874
    %vm2876 = vcmp.eq.f32.partialorder %v1049, %v2875
    %v2879 = vperm.slane %v2553, %v47
    %v2880 = vperm.slane %v2556, %v47
    %v2881 = vsel %vm1217, %v2880, %v2879
    %v2883 = vsel %vm2876, %v2881, -1.0
    %v2884 = vsel %vm2835, %v2883, -inf
    %2885 = vmax.xlane.f32.xlu0 %v2884
    %v2886 = vpop.xlane.xlu0 %2885
    %vm2887 = vcmp.eq.f32.partialorder %v1049, %v2886
    %v2890 = vperm.slane %v2317, %v47
    %v2891 = vperm.slane %v2320, %v47
    %v2892 = vsel %vm1217, %v2891, %v2890
    %v2894 = vsel %vm2887, %v2892, -1.0
    %v2895 = vsel %vm2835, %v2894, -inf
    %2896 = vmax.xlane.f32.xlu0 %v2895
    %v2897 = vpop.xlane.xlu0 %2896
    %vm2898 = vcmp.eq.f32.partialorder %v1049, %v2897
    %v2901 = vperm.slane %v2080, %v47
    %v2902 = vperm.slane %v2083, %v47
    %v2903 = vsel %vm1217, %v2902, %v2901
    %v2905 = vsel %vm2898, %v2903, -1.0
    %v2906 = vsel %vm2835, %v2905, -inf
    %2907 = vmax.xlane.f32.xlu0 %v2906
    %v2908 = vpop.xlane.xlu0 %2907
    %vm2909 = vcmp.eq.f32.partialorder %v1049, %v2908
    %v2912 = vperm.slane %v1844, %v47
    %v2913 = vperm.slane %v1847, %v47
    %v2914 = vsel %vm1217, %v2913, %v2912
    %v2916 = vsel %vm2909, %v2914, -1.0
    %v2917 = vsel %vm2835, %v2916, -inf
    %2918 = vmax.xlane.f32.xlu0 %v2917
    %v2919 = vpop.xlane.xlu0 %2918
    %vm2920 = vcmp.eq.f32.partialorder %v1049, %v2919
    %v2923 = vperm.slane %v1608, %v47
    %v2924 = vperm.slane %v1611, %v47
    %v2925 = vsel %vm1217, %v2924, %v2923
    %v2927 = vsel %vm2920, %v2925, -1.0
    %v2928 = vsel %vm2835, %v2927, -inf
    %2929 = vmax.xlane.f32.xlu0 %v2928
    %v2930 = vpop.xlane.xlu0 %2929
    %vm2931 = vcmp.eq.f32.partialorder %v1049, %v2930
    %v2934 = vperm.slane %v1372, %v47
    %v2935 = vperm.slane %v1375, %v47
    %v2936 = vsel %vm1217, %v2935, %v2934
    %v2938 = vsel %vm2931, %v2936, -1.0
    %v2939 = vsel %vm2835, %v2938, -inf
    %2940 = vmax.xlane.f32.xlu0 %v2939
    %v2941 = vpop.xlane.xlu0 %2940
    %vm2942 = vcmp.eq.f32.partialorder %v1049, %v2941
    %v2945 = vperm.slane %v1073, %v47
    %v2946 = vperm.slane %v1076, %v47
    %v2947 = vsel %vm1217, %v2946, %v2945
    %v2949 = vsel %vm2942, %v2947, -1.0
    %v2950 = vsel %vm2835, %v2949, -inf
    %2951 = vmax.xlane.f32.xlu0 %v2950
    %v2952 = vpop.xlane.xlu0 %2951
    %vm2953 = vcmask 7168
    %v2954 = vsel %vm2953, %v2941, %v2930
    %vm2955 = vcmask 15360
    %v2956 = vsel %vm2955, %v2954, %v2919
    %vm2957 = vcmask 23552
    %v2958 = vsel %vm2957, %v2956, %v2908
    %vm2959 = vcmask 31744
    %v2960 = vsel %vm2959, %v2958, %v2897
    %vm2961 = vcmask 39936
    %v2962 = vsel %vm2961, %v2960, %v2886
    %vm2963 = vcmask 48128
    %v2964 = vsel %vm2963, %v2962, %v2875
    %vm2965 = vcmask 56320
    %v2966 = vsel %vm2965, %v2964, %v2862
    %v2967 = vcvt.f32.s32.to.zero.pseudo %v2966
    %vm2968 = vcmask 58368
    %2969 = vst.msk [vmem:[#allocation2] sm:$0x3] %vm2968, %v2967
    %v2970 = vcvt.f32.s32.to.zero.pseudo %v2952
    %2971 = vst.msk [vmem:[%s13] sm:$0x3] %vm2863, %v2970
    // Predicated region
    $region46: #{_forward_impl.1} parent=1 // pred_check
      _
    $region47: #{_forward_impl.1} parent=1 // pred_check_branch
      %2973 = sbr.rel (0) target = $region49
    $region48: #{_forward_impl.1} parent=1 // pred_region
      _
    $region49: #{_forward_impl.1} parent=1 // pred_fallthru
      _
    // Predicated region
    $region50: #{_forward_impl.1} parent=1 // pred_check
      _
    $region51: #{_forward_impl.1} parent=1 // pred_check_branch
      %2975 = sbr.rel (0) target = $region53
    $region52: #{_forward_impl.1} parent=1 // pred_region
      %2977 = vsyncadd [#allocation3], 0
      %s2979 = sshll.u32 [#allocation2], 4
      %s2980 = int_to_ptr.vmem [resolvable:$true] %s2979
      %s2981 = sshll.u32 %s12, 4
      %s2982 = int_to_ptr.hbm [resolvable:$true] %s2981
      %2984 = dma.vmem_to_hbm [thread:$0]  %s2980, 32, %s2982, [#allocation3]
    $region53: #{_forward_impl.1} parent=1 // pred_fallthru
      _
    // Predicated region
    $region54: #{_forward_impl.1} parent=1 // pred_check
      _
    $region55: #{_forward_impl.1} parent=1 // pred_check_branch
      %2986 = sbr.rel (0) target = $region57
    $region56: #{_forward_impl.1} parent=1 // pred_region
      _
    $region57: #{_forward_impl.1} parent=1 // pred_fallthru
      _
    // Predicated region
    $region58: #{_forward_impl.1} parent=1 // pred_check
      _
    $region59: #{_forward_impl.1} parent=1 // pred_check_branch
      %2988 = sbr.rel (0) target = $region61
    $region60: #{_forward_impl.1} parent=1 // pred_region
      _
    $region61: #{_forward_impl.1} parent=1 // pred_fallthru
      _
    // Predicated region
    $region62: #{_forward_impl.1} parent=1 // pred_check
      _
    $region63: #{_forward_impl.1} parent=1 // pred_check_branch
      %2990 = sbr.rel (0) target = $region65
    $region64: #{_forward_impl.1} parent=1 // pred_region
      %2992 = dma.done [#allocation3], 32
    $region65: #{_forward_impl.1} parent=1 // pred_fallthru
      _
    // Predicated region
    $region66: #{_forward_impl.1} parent=1 // pred_check
      _
    $region67: #{_forward_impl.1} parent=1 // pred_check_branch
      %2994 = sbr.rel (0) target = $region69
    $region68: #{_forward_impl.1} parent=1 // pred_region
      _
    $region69: #{_forward_impl.1} parent=1 // pred_fallthru
      _
    %2995 = vsyncpa [#allocation3], 1

</llo_original>
